<compile_context>
chip_gen: v7x
topology: tpu7x:2x2x1
jax: 0.10.0
libtpu: 0.0.40
codegen_flags: <defaults>
</compile_context>

<pallas_src>
import jax
import jax.numpy as jnp
from jax.experimental import pallas as pl
from jax.experimental.pallas import tpu as pltpu

# Small shapes consistent with the module (original uses H=10, W=174, Cin=1,
# 64 conv channels; fc_0 fan-in 64*H*W is derived from H, W below).
N, H, W = 2, 8, 16
C0, C1 = 1, 64           # input channels, conv channels
NUM_CONV = 1             # set_base_layers() defaults
NUM_FC = 1
K0 = 16                  # conv_0 im2col K (9 real taps + 7 zero columns)
OUT_PAD = 128            # final Linear(64, 1) zero-padded to 128 output lanes


# --------------------------------------------------------------------------
# Fused kernel: normalize -> conv_0 block -> num_conv x conv block -> MLP.
# One grid step per batch sample (parallel across TensorCores on v7x).
# --------------------------------------------------------------------------
def make_fused_kernel(h, w, cout, num_conv, num_fc):
    hw = h * w
    f32 = jnp.float32
    bf16 = jnp.bfloat16

    def kernel(x_ref, w0_ref, b0_ref, wc_ref, bc_ref,
               w8_ref, bf0_ref, wfc_ref, bfc_ref, wout_ref, bout_ref,
               o_ref,
               xpad0_ref, pad_ref, patches0_ref, patches_ref, flat_ref):

        # ---- per-step init: only the 1-wide zero halos are written ---------
        xpad0_ref[0:1, :, :] = jnp.zeros((1, w + 2, 1), f32)
        xpad0_ref[h + 1:h + 2, :, :] = jnp.zeros((1, w + 2, 1), f32)
        xpad0_ref[:, 0:1, :] = jnp.zeros((h + 2, 1, 1), f32)
        xpad0_ref[:, w + 1:w + 2, :] = jnp.zeros((h + 2, 1, 1), f32)

        pad_ref[0:1, :, :] = jnp.zeros((1, w + 2, cout), f32)
        pad_ref[h + 1:h + 2, :, :] = jnp.zeros((1, w + 2, cout), f32)
        pad_ref[:, 0:1, :] = jnp.zeros((h + 2, 1, cout), f32)
        pad_ref[:, w + 1:w + 2, :] = jnp.zeros((h + 2, 1, cout), f32)

        # conv_0 padded K columns stay zero (stale VMEM NaN/Inf must not leak
        # through the zero weight rows).
        patches0_ref[:, 9:K0] = jnp.zeros((hw, K0 - 9), f32)

        # ---- F.normalize(x, p=2, dim=-2): L2 norm over H --------------------
        xin = x_ref[0]                                            # (h, w, 1)
        nrm = jnp.sqrt(jnp.sum(xin * xin, axis=0, keepdims=True))
        xn = xin / jnp.maximum(nrm, 1e-12)

        # ---- conv_0: im2col (cin=1) -> ONE MXU matmul + bias + ReLU ---------
        xpad0_ref[1:h + 1, 1:w + 1, :] = xn
        for dy in range(3):
            for dx in range(3):
                k = dy * 3 + dx
                patches0_ref[:, k:k + 1] = (
                    xpad0_ref[dy:dy + h, dx:dx + w, :].reshape(hw, 1))
        conv = jnp.dot(patches0_ref[...], w0_ref[...],
                       preferred_element_type=f32)
        conv = jnp.maximum(conv + b0_ref[...], 0.0)               # (hw, cout)
        # Dropout = identity (eval mode).

        def maxpool(conv_hw):
            # MaxPool2d(3, stride=1, padding=1).  Zero padding is exact here
            # because the input is post-ReLU (>= 0).  Separable: W-max, then H-max.
            pad_ref[1:h + 1, 1:w + 1, :] = conv_hw.reshape(h, w, cout)
            hmax = jnp.maximum(
                jnp.maximum(pad_ref[:, 0:w, :], pad_ref[:, 1:w + 1, :]),
                pad_ref[:, 2:w + 2, :])                           # (h+2, w, cout)
            return jnp.maximum(jnp.maximum(hmax[0:h], hmax[1:h + 1]),
                               hmax[2:h + 2])                     # (h, w, cout)

        pooled = maxpool(conv)

        # ---- num_conv x [conv(64->64) + ReLU + Dropout + MaxPool] (shared W) ----
        for _ in range(num_conv):
            pad_ref[1:h + 1, 1:w + 1, :] = pooled
            for dy in range(3):
                for dx in range(3):
                    k = dy * 3 + dx
                    slab = pad_ref[dy:dy + h, dx:dx + w, :].reshape(hw, cout)
                    patches_ref[:, k * cout:(k + 1) * cout] = slab.astype(bf16)
            conv = jnp.dot(patches_ref[...], wc_ref[...],
                           preferred_element_type=f32)            # bf16 x bf16 -> f32
            conv = jnp.maximum(conv + bc_ref[...], 0.0)           # (hw, cout)
            pooled = maxpool(conv)

        # ---- fc_0 without an explicit (1, hw*cout) flatten -------------------
        # flat[y, x*cout + c] = pooled[y, x, c].  The fc_0 weight is regrouped
        # host-side to w8[x*cout + c, y*64 + j], so
        #   fc_0(flatten(pooled))[j] = b0[j] + sum_y P[y, y*64 + j]
        # with P = flat @ w8 computed as a single MXU matmul.
        for xi in range(w):
            flat_ref[:, xi * cout:(xi + 1) * cout] = pooled[:, xi, :].astype(bf16)
        p_mat = jnp.dot(flat_ref[...], w8_ref[...],
                        preferred_element_type=f32)               # (h, h*64)
        hidden = bf0_ref[...]                                     # (1, 64)
        for y in range(h):
            hidden = hidden + p_mat[y:y + 1, y * 64:(y + 1) * 64]

        # ---- fc x num_fc (shared weights) -> output (lane-padded to 128) -----
        for _ in range(num_fc):
            hidden = jnp.dot(hidden, wfc_ref[...],
                             preferred_element_type=f32) + bfc_ref[...]
        out = jnp.dot(hidden, wout_ref[...],
                      preferred_element_type=f32) + bout_ref[...]  # (1, OUT_PAD)
        o_ref[0] = out

    return kernel


def cnn_forward(x_nchw, params, *, num_conv=NUM_CONV, num_fc=NUM_FC):
    n, _, h, w = x_nchw.shape
    cout = C1
    hw = h * w
    x = jnp.transpose(x_nchw, (0, 2, 3, 1))                       # NCHW -> NHWC

    kernel = make_fused_kernel(h, w, cout, num_conv, num_fc)
    wspec = lambda shape: pl.BlockSpec(shape, lambda i: (0,) * len(shape))

    out = pl.pallas_call(
        kernel,
        out_shape=jax.ShapeDtypeStruct((n, 1, OUT_PAD), jnp.float32),
        grid_spec=pltpu.PrefetchScalarGridSpec(
            num_scalar_prefetch=0,
            grid=(n,),
            in_specs=[
                pl.BlockSpec((1, h, w, 1), lambda i: (i, 0, 0, 0)),
                wspec((K0, cout)),            # conv_0 im2col weight (rows 9..15 zero)
                wspec((1, cout)),
                wspec((9 * cout, cout)),      # conv im2col weight (bf16)
                wspec((1, cout)),
                wspec((w * cout, h * 64)),    # fc_0 weight, y-group reshaped (bf16)
                wspec((1, 64)),
                wspec((64, 64)),              # fc weight
                wspec((1, 64)),
                wspec((64, OUT_PAD)),         # output weight (lane-padded)
                wspec((1, OUT_PAD)),
            ],
            out_specs=pl.BlockSpec((1, 1, OUT_PAD), lambda i: (i, 0, 0)),
            scratch_shapes=[
                pltpu.VMEM((h + 2, w + 2, 1), jnp.float32),       # padded conv_0 input
                pltpu.VMEM((h + 2, w + 2, cout), jnp.float32),    # shared conv/pool pad
                pltpu.VMEM((hw, K0), jnp.float32),                # conv_0 im2col patches
                pltpu.VMEM((hw, 9 * cout), jnp.bfloat16),         # conv im2col patches
                pltpu.VMEM((h, w * cout), jnp.bfloat16),          # fc_0 LHS (per-row flat)
            ],
        ),
        compiler_params=pltpu.CompilerParams(
            dimension_semantics=("parallel",),
            vmem_limit_bytes=32 * 1024 * 1024),
    )(x, params['w_conv0'], params['b_conv0'],
      params['w_conv'], params['b_conv'],
      params['w_fc0g'], params['b_fc0'],
      params['w_fc'], params['b_fc'],
      params['w_out'], params['b_out'])
    return out[:, 0, :1]                                          # (N, 1)


# --------------------------------------------------------------------------
# Host-side glue: PyTorch-layout weights -> kernel (im2col / NHWC) layouts.
# --------------------------------------------------------------------------
def prepare_params(pt, h, w):
    c = C1
    w0 = jnp.transpose(pt['w_conv0'], (2, 3, 1, 0)).reshape(9 * C0, c)
    w0 = jnp.concatenate([w0, jnp.zeros((K0 - 9, c), jnp.float32)], axis=0)   # (16, 64)
    wc = (jnp.transpose(pt['w_conv'], (2, 3, 1, 0)).reshape(9 * c, c)
          .astype(jnp.bfloat16))                                              # (576, 64)
    # fc_0: PyTorch flattens (c, y, x); the kernel's per-row layout is
    # flat[y, x*c + cc].  Regroup to w8[x*c + cc, y*64 + j] = W_pt[j, cc, y, x]
    # (bf16 weight, f32 MXU accumulation).
    w8 = (pt['w_fc0'].reshape(64, c, h, w)
          .transpose(3, 1, 2, 0)                                  # (x, c, y, j)
          .reshape(w * c, h * 64)
          .astype(jnp.bfloat16))
    wout = jnp.zeros((64, OUT_PAD), jnp.float32).at[:, 0:1].set(pt['w_out'].T)
    bout = jnp.zeros((1, OUT_PAD), jnp.float32).at[0, 0].set(pt['b_out'][0])
    return {
        'w_conv0': w0, 'b_conv0': pt['b_conv0'].reshape(1, c),
        'w_conv': wc, 'b_conv': pt['b_conv'].reshape(1, c),
        'w_fc0g': w8, 'b_fc0': pt['b_fc0'].reshape(1, 64),
        'w_fc': pt['w_fc'].T, 'b_fc': pt['b_fc'].reshape(1, 64),
        'w_out': wout, 'b_out': bout,
    }


# --------------------------------------------------------------------------
# Pure-JAX reference (NCHW, PyTorch-convention weights) for validation.
# --------------------------------------------------------------------------
def reference_forward(x_nchw, pt, *, num_conv=NUM_CONV, num_fc=NUM_FC):
    x = x_nchw
    nrm = jnp.sqrt(jnp.sum(x * x, axis=-2, keepdims=True))
    x = x / jnp.maximum(nrm, 1e-12)

    def conv_block(y, wgt, b):
        y = jax.lax.conv_general_dilated(
            y, wgt, (1, 1), ((1, 1), (1, 1)),
            dimension_numbers=('NCHW', 'OIHW', 'NCHW'))
        y = jnp.maximum(y + b.reshape(1, -1, 1, 1), 0.0)
        y = jax.lax.reduce_window(
            y, -jnp.inf, jax.lax.max, (1, 1, 3, 3), (1, 1, 1, 1),
            ((0, 0), (0, 0), (1, 1), (1, 1)))
        return y

    out = conv_block(x, pt['w_conv0'], pt['b_conv0'])
    for _ in range(num_conv):
        out = conv_block(out, pt['w_conv'], pt['b_conv'])
    out = out.reshape(out.shape[0], -1)
    out = out @ pt['w_fc0'].T + pt['b_fc0']
    for _ in range(num_fc):
        out = out @ pt['w_fc'].T + pt['b_fc']
    out = out @ pt['w_out'].T + pt['b_out']
    return out


if __name__ == "__main__":
    key = jax.random.PRNGKey(0)
    keys = jax.random.split(key, 11)
    x = jax.random.normal(keys[0], (N, C0, H, W), jnp.float32)

    def uinit(k, shape, fan_in):
        bound = 1.0 / (fan_in ** 0.5)
        return jax.random.uniform(k, shape, jnp.float32, -bound, bound)

    # Parameters in PyTorch layout (deterministic synthetic init).
    pt = {
        'w_conv0': uinit(keys[1], (C1, C0, 3, 3), C0 * 9),
        'b_conv0': uinit(keys[2], (C1,), C0 * 9),
        'w_conv':  uinit(keys[3], (C1, C1, 3, 3), C1 * 9),
        'b_conv':  uinit(keys[4], (C1,), C1 * 9),
        'w_fc0':   uinit(keys[5], (64, C1 * H * W), C1 * H * W),
        'b_fc0':   uinit(keys[6], (64,), C1 * H * W),
        'w_fc':    uinit(keys[7], (64, 64), 64),
        'b_fc':    uinit(keys[8], (64,), 64),
        'w_out':   uinit(keys[9], (1, 64), 64),
        'b_out':   uinit(keys[10], (1,), 64),
    }

    params = prepare_params(pt, H, W)

    out = jax.block_until_ready(jax.jit(cnn_forward)(x, params))
    ref = jax.block_until_ready(reference_forward(x, pt))

    assert out.shape == (N, 1), out.shape
    max_diff = float(jnp.max(jnp.abs(out - ref)))
    assert bool(jnp.allclose(out, ref, rtol=2e-2, atol=2e-2)), \
        f"mismatch vs reference, max abs diff = {max_diff}"
    print("KERNEL_OK")
</pallas_src>

<mosaic_0001>
module attributes {stable_mosaic.version = 11 : i64} {
  func.func @kernel(%arg0: i32, %arg1: memref<1x8x16x1xf32, #tpu.memory_space<vmem>>, %arg2: memref<16x64xf32, #tpu.memory_space<vmem>>, %arg3: memref<1x64xf32, #tpu.memory_space<vmem>>, %arg4: memref<576x64xbf16, #tpu.memory_space<vmem>>, %arg5: memref<1x64xf32, #tpu.memory_space<vmem>>, %arg6: memref<1024x512xbf16, #tpu.memory_space<vmem>>, %arg7: memref<1x64xf32, #tpu.memory_space<vmem>>, %arg8: memref<64x64xf32, #tpu.memory_space<vmem>>, %arg9: memref<1x64xf32, #tpu.memory_space<vmem>>, %arg10: memref<64x128xf32, #tpu.memory_space<vmem>>, %arg11: memref<1x128xf32, #tpu.memory_space<vmem>>, %arg12: memref<1x1x128xf32, #tpu.memory_space<vmem>>, %arg13: memref<10x18x1xf32, #tpu.memory_space<vmem>>, %arg14: memref<10x18x64xf32, #tpu.memory_space<vmem>>, %arg15: memref<128x16xf32, #tpu.memory_space<vmem>>, %arg16: memref<128x576xbf16, #tpu.memory_space<vmem>>, %arg17: memref<8x1024xbf16, #tpu.memory_space<vmem>>) attributes {dimension_semantics = [#tpu.dimension_semantics<parallel>], iteration_bounds = array<i64: 2>, scalar_prefetch = 0 : i64, scratch_operands = 5 : i64, tpu.core_type = #tpu.core_type<tc>, window_params = [{transform_indices = @transform_0, window_bounds = array<i64: 1, 8, 16, 1>}, {pipeline_mode = #tpu.pipeline_mode<synchronous>, transform_indices = @transform_1, window_bounds = array<i64: 16, 64>}, {pipeline_mode = #tpu.pipeline_mode<synchronous>, transform_indices = @transform_2, window_bounds = array<i64: 1, 64>}, {pipeline_mode = #tpu.pipeline_mode<synchronous>, transform_indices = @transform_3, window_bounds = array<i64: 576, 64>}, {pipeline_mode = #tpu.pipeline_mode<synchronous>, transform_indices = @transform_4, window_bounds = array<i64: 1, 64>}, {pipeline_mode = #tpu.pipeline_mode<synchronous>, transform_indices = @transform_5, window_bounds = array<i64: 1024, 512>}, {pipeline_mode = #tpu.pipeline_mode<synchronous>, transform_indices = @transform_6, window_bounds = array<i64: 1, 64>}, {pipeline_mode = #tpu.pipeline_mode<synchronous>, transform_indices = @transform_7, window_bounds = array<i64: 64, 64>}, {pipeline_mode = #tpu.pipeline_mode<synchronous>, transform_indices = @transform_8, window_bounds = array<i64: 1, 64>}, {pipeline_mode = #tpu.pipeline_mode<synchronous>, transform_indices = @transform_9, window_bounds = array<i64: 64, 128>}, {pipeline_mode = #tpu.pipeline_mode<synchronous>, transform_indices = @transform_10, window_bounds = array<i64: 1, 128>}, {transform_indices = @transform_11, window_bounds = array<i64: 1, 1, 128>}]} {
    %cst = arith.constant 0.000000e+00 : f32
    %0 = vector.broadcast %cst : f32 to vector<1x18x1xf32>
    %c0 = arith.constant 0 : index
    %c0_0 = arith.constant 0 : index
    %c0_1 = arith.constant 0 : index
    %1 = vector.load %arg13[%c0, %c0_0, %c0_1] : memref<10x18x1xf32, #tpu.memory_space<vmem>>, vector<1x18x1xf32>
    tpu.vector_store %arg13[%c0, %c0_0, %c0_1], %0 {strides = array<i32>} : memref<10x18x1xf32, #tpu.memory_space<vmem>>, vector<1x18x1xf32>,
    %cst_2 = arith.constant 0.000000e+00 : f32
    %2 = vector.broadcast %cst_2 : f32 to vector<1x18x1xf32>
    %c9 = arith.constant 9 : index
    %c0_3 = arith.constant 0 : index
    %c0_4 = arith.constant 0 : index
    %3 = vector.load %arg13[%c9, %c0_3, %c0_4] : memref<10x18x1xf32, #tpu.memory_space<vmem>>, vector<1x18x1xf32>
    tpu.vector_store %arg13[%c9, %c0_3, %c0_4], %2 {strides = array<i32>} : memref<10x18x1xf32, #tpu.memory_space<vmem>>, vector<1x18x1xf32>,
    %cst_5 = arith.constant 0.000000e+00 : f32
    %4 = vector.broadcast %cst_5 : f32 to vector<10x1x1xf32>
    %c0_6 = arith.constant 0 : index
    %c0_7 = arith.constant 0 : index
    %c0_8 = arith.constant 0 : index
    %5 = vector.load %arg13[%c0_6, %c0_7, %c0_8] : memref<10x18x1xf32, #tpu.memory_space<vmem>>, vector<10x1x1xf32>
    tpu.vector_store %arg13[%c0_6, %c0_7, %c0_8], %4 {strides = array<i32>} : memref<10x18x1xf32, #tpu.memory_space<vmem>>, vector<10x1x1xf32>,
    %cst_9 = arith.constant 0.000000e+00 : f32
    %6 = vector.broadcast %cst_9 : f32 to vector<10x1x1xf32>
    %c0_10 = arith.constant 0 : index
    %c17 = arith.constant 17 : index
    %c0_11 = arith.constant 0 : index
    %7 = vector.load %arg13[%c0_10, %c17, %c0_11] : memref<10x18x1xf32, #tpu.memory_space<vmem>>, vector<10x1x1xf32>
    tpu.vector_store %arg13[%c0_10, %c17, %c0_11], %6 {strides = array<i32>} : memref<10x18x1xf32, #tpu.memory_space<vmem>>, vector<10x1x1xf32>,
    %cst_12 = arith.constant 0.000000e+00 : f32
    %8 = vector.broadcast %cst_12 : f32 to vector<1x18x64xf32>
    %c0_13 = arith.constant 0 : index
    %c0_14 = arith.constant 0 : index
    %c0_15 = arith.constant 0 : index
    %9 = vector.load %arg14[%c0_13, %c0_14, %c0_15] : memref<10x18x64xf32, #tpu.memory_space<vmem>>, vector<1x18x64xf32>
    tpu.vector_store %arg14[%c0_13, %c0_14, %c0_15], %8 {strides = array<i32>} : memref<10x18x64xf32, #tpu.memory_space<vmem>>, vector<1x18x64xf32>,
    %cst_16 = arith.constant 0.000000e+00 : f32
    %10 = vector.broadcast %cst_16 : f32 to vector<1x18x64xf32>
    %c9_17 = arith.constant 9 : index
    %c0_18 = arith.constant 0 : index
    %c0_19 = arith.constant 0 : index
    %11 = vector.load %arg14[%c9_17, %c0_18, %c0_19] : memref<10x18x64xf32, #tpu.memory_space<vmem>>, vector<1x18x64xf32>
    tpu.vector_store %arg14[%c9_17, %c0_18, %c0_19], %10 {strides = array<i32>} : memref<10x18x64xf32, #tpu.memory_space<vmem>>, vector<1x18x64xf32>,
    %cst_20 = arith.constant 0.000000e+00 : f32
    %12 = vector.broadcast %cst_20 : f32 to vector<10x1x64xf32>
    %c0_21 = arith.constant 0 : index
    %c0_22 = arith.constant 0 : index
    %c0_23 = arith.constant 0 : index
    %13 = vector.load %arg14[%c0_21, %c0_22, %c0_23] : memref<10x18x64xf32, #tpu.memory_space<vmem>>, vector<10x1x64xf32>
    tpu.vector_store %arg14[%c0_21, %c0_22, %c0_23], %12 {strides = array<i32>} : memref<10x18x64xf32, #tpu.memory_space<vmem>>, vector<10x1x64xf32>,
    %cst_24 = arith.constant 0.000000e+00 : f32
    %14 = vector.broadcast %cst_24 : f32 to vector<10x1x64xf32>
    %c0_25 = arith.constant 0 : index
    %c17_26 = arith.constant 17 : index
    %c0_27 = arith.constant 0 : index
    %15 = vector.load %arg14[%c0_25, %c17_26, %c0_27] : memref<10x18x64xf32, #tpu.memory_space<vmem>>, vector<10x1x64xf32>
    tpu.vector_store %arg14[%c0_25, %c17_26, %c0_27], %14 {strides = array<i32>} : memref<10x18x64xf32, #tpu.memory_space<vmem>>, vector<10x1x64xf32>,
    %cst_28 = arith.constant 0.000000e+00 : f32
    %16 = vector.broadcast %cst_28 : f32 to vector<128x7xf32>
    %c0_29 = arith.constant 0 : index
    %c9_30 = arith.constant 9 : index
    %17 = vector.load %arg15[%c0_29, %c9_30] : memref<128x16xf32, #tpu.memory_space<vmem>>, vector<128x7xf32>
    tpu.vector_store %arg15[%c0_29, %c9_30], %16 {strides = array<i32>} : memref<128x16xf32, #tpu.memory_space<vmem>>, vector<128x7xf32>,
    %c0_31 = arith.constant 0 : index
    %c0_32 = arith.constant 0 : index
    %c0_33 = arith.constant 0 : index
    %c0_34 = arith.constant 0 : index
    %18 = vector.load %arg1[%c0_31, %c0_32, %c0_33, %c0_34] : memref<1x8x16x1xf32, #tpu.memory_space<vmem>>, vector<1x8x16x1xf32>
    %19 = vector.shape_cast %18 : vector<1x8x16x1xf32> to vector<8x16x1xf32>
    %20 = arith.mulf %19, %19 : vector<8x16x1xf32>
    %cst_35 = arith.constant dense<0.000000e+00> : vector<16x1xf32>
    %21 = vector.multi_reduction <add>, %20, %cst_35 [0] : vector<8x16x1xf32> to vector<16x1xf32>
    %22 = vector.shape_cast %21 : vector<16x1xf32> to vector<1x16x1xf32>
    %23 = math.sqrt %22 : vector<1x16x1xf32>
    %cst_36 = arith.constant 9.99999996E-13 : f32
    %24 = vector.broadcast %cst_36 : f32 to vector<1x16x1xf32>
    %25 = arith.maximumf %23, %24 : vector<1x16x1xf32>
    %26 = vector.broadcast %25 : vector<1x16x1xf32> to vector<8x16x1xf32>
    %27 = arith.divf %19, %26 : vector<8x16x1xf32>
    %c1 = arith.constant 1 : index
    %c1_37 = arith.constant 1 : index
    %c0_38 = arith.constant 0 : index
    %28 = vector.load %arg13[%c1, %c1_37, %c0_38] : memref<10x18x1xf32, #tpu.memory_space<vmem>>, vector<8x16x1xf32>
    tpu.vector_store %arg13[%c1, %c1_37, %c0_38], %27 {strides = array<i32>} : memref<10x18x1xf32, #tpu.memory_space<vmem>>, vector<8x16x1xf32>,
    %c0_39 = arith.constant 0 : index
    %c0_40 = arith.constant 0 : index
    %c0_41 = arith.constant 0 : index
    %29 = vector.load %arg13[%c0_39, %c0_40, %c0_41] : memref<10x18x1xf32, #tpu.memory_space<vmem>>, vector<8x16x1xf32>
    %30 = vector.shape_cast %29 : vector<8x16x1xf32> to vector<128x1xf32>
    %c0_42 = arith.constant 0 : index
    %c0_43 = arith.constant 0 : index
    %31 = vector.load %arg15[%c0_42, %c0_43] : memref<128x16xf32, #tpu.memory_space<vmem>>, vector<128x1xf32>
    tpu.vector_store %arg15[%c0_42, %c0_43], %30 {strides = array<i32>} : memref<128x16xf32, #tpu.memory_space<vmem>>, vector<128x1xf32>,
    %c0_44 = arith.constant 0 : index
    %c1_45 = arith.constant 1 : index
    %c0_46 = arith.constant 0 : index
    %32 = vector.load %arg13[%c0_44, %c1_45, %c0_46] : memref<10x18x1xf32, #tpu.memory_space<vmem>>, vector<8x16x1xf32>
    %33 = vector.shape_cast %32 : vector<8x16x1xf32> to vector<128x1xf32>
    %c0_47 = arith.constant 0 : index
    %c1_48 = arith.constant 1 : index
    %34 = vector.load %arg15[%c0_47, %c1_48] : memref<128x16xf32, #tpu.memory_space<vmem>>, vector<128x1xf32>
    tpu.vector_store %arg15[%c0_47, %c1_48], %33 {strides = array<i32>} : memref<128x16xf32, #tpu.memory_space<vmem>>, vector<128x1xf32>,
    %c0_49 = arith.constant 0 : index
    %c2 = arith.constant 2 : index
    %c0_50 = arith.constant 0 : index
    %35 = vector.load %arg13[%c0_49, %c2, %c0_50] : memref<10x18x1xf32, #tpu.memory_space<vmem>>, vector<8x16x1xf32>
    %36 = vector.shape_cast %35 : vector<8x16x1xf32> to vector<128x1xf32>
    %c0_51 = arith.constant 0 : index
    %c2_52 = arith.constant 2 : index
    %37 = vector.load %arg15[%c0_51, %c2_52] : memref<128x16xf32, #tpu.memory_space<vmem>>, vector<128x1xf32>
    tpu.vector_store %arg15[%c0_51, %c2_52], %36 {strides = array<i32>} : memref<128x16xf32, #tpu.memory_space<vmem>>, vector<128x1xf32>,
    %c1_53 = arith.constant 1 : index
    %c0_54 = arith.constant 0 : index
    %c0_55 = arith.constant 0 : index
    %38 = vector.load %arg13[%c1_53, %c0_54, %c0_55] : memref<10x18x1xf32, #tpu.memory_space<vmem>>, vector<8x16x1xf32>
    %39 = vector.shape_cast %38 : vector<8x16x1xf32> to vector<128x1xf32>
    %c0_56 = arith.constant 0 : index
    %c3 = arith.constant 3 : index
    %40 = vector.load %arg15[%c0_56, %c3] : memref<128x16xf32, #tpu.memory_space<vmem>>, vector<128x1xf32>
    tpu.vector_store %arg15[%c0_56, %c3], %39 {strides = array<i32>} : memref<128x16xf32, #tpu.memory_space<vmem>>, vector<128x1xf32>,
    %c1_57 = arith.constant 1 : index
    %c1_58 = arith.constant 1 : index
    %c0_59 = arith.constant 0 : index
    %41 = vector.load %arg13[%c1_57, %c1_58, %c0_59] : memref<10x18x1xf32, #tpu.memory_space<vmem>>, vector<8x16x1xf32>
    %42 = vector.shape_cast %41 : vector<8x16x1xf32> to vector<128x1xf32>
    %c0_60 = arith.constant 0 : index
    %c4 = arith.constant 4 : index
    %43 = vector.load %arg15[%c0_60, %c4] : memref<128x16xf32, #tpu.memory_space<vmem>>, vector<128x1xf32>
    tpu.vector_store %arg15[%c0_60, %c4], %42 {strides = array<i32>} : memref<128x16xf32, #tpu.memory_space<vmem>>, vector<128x1xf32>,
    %c1_61 = arith.constant 1 : index
    %c2_62 = arith.constant 2 : index
    %c0_63 = arith.constant 0 : index
    %44 = vector.load %arg13[%c1_61, %c2_62, %c0_63] : memref<10x18x1xf32, #tpu.memory_space<vmem>>, vector<8x16x1xf32>
    %45 = vector.shape_cast %44 : vector<8x16x1xf32> to vector<128x1xf32>
    %c0_64 = arith.constant 0 : index
    %c5 = arith.constant 5 : index
    %46 = vector.load %arg15[%c0_64, %c5] : memref<128x16xf32, #tpu.memory_space<vmem>>, vector<128x1xf32>
    tpu.vector_store %arg15[%c0_64, %c5], %45 {strides = array<i32>} : memref<128x16xf32, #tpu.memory_space<vmem>>, vector<128x1xf32>,
    %c2_65 = arith.constant 2 : index
    %c0_66 = arith.constant 0 : index
    %c0_67 = arith.constant 0 : index
    %47 = vector.load %arg13[%c2_65, %c0_66, %c0_67] : memref<10x18x1xf32, #tpu.memory_space<vmem>>, vector<8x16x1xf32>
    %48 = vector.shape_cast %47 : vector<8x16x1xf32> to vector<128x1xf32>
    %c0_68 = arith.constant 0 : index
    %c6 = arith.constant 6 : index
    %49 = vector.load %arg15[%c0_68, %c6] : memref<128x16xf32, #tpu.memory_space<vmem>>, vector<128x1xf32>
    tpu.vector_store %arg15[%c0_68, %c6], %48 {strides = array<i32>} : memref<128x16xf32, #tpu.memory_space<vmem>>, vector<128x1xf32>,
    %c2_69 = arith.constant 2 : index
    %c1_70 = arith.constant 1 : index
    %c0_71 = arith.constant 0 : index
    %50 = vector.load %arg13[%c2_69, %c1_70, %c0_71] : memref<10x18x1xf32, #tpu.memory_space<vmem>>, vector<8x16x1xf32>
    %51 = vector.shape_cast %50 : vector<8x16x1xf32> to vector<128x1xf32>
    %c0_72 = arith.constant 0 : index
    %c7 = arith.constant 7 : index
    %52 = vector.load %arg15[%c0_72, %c7] : memref<128x16xf32, #tpu.memory_space<vmem>>, vector<128x1xf32>
    tpu.vector_store %arg15[%c0_72, %c7], %51 {strides = array<i32>} : memref<128x16xf32, #tpu.memory_space<vmem>>, vector<128x1xf32>,
    %c2_73 = arith.constant 2 : index
    %c2_74 = arith.constant 2 : index
    %c0_75 = arith.constant 0 : index
    %53 = vector.load %arg13[%c2_73, %c2_74, %c0_75] : memref<10x18x1xf32, #tpu.memory_space<vmem>>, vector<8x16x1xf32>
    %54 = vector.shape_cast %53 : vector<8x16x1xf32> to vector<128x1xf32>
    %c0_76 = arith.constant 0 : index
    %c8 = arith.constant 8 : index
    %55 = vector.load %arg15[%c0_76, %c8] : memref<128x16xf32, #tpu.memory_space<vmem>>, vector<128x1xf32>
    tpu.vector_store %arg15[%c0_76, %c8], %54 {strides = array<i32>} : memref<128x16xf32, #tpu.memory_space<vmem>>, vector<128x1xf32>,
    %c0_77 = arith.constant 0 : index
    %c0_78 = arith.constant 0 : index
    %56 = vector.load %arg15[%c0_77, %c0_78] : memref<128x16xf32, #tpu.memory_space<vmem>>, vector<128x16xf32>
    %c0_79 = arith.constant 0 : index
    %c0_80 = arith.constant 0 : index
    %57 = vector.load %arg2[%c0_79, %c0_80] : memref<16x64xf32, #tpu.memory_space<vmem>>, vector<16x64xf32>
    %cst_81 = arith.constant dense<0.000000e+00> : vector<128x64xf32>
    %58 = tpu.matmul %56, %57, %cst_81 {dimension_numbers = #tpu.dot_dimension_numbers<[1], [0], [0], [1], [0, 0, 1, 1], [], []>} : vector<128x16xf32>, vector<16x64xf32>, vector<128x64xf32> -> vector<128x64xf32>
    %c0_82 = arith.constant 0 : index
    %c0_83 = arith.constant 0 : index
    %59 = vector.load %arg3[%c0_82, %c0_83] : memref<1x64xf32, #tpu.memory_space<vmem>>, vector<1x64xf32>
    %60 = vector.broadcast %59 : vector<1x64xf32> to vector<128x64xf32>
    %61 = arith.addf %58, %60 : vector<128x64xf32>
    %cst_84 = arith.constant 0.000000e+00 : f32
    %62 = vector.broadcast %cst_84 : f32 to vector<128x64xf32>
    %63 = arith.maximumf %61, %62 : vector<128x64xf32>
    %64 = vector.shape_cast %63 : vector<128x64xf32> to vector<8x16x64xf32>
    %c1_85 = arith.constant 1 : index
    %c1_86 = arith.constant 1 : index
    %c0_87 = arith.constant 0 : index
    %65 = vector.load %arg14[%c1_85, %c1_86, %c0_87] : memref<10x18x64xf32, #tpu.memory_space<vmem>>, vector<8x16x64xf32>
    tpu.vector_store %arg14[%c1_85, %c1_86, %c0_87], %64 {strides = array<i32>} : memref<10x18x64xf32, #tpu.memory_space<vmem>>, vector<8x16x64xf32>,
    %c0_88 = arith.constant 0 : index
    %c0_89 = arith.constant 0 : index
    %c0_90 = arith.constant 0 : index
    %66 = vector.load %arg14[%c0_88, %c0_89, %c0_90] : memref<10x18x64xf32, #tpu.memory_space<vmem>>, vector<10x16x64xf32>
    %c0_91 = arith.constant 0 : index
    %c1_92 = arith.constant 1 : index
    %c0_93 = arith.constant 0 : index
    %67 = vector.load %arg14[%c0_91, %c1_92, %c0_93] : memref<10x18x64xf32, #tpu.memory_space<vmem>>, vector<10x16x64xf32>
    %68 = arith.maximumf %66, %67 : vector<10x16x64xf32>
    %c0_94 = arith.constant 0 : index
    %c2_95 = arith.constant 2 : index
    %c0_96 = arith.constant 0 : index
    %69 = vector.load %arg14[%c0_94, %c2_95, %c0_96] : memref<10x18x64xf32, #tpu.memory_space<vmem>>, vector<10x16x64xf32>
    %70 = arith.maximumf %68, %69 : vector<10x16x64xf32>
    %71 = vector.extract_strided_slice %70 {offsets = [0, 0, 0], sizes = [8, 16, 64], strides = [1, 1, 1]} : vector<10x16x64xf32> to vector<8x16x64xf32>
    %72 = vector.extract_strided_slice %70 {offsets = [1, 0, 0], sizes = [8, 16, 64], strides = [1, 1, 1]} : vector<10x16x64xf32> to vector<8x16x64xf32>
    %73 = arith.maximumf %71, %72 : vector<8x16x64xf32>
    %74 = vector.extract_strided_slice %70 {offsets = [2, 0, 0], sizes = [8, 16, 64], strides = [1, 1, 1]} : vector<10x16x64xf32> to vector<8x16x64xf32>
    %75 = arith.maximumf %73, %74 : vector<8x16x64xf32>
    %c1_97 = arith.constant 1 : index
    %c1_98 = arith.constant 1 : index
    %c0_99 = arith.constant 0 : index
    %76 = vector.load %arg14[%c1_97, %c1_98, %c0_99] : memref<10x18x64xf32, #tpu.memory_space<vmem>>, vector<8x16x64xf32>
    tpu.vector_store %arg14[%c1_97, %c1_98, %c0_99], %75 {strides = array<i32>} : memref<10x18x64xf32, #tpu.memory_space<vmem>>, vector<8x16x64xf32>,
    %c0_100 = arith.constant 0 : index
    %c0_101 = arith.constant 0 : index
    %c0_102 = arith.constant 0 : index
    %77 = vector.load %arg14[%c0_100, %c0_101, %c0_102] : memref<10x18x64xf32, #tpu.memory_space<vmem>>, vector<8x16x64xf32>
    %78 = vector.shape_cast %77 : vector<8x16x64xf32> to vector<128x64xf32>
    %79 = arith.truncf %78 : vector<128x64xf32> to vector<128x64xbf16>
    %c0_103 = arith.constant 0 : index
    %c0_104 = arith.constant 0 : index
    %80 = vector.load %arg16[%c0_103, %c0_104] : memref<128x576xbf16, #tpu.memory_space<vmem>>, vector<128x64xbf16>
    tpu.vector_store %arg16[%c0_103, %c0_104], %79 {strides = array<i32>} : memref<128x576xbf16, #tpu.memory_space<vmem>>, vector<128x64xbf16>,
    %c0_105 = arith.constant 0 : index
    %c1_106 = arith.constant 1 : index
    %c0_107 = arith.constant 0 : index
    %81 = vector.load %arg14[%c0_105, %c1_106, %c0_107] : memref<10x18x64xf32, #tpu.memory_space<vmem>>, vector<8x16x64xf32>
    %82 = vector.shape_cast %81 : vector<8x16x64xf32> to vector<128x64xf32>
    %83 = arith.truncf %82 : vector<128x64xf32> to vector<128x64xbf16>
    %c0_108 = arith.constant 0 : index
    %c64 = arith.constant 64 : index
    %84 = vector.load %arg16[%c0_108, %c64] : memref<128x576xbf16, #tpu.memory_space<vmem>>, vector<128x64xbf16>
    tpu.vector_store %arg16[%c0_108, %c64], %83 {strides = array<i32>} : memref<128x576xbf16, #tpu.memory_space<vmem>>, vector<128x64xbf16>,
    %c0_109 = arith.constant 0 : index
    %c2_110 = arith.constant 2 : index
    %c0_111 = arith.constant 0 : index
    %85 = vector.load %arg14[%c0_109, %c2_110, %c0_111] : memref<10x18x64xf32, #tpu.memory_space<vmem>>, vector<8x16x64xf32>
    %86 = vector.shape_cast %85 : vector<8x16x64xf32> to vector<128x64xf32>
    %87 = arith.truncf %86 : vector<128x64xf32> to vector<128x64xbf16>
    %c0_112 = arith.constant 0 : index
    %c128 = arith.constant 128 : index
    %88 = vector.load %arg16[%c0_112, %c128] : memref<128x576xbf16, #tpu.memory_space<vmem>>, vector<128x64xbf16>
    tpu.vector_store %arg16[%c0_112, %c128], %87 {strides = array<i32>} : memref<128x576xbf16, #tpu.memory_space<vmem>>, vector<128x64xbf16>,
    %c1_113 = arith.constant 1 : index
    %c0_114 = arith.constant 0 : index
    %c0_115 = arith.constant 0 : index
    %89 = vector.load %arg14[%c1_113, %c0_114, %c0_115] : memref<10x18x64xf32, #tpu.memory_space<vmem>>, vector<8x16x64xf32>
    %90 = vector.shape_cast %89 : vector<8x16x64xf32> to vector<128x64xf32>
    %91 = arith.truncf %90 : vector<128x64xf32> to vector<128x64xbf16>
    %c0_116 = arith.constant 0 : index
    %c192 = arith.constant 192 : index
    %92 = vector.load %arg16[%c0_116, %c192] : memref<128x576xbf16, #tpu.memory_space<vmem>>, vector<128x64xbf16>
    tpu.vector_store %arg16[%c0_116, %c192], %91 {strides = array<i32>} : memref<128x576xbf16, #tpu.memory_space<vmem>>, vector<128x64xbf16>,
    %c1_117 = arith.constant 1 : index
    %c1_118 = arith.constant 1 : index
    %c0_119 = arith.constant 0 : index
    %93 = vector.load %arg14[%c1_117, %c1_118, %c0_119] : memref<10x18x64xf32, #tpu.memory_space<vmem>>, vector<8x16x64xf32>
    %94 = vector.shape_cast %93 : vector<8x16x64xf32> to vector<128x64xf32>
    %95 = arith.truncf %94 : vector<128x64xf32> to vector<128x64xbf16>
    %c0_120 = arith.constant 0 : index
    %c256 = arith.constant 256 : index
    %96 = vector.load %arg16[%c0_120, %c256] : memref<128x576xbf16, #tpu.memory_space<vmem>>, vector<128x64xbf16>
    tpu.vector_store %arg16[%c0_120, %c256], %95 {strides = array<i32>} : memref<128x576xbf16, #tpu.memory_space<vmem>>, vector<128x64xbf16>,
    %c1_121 = arith.constant 1 : index
    %c2_122 = arith.constant 2 : index
    %c0_123 = arith.constant 0 : index
    %97 = vector.load %arg14[%c1_121, %c2_122, %c0_123] : memref<10x18x64xf32, #tpu.memory_space<vmem>>, vector<8x16x64xf32>
    %98 = vector.shape_cast %97 : vector<8x16x64xf32> to vector<128x64xf32>
    %99 = arith.truncf %98 : vector<128x64xf32> to vector<128x64xbf16>
    %c0_124 = arith.constant 0 : index
    %c320 = arith.constant 320 : index
    %100 = vector.load %arg16[%c0_124, %c320] : memref<128x576xbf16, #tpu.memory_space<vmem>>, vector<128x64xbf16>
    tpu.vector_store %arg16[%c0_124, %c320], %99 {strides = array<i32>} : memref<128x576xbf16, #tpu.memory_space<vmem>>, vector<128x64xbf16>,
    %c2_125 = arith.constant 2 : index
    %c0_126 = arith.constant 0 : index
    %c0_127 = arith.constant 0 : index
    %101 = vector.load %arg14[%c2_125, %c0_126, %c0_127] : memref<10x18x64xf32, #tpu.memory_space<vmem>>, vector<8x16x64xf32>
    %102 = vector.shape_cast %101 : vector<8x16x64xf32> to vector<128x64xf32>
    %103 = arith.truncf %102 : vector<128x64xf32> to vector<128x64xbf16>
    %c0_128 = arith.constant 0 : index
    %c384 = arith.constant 384 : index
    %104 = vector.load %arg16[%c0_128, %c384] : memref<128x576xbf16, #tpu.memory_space<vmem>>, vector<128x64xbf16>
    tpu.vector_store %arg16[%c0_128, %c384], %103 {strides = array<i32>} : memref<128x576xbf16, #tpu.memory_space<vmem>>, vector<128x64xbf16>,
    %c2_129 = arith.constant 2 : index
    %c1_130 = arith.constant 1 : index
    %c0_131 = arith.constant 0 : index
    %105 = vector.load %arg14[%c2_129, %c1_130, %c0_131] : memref<10x18x64xf32, #tpu.memory_space<vmem>>, vector<8x16x64xf32>
    %106 = vector.shape_cast %105 : vector<8x16x64xf32> to vector<128x64xf32>
    %107 = arith.truncf %106 : vector<128x64xf32> to vector<128x64xbf16>
    %c0_132 = arith.constant 0 : index
    %c448 = arith.constant 448 : index
    %108 = vector.load %arg16[%c0_132, %c448] : memref<128x576xbf16, #tpu.memory_space<vmem>>, vector<128x64xbf16>
    tpu.vector_store %arg16[%c0_132, %c448], %107 {strides = array<i32>} : memref<128x576xbf16, #tpu.memory_space<vmem>>, vector<128x64xbf16>,
    %c2_133 = arith.constant 2 : index
    %c2_134 = arith.constant 2 : index
    %c0_135 = arith.constant 0 : index
    %109 = vector.load %arg14[%c2_133, %c2_134, %c0_135] : memref<10x18x64xf32, #tpu.memory_space<vmem>>, vector<8x16x64xf32>
    %110 = vector.shape_cast %109 : vector<8x16x64xf32> to vector<128x64xf32>
    %111 = arith.truncf %110 : vector<128x64xf32> to vector<128x64xbf16>
    %c0_136 = arith.constant 0 : index
    %c512 = arith.constant 512 : index
    %112 = vector.load %arg16[%c0_136, %c512] : memref<128x576xbf16, #tpu.memory_space<vmem>>, vector<128x64xbf16>
    tpu.vector_store %arg16[%c0_136, %c512], %111 {strides = array<i32>} : memref<128x576xbf16, #tpu.memory_space<vmem>>, vector<128x64xbf16>,
    %c0_137 = arith.constant 0 : index
    %c0_138 = arith.constant 0 : index
    %113 = vector.load %arg16[%c0_137, %c0_138] : memref<128x576xbf16, #tpu.memory_space<vmem>>, vector<128x576xbf16>
    %c0_139 = arith.constant 0 : index
    %c0_140 = arith.constant 0 : index
    %114 = vector.load %arg4[%c0_139, %c0_140] : memref<576x64xbf16, #tpu.memory_space<vmem>>, vector<576x64xbf16>
    %cst_141 = arith.constant dense<0.000000e+00> : vector<128x64xf32>
    %115 = tpu.matmul %113, %114, %cst_141 {dimension_numbers = #tpu.dot_dimension_numbers<[1], [0], [0], [1], [0, 0, 1, 1], [], []>} : vector<128x576xbf16>, vector<576x64xbf16>, vector<128x64xf32> -> vector<128x64xf32>
    %c0_142 = arith.constant 0 : index
    %c0_143 = arith.constant 0 : index
    %116 = vector.load %arg5[%c0_142, %c0_143] : memref<1x64xf32, #tpu.memory_space<vmem>>, vector<1x64xf32>
    %117 = vector.broadcast %116 : vector<1x64xf32> to vector<128x64xf32>
    %118 = arith.addf %115, %117 : vector<128x64xf32>
    %cst_144 = arith.constant 0.000000e+00 : f32
    %119 = vector.broadcast %cst_144 : f32 to vector<128x64xf32>
    %120 = arith.maximumf %118, %119 : vector<128x64xf32>
    %121 = vector.shape_cast %120 : vector<128x64xf32> to vector<8x16x64xf32>
    %c1_145 = arith.constant 1 : index
    %c1_146 = arith.constant 1 : index
    %c0_147 = arith.constant 0 : index
    %122 = vector.load %arg14[%c1_145, %c1_146, %c0_147] : memref<10x18x64xf32, #tpu.memory_space<vmem>>, vector<8x16x64xf32>
    tpu.vector_store %arg14[%c1_145, %c1_146, %c0_147], %121 {strides = array<i32>} : memref<10x18x64xf32, #tpu.memory_space<vmem>>, vector<8x16x64xf32>,
    %c0_148 = arith.constant 0 : index
    %c0_149 = arith.constant 0 : index
    %c0_150 = arith.constant 0 : index
    %123 = vector.load %arg14[%c0_148, %c0_149, %c0_150] : memref<10x18x64xf32, #tpu.memory_space<vmem>>, vector<10x16x64xf32>
    %c0_151 = arith.constant 0 : index
    %c1_152 = arith.constant 1 : index
    %c0_153 = arith.constant 0 : index
    %124 = vector.load %arg14[%c0_151, %c1_152, %c0_153] : memref<10x18x64xf32, #tpu.memory_space<vmem>>, vector<10x16x64xf32>
    %125 = arith.maximumf %123, %124 : vector<10x16x64xf32>
    %c0_154 = arith.constant 0 : index
    %c2_155 = arith.constant 2 : index
    %c0_156 = arith.constant 0 : index
    %126 = vector.load %arg14[%c0_154, %c2_155, %c0_156] : memref<10x18x64xf32, #tpu.memory_space<vmem>>, vector<10x16x64xf32>
    %127 = arith.maximumf %125, %126 : vector<10x16x64xf32>
    %128 = vector.extract_strided_slice %127 {offsets = [0, 0, 0], sizes = [8, 16, 64], strides = [1, 1, 1]} : vector<10x16x64xf32> to vector<8x16x64xf32>
    %129 = vector.extract_strided_slice %127 {offsets = [1, 0, 0], sizes = [8, 16, 64], strides = [1, 1, 1]} : vector<10x16x64xf32> to vector<8x16x64xf32>
    %130 = arith.maximumf %128, %129 : vector<8x16x64xf32>
    %131 = vector.extract_strided_slice %127 {offsets = [2, 0, 0], sizes = [8, 16, 64], strides = [1, 1, 1]} : vector<10x16x64xf32> to vector<8x16x64xf32>
    %132 = arith.maximumf %130, %131 : vector<8x16x64xf32>
    %133 = vector.extract_strided_slice %132 {offsets = [0, 0, 0], sizes = [8, 1, 64], strides = [1, 1, 1]} : vector<8x16x64xf32> to vector<8x1x64xf32>
    %134 = vector.shape_cast %133 : vector<8x1x64xf32> to vector<8x64xf32>
    %135 = arith.truncf %134 : vector<8x64xf32> to vector<8x64xbf16>
    %c0_157 = arith.constant 0 : index
    %c0_158 = arith.constant 0 : index
    %136 = vector.load %arg17[%c0_157, %c0_158] : memref<8x1024xbf16, #tpu.memory_space<vmem>>, vector<8x64xbf16>
    tpu.vector_store %arg17[%c0_157, %c0_158], %135 {strides = array<i32>} : memref<8x1024xbf16, #tpu.memory_space<vmem>>, vector<8x64xbf16>,
    %137 = vector.extract_strided_slice %132 {offsets = [0, 1, 0], sizes = [8, 1, 64], strides = [1, 1, 1]} : vector<8x16x64xf32> to vector<8x1x64xf32>
    %138 = vector.shape_cast %137 : vector<8x1x64xf32> to vector<8x64xf32>
    %139 = arith.truncf %138 : vector<8x64xf32> to vector<8x64xbf16>
    %c0_159 = arith.constant 0 : index
    %c64_160 = arith.constant 64 : index
    %140 = vector.load %arg17[%c0_159, %c64_160] : memref<8x1024xbf16, #tpu.memory_space<vmem>>, vector<8x64xbf16>
    tpu.vector_store %arg17[%c0_159, %c64_160], %139 {strides = array<i32>} : memref<8x1024xbf16, #tpu.memory_space<vmem>>, vector<8x64xbf16>,
    %141 = vector.extract_strided_slice %132 {offsets = [0, 2, 0], sizes = [8, 1, 64], strides = [1, 1, 1]} : vector<8x16x64xf32> to vector<8x1x64xf32>
    %142 = vector.shape_cast %141 : vector<8x1x64xf32> to vector<8x64xf32>
    %143 = arith.truncf %142 : vector<8x64xf32> to vector<8x64xbf16>
    %c0_161 = arith.constant 0 : index
    %c128_162 = arith.constant 128 : index
    %144 = vector.load %arg17[%c0_161, %c128_162] : memref<8x1024xbf16, #tpu.memory_space<vmem>>, vector<8x64xbf16>
    tpu.vector_store %arg17[%c0_161, %c128_162], %143 {strides = array<i32>} : memref<8x1024xbf16, #tpu.memory_space<vmem>>, vector<8x64xbf16>,
    %145 = vector.extract_strided_slice %132 {offsets = [0, 3, 0], sizes = [8, 1, 64], strides = [1, 1, 1]} : vector<8x16x64xf32> to vector<8x1x64xf32>
    %146 = vector.shape_cast %145 : vector<8x1x64xf32> to vector<8x64xf32>
    %147 = arith.truncf %146 : vector<8x64xf32> to vector<8x64xbf16>
    %c0_163 = arith.constant 0 : index
    %c192_164 = arith.constant 192 : index
    %148 = vector.load %arg17[%c0_163, %c192_164] : memref<8x1024xbf16, #tpu.memory_space<vmem>>, vector<8x64xbf16>
    tpu.vector_store %arg17[%c0_163, %c192_164], %147 {strides = array<i32>} : memref<8x1024xbf16, #tpu.memory_space<vmem>>, vector<8x64xbf16>,
    %149 = vector.extract_strided_slice %132 {offsets = [0, 4, 0], sizes = [8, 1, 64], strides = [1, 1, 1]} : vector<8x16x64xf32> to vector<8x1x64xf32>
    %150 = vector.shape_cast %149 : vector<8x1x64xf32> to vector<8x64xf32>
    %151 = arith.truncf %150 : vector<8x64xf32> to vector<8x64xbf16>
    %c0_165 = arith.constant 0 : index
    %c256_166 = arith.constant 256 : index
    %152 = vector.load %arg17[%c0_165, %c256_166] : memref<8x1024xbf16, #tpu.memory_space<vmem>>, vector<8x64xbf16>
    tpu.vector_store %arg17[%c0_165, %c256_166], %151 {strides = array<i32>} : memref<8x1024xbf16, #tpu.memory_space<vmem>>, vector<8x64xbf16>,
    %153 = vector.extract_strided_slice %132 {offsets = [0, 5, 0], sizes = [8, 1, 64], strides = [1, 1, 1]} : vector<8x16x64xf32> to vector<8x1x64xf32>
    %154 = vector.shape_cast %153 : vector<8x1x64xf32> to vector<8x64xf32>
    %155 = arith.truncf %154 : vector<8x64xf32> to vector<8x64xbf16>
    %c0_167 = arith.constant 0 : index
    %c320_168 = arith.constant 320 : index
    %156 = vector.load %arg17[%c0_167, %c320_168] : memref<8x1024xbf16, #tpu.memory_space<vmem>>, vector<8x64xbf16>
    tpu.vector_store %arg17[%c0_167, %c320_168], %155 {strides = array<i32>} : memref<8x1024xbf16, #tpu.memory_space<vmem>>, vector<8x64xbf16>,
    %157 = vector.extract_strided_slice %132 {offsets = [0, 6, 0], sizes = [8, 1, 64], strides = [1, 1, 1]} : vector<8x16x64xf32> to vector<8x1x64xf32>
    %158 = vector.shape_cast %157 : vector<8x1x64xf32> to vector<8x64xf32>
    %159 = arith.truncf %158 : vector<8x64xf32> to vector<8x64xbf16>
    %c0_169 = arith.constant 0 : index
    %c384_170 = arith.constant 384 : index
    %160 = vector.load %arg17[%c0_169, %c384_170] : memref<8x1024xbf16, #tpu.memory_space<vmem>>, vector<8x64xbf16>
    tpu.vector_store %arg17[%c0_169, %c384_170], %159 {strides = array<i32>} : memref<8x1024xbf16, #tpu.memory_space<vmem>>, vector<8x64xbf16>,
    %161 = vector.extract_strided_slice %132 {offsets = [0, 7, 0], sizes = [8, 1, 64], strides = [1, 1, 1]} : vector<8x16x64xf32> to vector<8x1x64xf32>
    %162 = vector.shape_cast %161 : vector<8x1x64xf32> to vector<8x64xf32>
    %163 = arith.truncf %162 : vector<8x64xf32> to vector<8x64xbf16>
    %c0_171 = arith.constant 0 : index
    %c448_172 = arith.constant 448 : index
    %164 = vector.load %arg17[%c0_171, %c448_172] : memref<8x1024xbf16, #tpu.memory_space<vmem>>, vector<8x64xbf16>
    tpu.vector_store %arg17[%c0_171, %c448_172], %163 {strides = array<i32>} : memref<8x1024xbf16, #tpu.memory_space<vmem>>, vector<8x64xbf16>,
    %165 = vector.extract_strided_slice %132 {offsets = [0, 8, 0], sizes = [8, 1, 64], strides = [1, 1, 1]} : vector<8x16x64xf32> to vector<8x1x64xf32>
    %166 = vector.shape_cast %165 : vector<8x1x64xf32> to vector<8x64xf32>
    %167 = arith.truncf %166 : vector<8x64xf32> to vector<8x64xbf16>
    %c0_173 = arith.constant 0 : index
    %c512_174 = arith.constant 512 : index
    %168 = vector.load %arg17[%c0_173, %c512_174] : memref<8x1024xbf16, #tpu.memory_space<vmem>>, vector<8x64xbf16>
    tpu.vector_store %arg17[%c0_173, %c512_174], %167 {strides = array<i32>} : memref<8x1024xbf16, #tpu.memory_space<vmem>>, vector<8x64xbf16>,
    %169 = vector.extract_strided_slice %132 {offsets = [0, 9, 0], sizes = [8, 1, 64], strides = [1, 1, 1]} : vector<8x16x64xf32> to vector<8x1x64xf32>
    %170 = vector.shape_cast %169 : vector<8x1x64xf32> to vector<8x64xf32>
    %171 = arith.truncf %170 : vector<8x64xf32> to vector<8x64xbf16>
    %c0_175 = arith.constant 0 : index
    %c576 = arith.constant 576 : index
    %172 = vector.load %arg17[%c0_175, %c576] : memref<8x1024xbf16, #tpu.memory_space<vmem>>, vector<8x64xbf16>
    tpu.vector_store %arg17[%c0_175, %c576], %171 {strides = array<i32>} : memref<8x1024xbf16, #tpu.memory_space<vmem>>, vector<8x64xbf16>,
    %173 = vector.extract_strided_slice %132 {offsets = [0, 10, 0], sizes = [8, 1, 64], strides = [1, 1, 1]} : vector<8x16x64xf32> to vector<8x1x64xf32>
    %174 = vector.shape_cast %173 : vector<8x1x64xf32> to vector<8x64xf32>
    %175 = arith.truncf %174 : vector<8x64xf32> to vector<8x64xbf16>
    %c0_176 = arith.constant 0 : index
    %c640 = arith.constant 640 : index
    %176 = vector.load %arg17[%c0_176, %c640] : memref<8x1024xbf16, #tpu.memory_space<vmem>>, vector<8x64xbf16>
    tpu.vector_store %arg17[%c0_176, %c640], %175 {strides = array<i32>} : memref<8x1024xbf16, #tpu.memory_space<vmem>>, vector<8x64xbf16>,
    %177 = vector.extract_strided_slice %132 {offsets = [0, 11, 0], sizes = [8, 1, 64], strides = [1, 1, 1]} : vector<8x16x64xf32> to vector<8x1x64xf32>
    %178 = vector.shape_cast %177 : vector<8x1x64xf32> to vector<8x64xf32>
    %179 = arith.truncf %178 : vector<8x64xf32> to vector<8x64xbf16>
    %c0_177 = arith.constant 0 : index
    %c704 = arith.constant 704 : index
    %180 = vector.load %arg17[%c0_177, %c704] : memref<8x1024xbf16, #tpu.memory_space<vmem>>, vector<8x64xbf16>
    tpu.vector_store %arg17[%c0_177, %c704], %179 {strides = array<i32>} : memref<8x1024xbf16, #tpu.memory_space<vmem>>, vector<8x64xbf16>,
    %181 = vector.extract_strided_slice %132 {offsets = [0, 12, 0], sizes = [8, 1, 64], strides = [1, 1, 1]} : vector<8x16x64xf32> to vector<8x1x64xf32>
    %182 = vector.shape_cast %181 : vector<8x1x64xf32> to vector<8x64xf32>
    %183 = arith.truncf %182 : vector<8x64xf32> to vector<8x64xbf16>
    %c0_178 = arith.constant 0 : index
    %c768 = arith.constant 768 : index
    %184 = vector.load %arg17[%c0_178, %c768] : memref<8x1024xbf16, #tpu.memory_space<vmem>>, vector<8x64xbf16>
    tpu.vector_store %arg17[%c0_178, %c768], %183 {strides = array<i32>} : memref<8x1024xbf16, #tpu.memory_space<vmem>>, vector<8x64xbf16>,
    %185 = vector.extract_strided_slice %132 {offsets = [0, 13, 0], sizes = [8, 1, 64], strides = [1, 1, 1]} : vector<8x16x64xf32> to vector<8x1x64xf32>
    %186 = vector.shape_cast %185 : vector<8x1x64xf32> to vector<8x64xf32>
    %187 = arith.truncf %186 : vector<8x64xf32> to vector<8x64xbf16>
    %c0_179 = arith.constant 0 : index
    %c832 = arith.constant 832 : index
    %188 = vector.load %arg17[%c0_179, %c832] : memref<8x1024xbf16, #tpu.memory_space<vmem>>, vector<8x64xbf16>
    tpu.vector_store %arg17[%c0_179, %c832], %187 {strides = array<i32>} : memref<8x1024xbf16, #tpu.memory_space<vmem>>, vector<8x64xbf16>,
    %189 = vector.extract_strided_slice %132 {offsets = [0, 14, 0], sizes = [8, 1, 64], strides = [1, 1, 1]} : vector<8x16x64xf32> to vector<8x1x64xf32>
    %190 = vector.shape_cast %189 : vector<8x1x64xf32> to vector<8x64xf32>
    %191 = arith.truncf %190 : vector<8x64xf32> to vector<8x64xbf16>
    %c0_180 = arith.constant 0 : index
    %c896 = arith.constant 896 : index
    %192 = vector.load %arg17[%c0_180, %c896] : memref<8x1024xbf16, #tpu.memory_space<vmem>>, vector<8x64xbf16>
    tpu.vector_store %arg17[%c0_180, %c896], %191 {strides = array<i32>} : memref<8x1024xbf16, #tpu.memory_space<vmem>>, vector<8x64xbf16>,
    %193 = vector.extract_strided_slice %132 {offsets = [0, 15, 0], sizes = [8, 1, 64], strides = [1, 1, 1]} : vector<8x16x64xf32> to vector<8x1x64xf32>
    %194 = vector.shape_cast %193 : vector<8x1x64xf32> to vector<8x64xf32>
    %195 = arith.truncf %194 : vector<8x64xf32> to vector<8x64xbf16>
    %c0_181 = arith.constant 0 : index
    %c960 = arith.constant 960 : index
    %196 = vector.load %arg17[%c0_181, %c960] : memref<8x1024xbf16, #tpu.memory_space<vmem>>, vector<8x64xbf16>
    tpu.vector_store %arg17[%c0_181, %c960], %195 {strides = array<i32>} : memref<8x1024xbf16, #tpu.memory_space<vmem>>, vector<8x64xbf16>,
    %c0_182 = arith.constant 0 : index
    %c0_183 = arith.constant 0 : index
    %197 = vector.load %arg17[%c0_182, %c0_183] : memref<8x1024xbf16, #tpu.memory_space<vmem>>, vector<8x1024xbf16>
    %c0_184 = arith.constant 0 : index
    %c0_185 = arith.constant 0 : index
    %198 = vector.load %arg6[%c0_184, %c0_185] : memref<1024x512xbf16, #tpu.memory_space<vmem>>, vector<1024x512xbf16>
    %cst_186 = arith.constant dense<0.000000e+00> : vector<8x512xf32>
    %199 = tpu.matmul %197, %198, %cst_186 {dimension_numbers = #tpu.dot_dimension_numbers<[1], [0], [0], [1], [0, 0, 1, 1], [], []>} : vector<8x1024xbf16>, vector<1024x512xbf16>, vector<8x512xf32> -> vector<8x512xf32>
    %c0_187 = arith.constant 0 : index
    %c0_188 = arith.constant 0 : index
    %200 = vector.load %arg7[%c0_187, %c0_188] : memref<1x64xf32, #tpu.memory_space<vmem>>, vector<1x64xf32>
    %201 = vector.extract_strided_slice %199 {offsets = [0, 0], sizes = [1, 64], strides = [1, 1]} : vector<8x512xf32> to vector<1x64xf32>
    %202 = arith.addf %200, %201 : vector<1x64xf32>
    %203 = vector.extract_strided_slice %199 {offsets = [1, 64], sizes = [1, 64], strides = [1, 1]} : vector<8x512xf32> to vector<1x64xf32>
    %204 = arith.addf %202, %203 : vector<1x64xf32>
    %205 = vector.extract_strided_slice %199 {offsets = [2, 128], sizes = [1, 64], strides = [1, 1]} : vector<8x512xf32> to vector<1x64xf32>
    %206 = arith.addf %204, %205 : vector<1x64xf32>
    %207 = vector.extract_strided_slice %199 {offsets = [3, 192], sizes = [1, 64], strides = [1, 1]} : vector<8x512xf32> to vector<1x64xf32>
    %208 = arith.addf %206, %207 : vector<1x64xf32>
    %209 = vector.extract_strided_slice %199 {offsets = [4, 256], sizes = [1, 64], strides = [1, 1]} : vector<8x512xf32> to vector<1x64xf32>
    %210 = arith.addf %208, %209 : vector<1x64xf32>
    %211 = vector.extract_strided_slice %199 {offsets = [5, 320], sizes = [1, 64], strides = [1, 1]} : vector<8x512xf32> to vector<1x64xf32>
    %212 = arith.addf %210, %211 : vector<1x64xf32>
    %213 = vector.extract_strided_slice %199 {offsets = [6, 384], sizes = [1, 64], strides = [1, 1]} : vector<8x512xf32> to vector<1x64xf32>
    %214 = arith.addf %212, %213 : vector<1x64xf32>
    %215 = vector.extract_strided_slice %199 {offsets = [7, 448], sizes = [1, 64], strides = [1, 1]} : vector<8x512xf32> to vector<1x64xf32>
    %216 = arith.addf %214, %215 : vector<1x64xf32>
    %c0_189 = arith.constant 0 : index
    %c0_190 = arith.constant 0 : index
    %217 = vector.load %arg8[%c0_189, %c0_190] : memref<64x64xf32, #tpu.memory_space<vmem>>, vector<64x64xf32>
    %cst_191 = arith.constant dense<0.000000e+00> : vector<1x64xf32>
    %218 = tpu.matmul %216, %217, %cst_191 {dimension_numbers = #tpu.dot_dimension_numbers<[1], [0], [0], [1], [0, 0, 1, 1], [], []>} : vector<1x64xf32>, vector<64x64xf32>, vector<1x64xf32> -> vector<1x64xf32>
    %c0_192 = arith.constant 0 : index
    %c0_193 = arith.constant 0 : index
    %219 = vector.load %arg9[%c0_192, %c0_193] : memref<1x64xf32, #tpu.memory_space<vmem>>, vector<1x64xf32>
    %220 = arith.addf %218, %219 : vector<1x64xf32>
    %c0_194 = arith.constant 0 : index
    %c0_195 = arith.constant 0 : index
    %221 = vector.load %arg10[%c0_194, %c0_195] : memref<64x128xf32, #tpu.memory_space<vmem>>, vector<64x128xf32>
    %cst_196 = arith.constant dense<0.000000e+00> : vector<1x128xf32>
    %222 = tpu.matmul %220, %221, %cst_196 {dimension_numbers = #tpu.dot_dimension_numbers<[1], [0], [0], [1], [0, 0, 1, 1], [], []>} : vector<1x64xf32>, vector<64x128xf32>, vector<1x128xf32> -> vector<1x128xf32>
    %c0_197 = arith.constant 0 : index
    %c0_198 = arith.constant 0 : index
    %223 = vector.load %arg11[%c0_197, %c0_198] : memref<1x128xf32, #tpu.memory_space<vmem>>, vector<1x128xf32>
    %224 = arith.addf %222, %223 : vector<1x128xf32>
    %c0_199 = arith.constant 0 : index
    %c0_200 = arith.constant 0 : index
    %c0_201 = arith.constant 0 : index
    %225 = vector.load %arg12[%c0_199, %c0_200, %c0_201] : memref<1x1x128xf32, #tpu.memory_space<vmem>>, vector<1x1x128xf32>
    %226 = vector.shape_cast %225 : vector<1x1x128xf32> to vector<1x128xf32>
    %227 = vector.shape_cast %224 : vector<1x128xf32> to vector<1x1x128xf32>
    tpu.vector_store %arg12[%c0_199, %c0_200, %c0_201], %227 {strides = array<i32>} : memref<1x1x128xf32, #tpu.memory_space<vmem>>, vector<1x1x128xf32>,
    return
  }
  func.func @transform_0(%arg0: i32) -> (i32, i32, i32, i32) {
    %c0_i32 = arith.constant 0 : i32
    %c0_i32_0 = arith.constant 0 : i32
    %c0_i32_1 = arith.constant 0 : i32
    %c0_i32_2 = arith.constant 0 : i32
    return %arg0, %c0_i32, %c0_i32_0, %c0_i32_1 : i32, i32, i32, i32
  }
  func.func @transform_1(%arg0: i32) -> (i32, i32) {
    %c0_i32 = arith.constant 0 : i32
    %c0_i32_0 = arith.constant 0 : i32
    %c0_i32_1 = arith.constant 0 : i32
    return %c0_i32, %c0_i32_0 : i32, i32
  }
  func.func @transform_2(%arg0: i32) -> (i32, i32) {
    %c0_i32 = arith.constant 0 : i32
    %c0_i32_0 = arith.constant 0 : i32
    %c0_i32_1 = arith.constant 0 : i32
    return %c0_i32, %c0_i32_0 : i32, i32
  }
  func.func @transform_3(%arg0: i32) -> (i32, i32) {
    %c0_i32 = arith.constant 0 : i32
    %c0_i32_0 = arith.constant 0 : i32
    %c0_i32_1 = arith.constant 0 : i32
    return %c0_i32, %c0_i32_0 : i32, i32
  }
  func.func @transform_4(%arg0: i32) -> (i32, i32) {
    %c0_i32 = arith.constant 0 : i32
    %c0_i32_0 = arith.constant 0 : i32
    %c0_i32_1 = arith.constant 0 : i32
    return %c0_i32, %c0_i32_0 : i32, i32
  }
  func.func @transform_5(%arg0: i32) -> (i32, i32) {
    %c0_i32 = arith.constant 0 : i32
    %c0_i32_0 = arith.constant 0 : i32
    %c0_i32_1 = arith.constant 0 : i32
    return %c0_i32, %c0_i32_0 : i32, i32
  }
  func.func @transform_6(%arg0: i32) -> (i32, i32) {
    %c0_i32 = arith.constant 0 : i32
    %c0_i32_0 = arith.constant 0 : i32
    %c0_i32_1 = arith.constant 0 : i32
    return %c0_i32, %c0_i32_0 : i32, i32
  }
  func.func @transform_7(%arg0: i32) -> (i32, i32) {
    %c0_i32 = arith.constant 0 : i32
    %c0_i32_0 = arith.constant 0 : i32
    %c0_i32_1 = arith.constant 0 : i32
    return %c0_i32, %c0_i32_0 : i32, i32
  }
  func.func @transform_8(%arg0: i32) -> (i32, i32) {
    %c0_i32 = arith.constant 0 : i32
    %c0_i32_0 = arith.constant 0 : i32
    %c0_i32_1 = arith.constant 0 : i32
    return %c0_i32, %c0_i32_0 : i32, i32
  }
  func.func @transform_9(%arg0: i32) -> (i32, i32) {
    %c0_i32 = arith.constant 0 : i32
    %c0_i32_0 = arith.constant 0 : i32
    %c0_i32_1 = arith.constant 0 : i32
    return %c0_i32, %c0_i32_0 : i32, i32
  }
  func.func @transform_10(%arg0: i32) -> (i32, i32) {
    %c0_i32 = arith.constant 0 : i32
    %c0_i32_0 = arith.constant 0 : i32
    %c0_i32_1 = arith.constant 0 : i32
    return %c0_i32, %c0_i32_0 : i32, i32
  }
  func.func @transform_11(%arg0: i32) -> (i32, i32, i32) {
    %c0_i32 = arith.constant 0 : i32
    %c0_i32_0 = arith.constant 0 : i32
    %c0_i32_1 = arith.constant 0 : i32
    return %arg0, %c0_i32, %c0_i32_0 : i32, i32, i32
  }
}

</mosaic_0001>

<llo_original>
// kernel: cnn_forward.1
$region0: #{cnn_forward.1}
  #allocation0 [shape = 'u32[]', space=smem, size = 0x4, offset = 0x4, fixed_abs, tag = 'smem constant byte address 0x4 - core index']
  #allocation1 [shape = 'u32[144,128]{1,0:T(1,128)}', space=vmem, size = 0x12000, scoped, tag = 'internal scratch']
  #allocation2 [shape = 'f32[10,18,1]{2,1,0:T(8,128)}', space=vmem, size = 0x1e000, scoped, tag = 'scratch operand']
  #allocation3 [shape = 'f32[10,18,64]{2,1,0:T(8,128)}', space=vmem, size = 0x1e000, scoped, tag = 'scratch operand']
  #allocation4 [shape = 'f32[128,16]{1,0:T(8,128)}', space=vmem, size = 0x10000, scoped, tag = 'scratch operand']
  #allocation5 [shape = 'bf16[128,576]{1,0:T(16,128)(2,1)}', space=vmem, size = 0x28000, scoped, tag = 'scratch operand']
  #allocation6 [shape = 'bf16[8,1024]{1,0:T(8,128)(2,1)}', space=vmem, size = 0x4000, scoped, tag = 'scratch operand']
  %s0 = inlined_call_operand.vmem [shape: f32[2,8,16,1], index: 0, kind: input, shape index: {}]
  %s1 = inlined_call_operand.vmem [shape: f32[16,64], index: 1, kind: input, shape index: {}]
  %s2 = inlined_call_operand.vmem [shape: f32[1,64], index: 2, kind: input, shape index: {}]
  %s3 = inlined_call_operand.vmem [shape: bf16[576,64], index: 3, kind: input, shape index: {}]
  %s4 = inlined_call_operand.vmem [shape: f32[1,64], index: 4, kind: input, shape index: {}]
  %s5 = inlined_call_operand.hbm [shape: bf16[1024,512], index: 5, kind: input, shape index: {}]
  %s6 = inlined_call_operand.vmem [shape: f32[1,64], index: 6, kind: input, shape index: {}]
  %s7 = inlined_call_operand.vmem [shape: f32[64,64], index: 7, kind: input, shape index: {}]
  %s8 = inlined_call_operand.vmem [shape: f32[1,64], index: 8, kind: input, shape index: {}]
  %s9 = inlined_call_operand.vmem [shape: f32[64,128], index: 9, kind: input, shape index: {}]
  %s10 = inlined_call_operand.vmem [shape: f32[1,128], index: 10, kind: input, shape index: {}]
  %s11 = inlined_call_operand.vmem [shape: f32[2,1,128], index: 11, kind: output, shape index: {}]
  %s12 = sld [smem:[#allocation0]]
  $region81: #{cnn_forward.1} parent=0
    _
  %s14 = ssub.s32 1, %s12
  %s15 = scalar_select 0, %s14, %s12
  $region1: #{cnn_forward.1} parent=0
    #allocation7 [shape = 'u8[1048576]{0}', space=vmem, size = 0x100000, scoped, tag = 'input window, operand 5, single buffered']
    #allocation8 [shape = 's32[2]{0}', space=sflag, size = 0x8, scoped, tag = 'scoped memory for cnn_forward.1']
    %16 = vsyncpa [#allocation8], 0
    loop: start=0, step=1, limit=4
    $region2: #{cnn_forward.1} parent=1 // loop_pre_header
      _
    $region3: #{cnn_forward.1} parent=1 // loop_header
      %s18 = sphi 0, %s22
      %p19 = scmp.ge.s32.totalorder %s18, 4
      %s28 = sphi 0, %s30
      %s31 = sphi 0, %s28
      %s32 = sphi 0, %s31
      %s48 = sphi 0, %s32
      %s52 = sphi 0, %s52
      %s54 = sphi 0, %s52
      %s55 = sphi 0, %s54
      %s69 = sphi 0, %s55
      %s73 = sphi 0, %s73
      %s75 = sphi 0, %s73
      %s76 = sphi 0, %s75
      %s90 = sphi 0, %s76
      %s94 = sphi 0, %s94
      %s96 = sphi 0, %s94
      %s97 = sphi 0, %s96
      %s111 = sphi 0, %s97
      %s115 = sphi 0, %s115
      %s117 = sphi 0, %s115
      %s118 = sphi 0, %s117
      %s132 = sphi 0, %s118
      %s136 = sphi 0, %s136
      %s138 = sphi 0, %s136
      %s139 = sphi 0, %s138
      %s153 = sphi 0, %s139
      %s157 = sphi 0, %s157
      %s159 = sphi 0, %s157
      %s160 = sphi 0, %s159
      %s174 = sphi 0, %s160
      %s178 = sphi 0, %s178
      %s180 = sphi 0, %s178
      %s181 = sphi 0, %s180
      %s195 = sphi 0, %s181
      %s199 = sphi 0, %s199
      %s201 = sphi 0, %s199
      %s202 = sphi 0, %s201
      %s216 = sphi 0, %s202
      %s220 = sphi 0, %s220
      %s222 = sphi 0, %s220
      %s223 = sphi 0, %s222
      %s237 = sphi 0, %s223
      %s241 = sphi 0, %s241
      %s243 = sphi 0, %s241
      %s244 = sphi 0, %s243
      %s258 = sphi 0, %s244
      %s264 = sphi 0, %s266
      %s267 = sphi 0, %s264
      %s268 = sphi 0, %s267
      %s284 = sphi 0, %s268
    $region4: #{cnn_forward.1} parent=1 // loop_header_branch
      %21 = sbr.rel (%p19) target = $region8
    $region5: #{cnn_forward.1} parent=1 // loop_body
      %s23 = ssub.s32 %s18, 1
      %s24 = ssub.s32 %s18, 2
      %s25 = sadd.s32 %s18, 1
      %s26 = ssub.s32 %s18, %s25
      %p27 = scmp.eq.s32.totalorder %s26, 0
      %s29 = sadd.s32 %s28, 1
      %s30 = scalar_select %p27, %s28, %s29
      %p33 = pneg %p27
      %p34 = scmp.eq.s32.totalorder %s18, 1
      %p35 = por %p33, %p34
      %p36 = scmp.ne.s32.totalorder %s28, %s31
      %p37 = scmp.eq.s32.totalorder %s18, 0
      %p38 = por %p36, %p37
      %p39 = scmp.ne.s32.totalorder %s28, %s31
      %p40 = scmp.eq.s32.totalorder %s23, 1
      %p41 = por %p39, %p40
      %p42 = scmp.ne.s32.totalorder %s31, %s32
      %p43 = scmp.eq.s32.totalorder %s23, 0
      %p44 = por %p42, %p43
      %p45 = scmp.ne.s32.totalorder %s31, %s32
      %p46 = scmp.eq.s32.totalorder %s24, 1
      %p47 = por %p45, %p46
      %p49 = scmp.ne.s32.totalorder %s32, %s48
      %p50 = scmp.eq.s32.totalorder %s24, 0
      %p51 = por %p49, %p50
      %s53 = sadd.s32 %s52, 1
      %p56 = scmp.eq.s32.totalorder %s18, 1
      %p57 = scmp.ne.s32.totalorder %s52, %s54
      %p58 = scmp.eq.s32.totalorder %s18, 0
      %p59 = por %p57, %p58
      %p60 = scmp.ne.s32.totalorder %s52, %s54
      %p61 = scmp.eq.s32.totalorder %s23, 1
      %p62 = por %p60, %p61
      %p63 = scmp.ne.s32.totalorder %s54, %s55
      %p64 = scmp.eq.s32.totalorder %s23, 0
      %p65 = por %p63, %p64
      %p66 = scmp.ne.s32.totalorder %s54, %s55
      %p67 = scmp.eq.s32.totalorder %s24, 1
      %p68 = por %p66, %p67
      %p70 = scmp.ne.s32.totalorder %s55, %s69
      %p71 = scmp.eq.s32.totalorder %s24, 0
      %p72 = por %p70, %p71
      %s74 = sadd.s32 %s73, 1
      %p77 = scmp.eq.s32.totalorder %s18, 1
      %p78 = scmp.ne.s32.totalorder %s73, %s75
      %p79 = scmp.eq.s32.totalorder %s18, 0
      %p80 = por %p78, %p79
      %p81 = scmp.ne.s32.totalorder %s73, %s75
      %p82 = scmp.eq.s32.totalorder %s23, 1
      %p83 = por %p81, %p82
      %p84 = scmp.ne.s32.totalorder %s75, %s76
      %p85 = scmp.eq.s32.totalorder %s23, 0
      %p86 = por %p84, %p85
      %p87 = scmp.ne.s32.totalorder %s75, %s76
      %p88 = scmp.eq.s32.totalorder %s24, 1
      %p89 = por %p87, %p88
      %p91 = scmp.ne.s32.totalorder %s76, %s90
      %p92 = scmp.eq.s32.totalorder %s24, 0
      %p93 = por %p91, %p92
      %s95 = sadd.s32 %s94, 1
      %p98 = scmp.eq.s32.totalorder %s18, 1
      %p99 = scmp.ne.s32.totalorder %s94, %s96
      %p100 = scmp.eq.s32.totalorder %s18, 0
      %p101 = por %p99, %p100
      %p102 = scmp.ne.s32.totalorder %s94, %s96
      %p103 = scmp.eq.s32.totalorder %s23, 1
      %p104 = por %p102, %p103
      %p105 = scmp.ne.s32.totalorder %s96, %s97
      %p106 = scmp.eq.s32.totalorder %s23, 0
      %p107 = por %p105, %p106
      %p108 = scmp.ne.s32.totalorder %s96, %s97
      %p109 = scmp.eq.s32.totalorder %s24, 1
      %p110 = por %p108, %p109
      %p112 = scmp.ne.s32.totalorder %s97, %s111
      %p113 = scmp.eq.s32.totalorder %s24, 0
      %p114 = por %p112, %p113
      %s116 = sadd.s32 %s115, 1
      %p119 = scmp.eq.s32.totalorder %s18, 1
      %p120 = scmp.ne.s32.totalorder %s115, %s117
      %p121 = scmp.eq.s32.totalorder %s18, 0
      %p122 = por %p120, %p121
      %p123 = scmp.ne.s32.totalorder %s115, %s117
      %p124 = scmp.eq.s32.totalorder %s23, 1
      %p125 = por %p123, %p124
      %p126 = scmp.ne.s32.totalorder %s117, %s118
      %p127 = scmp.eq.s32.totalorder %s23, 0
      %p128 = por %p126, %p127
      %p129 = scmp.ne.s32.totalorder %s117, %s118
      %p130 = scmp.eq.s32.totalorder %s24, 1
      %p131 = por %p129, %p130
      %p133 = scmp.ne.s32.totalorder %s118, %s132
      %p134 = scmp.eq.s32.totalorder %s24, 0
      %p135 = por %p133, %p134
      %s137 = sadd.s32 %s136, 1
      %p140 = scmp.eq.s32.totalorder %s18, 1
      %p141 = scmp.ne.s32.totalorder %s136, %s138
      %p142 = scmp.eq.s32.totalorder %s18, 0
      %p143 = por %p141, %p142
      %p144 = scmp.ne.s32.totalorder %s136, %s138
      %p145 = scmp.eq.s32.totalorder %s23, 1
      %p146 = por %p144, %p145
      %p147 = scmp.ne.s32.totalorder %s138, %s139
      %p148 = scmp.eq.s32.totalorder %s23, 0
      %p149 = por %p147, %p148
      %p150 = scmp.ne.s32.totalorder %s138, %s139
      %p151 = scmp.eq.s32.totalorder %s24, 1
      %p152 = por %p150, %p151
      %p154 = scmp.ne.s32.totalorder %s139, %s153
      %p155 = scmp.eq.s32.totalorder %s24, 0
      %p156 = por %p154, %p155
      %s158 = sadd.s32 %s157, 1
      %p161 = scmp.eq.s32.totalorder %s18, 1
      %p162 = scmp.ne.s32.totalorder %s157, %s159
      %p163 = scmp.eq.s32.totalorder %s18, 0
      %p164 = por %p162, %p163
      %p165 = scmp.ne.s32.totalorder %s157, %s159
      %p166 = scmp.eq.s32.totalorder %s23, 1
      %p167 = por %p165, %p166
      %p168 = scmp.ne.s32.totalorder %s159, %s160
      %p169 = scmp.eq.s32.totalorder %s23, 0
      %p170 = por %p168, %p169
      %p171 = scmp.ne.s32.totalorder %s159, %s160
      %p172 = scmp.eq.s32.totalorder %s24, 1
      %p173 = por %p171, %p172
      %p175 = scmp.ne.s32.totalorder %s160, %s174
      %p176 = scmp.eq.s32.totalorder %s24, 0
      %p177 = por %p175, %p176
      %s179 = sadd.s32 %s178, 1
      %p182 = scmp.eq.s32.totalorder %s18, 1
      %p183 = scmp.ne.s32.totalorder %s178, %s180
      %p184 = scmp.eq.s32.totalorder %s18, 0
      %p185 = por %p183, %p184
      %p186 = scmp.ne.s32.totalorder %s178, %s180
      %p187 = scmp.eq.s32.totalorder %s23, 1
      %p188 = por %p186, %p187
      %p189 = scmp.ne.s32.totalorder %s180, %s181
      %p190 = scmp.eq.s32.totalorder %s23, 0
      %p191 = por %p189, %p190
      %p192 = scmp.ne.s32.totalorder %s180, %s181
      %p193 = scmp.eq.s32.totalorder %s24, 1
      %p194 = por %p192, %p193
      %p196 = scmp.ne.s32.totalorder %s181, %s195
      %p197 = scmp.eq.s32.totalorder %s24, 0
      %p198 = por %p196, %p197
      %s200 = sadd.s32 %s199, 1
      %p203 = scmp.eq.s32.totalorder %s18, 1
      %p204 = scmp.ne.s32.totalorder %s199, %s201
      %p205 = scmp.eq.s32.totalorder %s18, 0
      %p206 = por %p204, %p205
      %p207 = scmp.ne.s32.totalorder %s199, %s201
      %p208 = scmp.eq.s32.totalorder %s23, 1
      %p209 = por %p207, %p208
      %p210 = scmp.ne.s32.totalorder %s201, %s202
      %p211 = scmp.eq.s32.totalorder %s23, 0
      %p212 = por %p210, %p211
      %p213 = scmp.ne.s32.totalorder %s201, %s202
      %p214 = scmp.eq.s32.totalorder %s24, 1
      %p215 = por %p213, %p214
      %p217 = scmp.ne.s32.totalorder %s202, %s216
      %p218 = scmp.eq.s32.totalorder %s24, 0
      %p219 = por %p217, %p218
      %s221 = sadd.s32 %s220, 1
      %p224 = scmp.eq.s32.totalorder %s18, 1
      %p225 = scmp.ne.s32.totalorder %s220, %s222
      %p226 = scmp.eq.s32.totalorder %s18, 0
      %p227 = por %p225, %p226
      %p228 = scmp.ne.s32.totalorder %s220, %s222
      %p229 = scmp.eq.s32.totalorder %s23, 1
      %p230 = por %p228, %p229
      %p231 = scmp.ne.s32.totalorder %s222, %s223
      %p232 = scmp.eq.s32.totalorder %s23, 0
      %p233 = por %p231, %p232
      %p234 = scmp.ne.s32.totalorder %s222, %s223
      %p235 = scmp.eq.s32.totalorder %s24, 1
      %p236 = por %p234, %p235
      %p238 = scmp.ne.s32.totalorder %s223, %s237
      %p239 = scmp.eq.s32.totalorder %s24, 0
      %p240 = por %p238, %p239
      %s242 = sadd.s32 %s241, 1
      %p245 = scmp.eq.s32.totalorder %s18, 1
      %p246 = scmp.ne.s32.totalorder %s241, %s243
      %p247 = scmp.eq.s32.totalorder %s18, 0
      %p248 = por %p246, %p247
      %p249 = scmp.ne.s32.totalorder %s241, %s243
      %p250 = scmp.eq.s32.totalorder %s23, 1
      %p251 = por %p249, %p250
      %p252 = scmp.ne.s32.totalorder %s243, %s244
      %p253 = scmp.eq.s32.totalorder %s23, 0
      %p254 = por %p252, %p253
      %p255 = scmp.ne.s32.totalorder %s243, %s244
      %p256 = scmp.eq.s32.totalorder %s24, 1
      %p257 = por %p255, %p256
      %p259 = scmp.ne.s32.totalorder %s244, %s258
      %p260 = scmp.eq.s32.totalorder %s24, 0
      %p261 = por %p259, %p260
      %s262 = ssub.s32 %s18, %s25
      %p263 = scmp.eq.s32.totalorder %s262, 0
      %s265 = sadd.s32 %s264, 1
      %s266 = scalar_select %p263, %s264, %s265
      %p269 = pneg %p263
      %p270 = scmp.eq.s32.totalorder %s18, 1
      %p271 = por %p269, %p270
      %p272 = scmp.ne.s32.totalorder %s264, %s267
      %p273 = scmp.eq.s32.totalorder %s18, 0
      %p274 = por %p272, %p273
      %p275 = scmp.ne.s32.totalorder %s264, %s267
      %p276 = scmp.eq.s32.totalorder %s23, 1
      %p277 = por %p275, %p276
      %p278 = scmp.ne.s32.totalorder %s267, %s268
      %p279 = scmp.eq.s32.totalorder %s23, 0
      %p280 = por %p278, %p279
      %p281 = scmp.ne.s32.totalorder %s267, %s268
      %p282 = scmp.eq.s32.totalorder %s24, 1
      %p283 = por %p281, %p282
      %p285 = scmp.ne.s32.totalorder %s268, %s284
      %p286 = scmp.eq.s32.totalorder %s24, 0
      %p287 = por %p285, %p286
      %p288 = scmp.le.s32.totalorder 1, %s18
      %p289 = scmp.lt.s32.totalorder %s18, 3
      %p290 = pnand %p288, %p289
      %p291 = pneg %p290
      // Predicated region
      $region9: #{cnn_forward.1} parent=5 // pred_check
        _
      $region10: #{cnn_forward.1} parent=5 // pred_check_branch
        %293 = sbr.rel (%p290) target = $region12
      $region11: #{cnn_forward.1} parent=5 // pred_region
        %s294 = ssub.s32 %s18, 1
        // Predicated region
        $region13: #{cnn_forward.1} parent=11 // pred_check
          %p295 = pneg %p65
        $region14: #{cnn_forward.1} parent=11 // pred_check_branch
          %297 = sbr.rel (%p295) target = $region16
        $region15: #{cnn_forward.1} parent=11 // pred_region
          _
        $region16: #{cnn_forward.1} parent=11 // pred_fallthru
          _
        // Predicated region
        $region17: #{cnn_forward.1} parent=11 // pred_check
          %p298 = pneg %p86
        $region18: #{cnn_forward.1} parent=11 // pred_check_branch
          %300 = sbr.rel (%p298) target = $region20
        $region19: #{cnn_forward.1} parent=11 // pred_region
          _
        $region20: #{cnn_forward.1} parent=11 // pred_fallthru
          _
        // Predicated region
        $region21: #{cnn_forward.1} parent=11 // pred_check
          %p301 = pneg %p107
        $region22: #{cnn_forward.1} parent=11 // pred_check_branch
          %303 = sbr.rel (%p301) target = $region24
        $region23: #{cnn_forward.1} parent=11 // pred_region
          _
        $region24: #{cnn_forward.1} parent=11 // pred_fallthru
          _
        // Predicated region
        $region25: #{cnn_forward.1} parent=11 // pred_check
          %p304 = pneg %p128
        $region26: #{cnn_forward.1} parent=11 // pred_check_branch
          %306 = sbr.rel (%p304) target = $region28
        $region27: #{cnn_forward.1} parent=11 // pred_region
          _
        $region28: #{cnn_forward.1} parent=11 // pred_fallthru
          _
        // Predicated region
        $region29: #{cnn_forward.1} parent=11 // pred_check
          %p307 = pneg %p149
        $region30: #{cnn_forward.1} parent=11 // pred_check_branch
          %309 = sbr.rel (%p307) target = $region32
        $region31: #{cnn_forward.1} parent=11 // pred_region
          %s311 = ssub.s32 32768, 32768
          %312 = vsyncadd [#allocation8], %s311
          %s313 = sshll.u32 [#allocation7], 4
          %s314 = int_to_ptr.vmem [resolvable:$true] %s313
          %319 = dma.hbm_to_vmem [thread:$0]  %s5, 32768, %s314, [#allocation8], 256, 256, 16
        $region32: #{cnn_forward.1} parent=11 // pred_fallthru
          _
        // Predicated region
        $region33: #{cnn_forward.1} parent=11 // pred_check
          %p320 = pneg %p170
        $region34: #{cnn_forward.1} parent=11 // pred_check_branch
          %322 = sbr.rel (%p320) target = $region36
        $region35: #{cnn_forward.1} parent=11 // pred_region
          _
        $region36: #{cnn_forward.1} parent=11 // pred_fallthru
          _
        // Predicated region
        $region37: #{cnn_forward.1} parent=11 // pred_check
          %p323 = pneg %p191
        $region38: #{cnn_forward.1} parent=11 // pred_check_branch
          %325 = sbr.rel (%p323) target = $region40
        $region39: #{cnn_forward.1} parent=11 // pred_region
          _
        $region40: #{cnn_forward.1} parent=11 // pred_fallthru
          _
        // Predicated region
        $region41: #{cnn_forward.1} parent=11 // pred_check
          %p326 = pneg %p212
        $region42: #{cnn_forward.1} parent=11 // pred_check_branch
          %328 = sbr.rel (%p326) target = $region44
        $region43: #{cnn_forward.1} parent=11 // pred_region
          _
        $region44: #{cnn_forward.1} parent=11 // pred_fallthru
          _
        // Predicated region
        $region45: #{cnn_forward.1} parent=11 // pred_check
          %p329 = pneg %p233
        $region46: #{cnn_forward.1} parent=11 // pred_check_branch
          %331 = sbr.rel (%p329) target = $region48
        $region47: #{cnn_forward.1} parent=11 // pred_region
          _
        $region48: #{cnn_forward.1} parent=11 // pred_fallthru
          _
        // Predicated region
        $region49: #{cnn_forward.1} parent=11 // pred_check
          %p332 = pneg %p254
        $region50: #{cnn_forward.1} parent=11 // pred_check_branch
          %334 = sbr.rel (%p332) target = $region52
        $region51: #{cnn_forward.1} parent=11 // pred_region
          _
        $region52: #{cnn_forward.1} parent=11 // pred_fallthru
          _
      $region12: #{cnn_forward.1} parent=5 // pred_fallthru
        _
      %p335 = scmp.lt.s32.totalorder %s18, 2
      // Predicated region
      $region53: #{cnn_forward.1} parent=5 // pred_check
        %p336 = pneg %p335
      $region54: #{cnn_forward.1} parent=5 // pred_check_branch
        %338 = sbr.rel (%p336) target = $region56
      $region55: #{cnn_forward.1} parent=5 // pred_region
        // Predicated region
        $region57: #{cnn_forward.1} parent=55 // pred_check
          %p339 = pneg %p38
        $region58: #{cnn_forward.1} parent=55 // pred_check_branch
          %341 = sbr.rel (%p339) target = $region60
        $region59: #{cnn_forward.1} parent=55 // pred_region
          %p342 = scmp.lt.s32.totalorder %s18, 1
          %s343 = scalar_select %p342, %s18, 1
          %s344 = smul.addr %s343, 16
          %s345 = smul.addr %s344, 8
          %s346 = scalar_lea.vmem %s0, %s345
        $region60: #{cnn_forward.1} parent=55 // pred_fallthru
          _
      $region56: #{cnn_forward.1} parent=5 // pred_fallthru
        _
      %p347 = scmp.le.s32.totalorder 1, %s18
      %p348 = scmp.lt.s32.totalorder %s18, 3
      %p349 = pnand %p347, %p348
      %p350 = pneg %p349
      // Predicated region
      $region61: #{cnn_forward.1} parent=5 // pred_check
        _
      $region62: #{cnn_forward.1} parent=5 // pred_check_branch
        %352 = sbr.rel (%p349) target = $region64
      $region63: #{cnn_forward.1} parent=5 // pred_region
        %s353 = ssub.s32 %s18, 1
        // Predicated region
        $region65: #{cnn_forward.1} parent=63 // pred_check
          %p354 = pneg %p149
        $region66: #{cnn_forward.1} parent=63 // pred_check_branch
          %356 = sbr.rel (%p354) target = $region68
        $region67: #{cnn_forward.1} parent=63 // pred_region
          %357 = dma.done [#allocation8], 32768
        $region68: #{cnn_forward.1} parent=63 // pred_fallthru
          _
        %p358 = scmp.lt.s32.totalorder %s23, 1
        %s359 = scalar_select %p358, %s23, 1
        %s360 = smul.addr %s359, 16
        %s361 = smul.addr %s360, 8
        %s362 = scalar_lea.vmem %s0, %s361
        %p363 = pneg %p44
        %p364 = pneg %p41
        %p365 = pneg %p65
        %p366 = pneg %p62
        %p367 = pneg %p86
        %p368 = pneg %p83
        %p369 = pneg %p107
        %p370 = pneg %p104
        %p371 = pneg %p128
        %p372 = pneg %p125
        %p373 = pneg %p149
        %p374 = pneg %p146
        %p375 = pneg %p170
        %p376 = pneg %p167
        %p377 = pneg %p191
        %p378 = pneg %p188
        %p379 = pneg %p212
        %p380 = pneg %p209
        %p381 = pneg %p233
        %p382 = pneg %p230
        %p383 = pneg %p254
        %p384 = pneg %p251
        %p385 = pneg %p280
        %p386 = pneg %p277
        %p387 = scmp.lt.s32.totalorder %s23, 1
        %s388 = scalar_select %p387, %s23, 1
        %s389 = scalar_lea.vmem %s11, %s388
        %p390 = scmp.lt.s32.totalorder %s23, 1
        %s391 = scalar_select %p390, %s23, 1
        %s392 = smul.addr %s391, 16
        %s393 = smul.addr %s392, 8
        %s394 = scalar_lea.vmem %s0, %s393
        %p395 = scmp.lt.s32.totalorder %s23, 1
        %s396 = scalar_select %p395, %s23, 1
        %s397 = scalar_lea.vmem %s11, %s396
        %vm399 = vcmask 7168
        %400 = vst.msk [vmem:[#allocation2] sm:$0xff] %vm399, 0.0
        %401 = vst.msk [vmem:[#allocation2 + $0x8] sm:$0xff] %vm399, 0.0
        %vm402 = vcmask 1024
        %403 = vst.msk [vmem:[#allocation2 + $0x10] sm:$0x3] %vm402, 0.0
        %s404 = scalar_lea.vmem [#allocation2], 216
        %405 = vst.msk [vmem:[%s404] sm:$0xff] %vm399, 0.0
        %406 = vst.msk [vmem:[%s404 + $0x8] sm:$0xff] %vm399, 0.0
        %407 = vst.msk [vmem:[%s404 + $0x10] sm:$0x3] %vm402, 0.0
        %vm408 = vcmask 0
        %409 = vst.msk [vmem:[#allocation2] sm:$0x1] %vm408, 0.0
        %410 = vst.msk [vmem:[#allocation2 + $0x18] sm:$0x1] %vm408, 0.0
        %411 = vst.msk [vmem:[#allocation2 + $0x30] sm:$0x1] %vm408, 0.0
        %412 = vst.msk [vmem:[#allocation2 + $0x48] sm:$0x1] %vm408, 0.0
        %413 = vst.msk [vmem:[#allocation2 + $0x60] sm:$0x1] %vm408, 0.0
        %414 = vst.msk [vmem:[#allocation2 + $0x78] sm:$0x1] %vm408, 0.0
        %415 = vst.msk [vmem:[#allocation2 + $0x90] sm:$0x1] %vm408, 0.0
        %416 = vst.msk [vmem:[#allocation2 + $0xa8] sm:$0x1] %vm408, 0.0
        %417 = vst.msk [vmem:[#allocation2 + $0xc0] sm:$0x1] %vm408, 0.0
        %418 = vst.msk [vmem:[#allocation2 + $0xd8] sm:$0x1] %vm408, 0.0
        %419 = vst.msk [vmem:[#allocation2 + $0x11] sm:$0x1] %vm408, 0.0
        %420 = vst.msk [vmem:[#allocation2 + $0x29] sm:$0x1] %vm408, 0.0
        %421 = vst.msk [vmem:[#allocation2 + $0x41] sm:$0x1] %vm408, 0.0
        %422 = vst.msk [vmem:[#allocation2 + $0x59] sm:$0x1] %vm408, 0.0
        %423 = vst.msk [vmem:[#allocation2 + $0x71] sm:$0x1] %vm408, 0.0
        %424 = vst.msk [vmem:[#allocation2 + $0x89] sm:$0x1] %vm408, 0.0
        %425 = vst.msk [vmem:[#allocation2 + $0xa1] sm:$0x1] %vm408, 0.0
        %426 = vst.msk [vmem:[#allocation2 + $0xb9] sm:$0x1] %vm408, 0.0
        %427 = vst.msk [vmem:[#allocation2 + $0xd1] sm:$0x1] %vm408, 0.0
        %428 = vst.msk [vmem:[#allocation2 + $0xe9] sm:$0x1] %vm408, 0.0
        %vm429 = vcmask 523264
        %430 = vst.msk [vmem:[#allocation3] sm:$0xff] %vm429, 0.0
        %431 = vst.msk [vmem:[#allocation3 + $0x8] sm:$0xff] %vm429, 0.0
        %vm432 = vcmask 517120
        %433 = vst.msk [vmem:[#allocation3 + $0x10] sm:$0x3] %vm432, 0.0
        %s434 = scalar_lea.vmem [#allocation3], 216
        %435 = vst.msk [vmem:[%s434] sm:$0xff] %vm429, 0.0
        %436 = vst.msk [vmem:[%s434 + $0x8] sm:$0xff] %vm429, 0.0
        %437 = vst.msk [vmem:[%s434 + $0x10] sm:$0x3] %vm432, 0.0
        %vm438 = vcmask 516096
        %439 = vst.msk [vmem:[#allocation3] sm:$0x1] %vm438, 0.0
        %440 = vst.msk [vmem:[#allocation3 + $0x18] sm:$0x1] %vm438, 0.0
        %441 = vst.msk [vmem:[#allocation3 + $0x30] sm:$0x1] %vm438, 0.0
        %442 = vst.msk [vmem:[#allocation3 + $0x48] sm:$0x1] %vm438, 0.0
        %443 = vst.msk [vmem:[#allocation3 + $0x60] sm:$0x1] %vm438, 0.0
        %444 = vst.msk [vmem:[#allocation3 + $0x78] sm:$0x1] %vm438, 0.0
        %445 = vst.msk [vmem:[#allocation3 + $0x90] sm:$0x1] %vm438, 0.0
        %446 = vst.msk [vmem:[#allocation3 + $0xa8] sm:$0x1] %vm438, 0.0
        %447 = vst.msk [vmem:[#allocation3 + $0xc0] sm:$0x1] %vm438, 0.0
        %448 = vst.msk [vmem:[#allocation3 + $0xd8] sm:$0x1] %vm438, 0.0
        %449 = vst.msk [vmem:[#allocation3 + $0x11] sm:$0x1] %vm438, 0.0
        %450 = vst.msk [vmem:[#allocation3 + $0x29] sm:$0x1] %vm438, 0.0
        %451 = vst.msk [vmem:[#allocation3 + $0x41] sm:$0x1] %vm438, 0.0
        %452 = vst.msk [vmem:[#allocation3 + $0x59] sm:$0x1] %vm438, 0.0
        %453 = vst.msk [vmem:[#allocation3 + $0x71] sm:$0x1] %vm438, 0.0
        %454 = vst.msk [vmem:[#allocation3 + $0x89] sm:$0x1] %vm438, 0.0
        %455 = vst.msk [vmem:[#allocation3 + $0xa1] sm:$0x1] %vm438, 0.0
        %456 = vst.msk [vmem:[#allocation3 + $0xb9] sm:$0x1] %vm438, 0.0
        %457 = vst.msk [vmem:[#allocation3 + $0xd1] sm:$0x1] %vm438, 0.0
        %458 = vst.msk [vmem:[#allocation3 + $0xe9] sm:$0x1] %vm438, 0.0
        %vm459 = vcmask 130120
        %460 = vst.msk [vmem:[#allocation4] sm:$0xff] %vm459, 0.0
        %461 = vst.msk [vmem:[#allocation4 + $0x8] sm:$0xff] %vm459, 0.0
        %462 = vst.msk [vmem:[#allocation4 + $0x10] sm:$0xff] %vm459, 0.0
        %463 = vst.msk [vmem:[#allocation4 + $0x18] sm:$0xff] %vm459, 0.0
        %464 = vst.msk [vmem:[#allocation4 + $0x20] sm:$0xff] %vm459, 0.0
        %465 = vst.msk [vmem:[#allocation4 + $0x28] sm:$0xff] %vm459, 0.0
        %466 = vst.msk [vmem:[#allocation4 + $0x30] sm:$0xff] %vm459, 0.0
        %467 = vst.msk [vmem:[#allocation4 + $0x38] sm:$0xff] %vm459, 0.0
        %468 = vst.msk [vmem:[#allocation4 + $0x40] sm:$0xff] %vm459, 0.0
        %469 = vst.msk [vmem:[#allocation4 + $0x48] sm:$0xff] %vm459, 0.0
        %470 = vst.msk [vmem:[#allocation4 + $0x50] sm:$0xff] %vm459, 0.0
        %471 = vst.msk [vmem:[#allocation4 + $0x58] sm:$0xff] %vm459, 0.0
        %472 = vst.msk [vmem:[#allocation4 + $0x60] sm:$0xff] %vm459, 0.0
        %473 = vst.msk [vmem:[#allocation4 + $0x68] sm:$0xff] %vm459, 0.0
        %474 = vst.msk [vmem:[#allocation4 + $0x70] sm:$0xff] %vm459, 0.0
        %475 = vst.msk [vmem:[#allocation4 + $0x78] sm:$0xff] %vm459, 0.0
        %v476 = vld [vmem:[%s394] sm:$0xff]
        %v477 = vld [vmem:[%s394 + $0x8] sm:$0xff]
        %v478 = vld [vmem:[%s394 + $0x10] sm:$0xff]
        %v479 = vld [vmem:[%s394 + $0x18] sm:$0xff]
        %v480 = vld [vmem:[%s394 + $0x20] sm:$0xff]
        %v481 = vld [vmem:[%s394 + $0x28] sm:$0xff]
        %v482 = vld [vmem:[%s394 + $0x30] sm:$0xff]
        %v483 = vld [vmem:[%s394 + $0x38] sm:$0xff]
        %v484 = vld [vmem:[%s394 + $0x40] sm:$0xff]
        %v485 = vld [vmem:[%s394 + $0x48] sm:$0xff]
        %v486 = vld [vmem:[%s394 + $0x50] sm:$0xff]
        %v487 = vld [vmem:[%s394 + $0x58] sm:$0xff]
        %v488 = vld [vmem:[%s394 + $0x60] sm:$0xff]
        %v489 = vld [vmem:[%s394 + $0x68] sm:$0xff]
        %v490 = vld [vmem:[%s394 + $0x70] sm:$0xff]
        %v491 = vld [vmem:[%s394 + $0x78] sm:$0xff]
        %v492 = vmul.f32 %v476, %v476
        %v493 = vmul.f32 %v477, %v477
        %v494 = vmul.f32 %v478, %v478
        %v495 = vmul.f32 %v479, %v479
        %v496 = vmul.f32 %v480, %v480
        %v497 = vmul.f32 %v481, %v481
        %v498 = vmul.f32 %v482, %v482
        %v499 = vmul.f32 %v483, %v483
        %v500 = vmul.f32 %v484, %v484
        %v501 = vmul.f32 %v485, %v485
        %v502 = vmul.f32 %v486, %v486
        %v503 = vmul.f32 %v487, %v487
        %v504 = vmul.f32 %v488, %v488
        %v505 = vmul.f32 %v489, %v489
        %v506 = vmul.f32 %v490, %v490
        %v507 = vmul.f32 %v491, %v491
        %v508 = vsel %vm399, %v492, 0.0
        %v509 = vsel %vm399, %v494, 0.0
        %v510 = vadd.f32 %v508, %v509
        %v511 = vsel %vm399, %v496, 0.0
        %v512 = vadd.f32 %v510, %v511
        %v513 = vsel %vm399, %v498, 0.0
        %v514 = vadd.f32 %v512, %v513
        %v515 = vsel %vm399, %v500, 0.0
        %v516 = vadd.f32 %v514, %v515
        %v517 = vsel %vm399, %v502, 0.0
        %v518 = vadd.f32 %v516, %v517
        %v519 = vsel %vm399, %v504, 0.0
        %v520 = vadd.f32 %v518, %v519
        %v521 = vsel %vm399, %v506, 0.0
        %v522 = vadd.f32 %v520, %v521
        %v523 = vsel %vm399, %v493, 0.0
        %v524 = vsel %vm399, %v495, 0.0
        %v525 = vadd.f32 %v523, %v524
        %v526 = vsel %vm399, %v497, 0.0
        %v527 = vadd.f32 %v525, %v526
        %v528 = vsel %vm399, %v499, 0.0
        %v529 = vadd.f32 %v527, %v528
        %v530 = vsel %vm399, %v501, 0.0
        %v531 = vadd.f32 %v529, %v530
        %v532 = vsel %vm399, %v503, 0.0
        %v533 = vadd.f32 %v531, %v532
        %v534 = vsel %vm399, %v505, 0.0
        %v535 = vadd.f32 %v533, %v534
        %v536 = vsel %vm399, %v507, 0.0
        %v537 = vadd.f32 %v535, %v536
        %v538 = vrsqrt.pop %v522
        %v539 = vmul.f32 %v522, %v538
        %vm540 = vcmp.eq.f32.partialorder %v522, inf
        %v541 = vsel %vm540, %v522, %v539
        %vm542 = vcmp.eq.f32.partialorder %v522, 0.0
        %v543 = vand.u32 %v522, 2147483648
        %v544 = vsel %vm542, %v543, %v541
        %v545 = vrsqrt.pop %v537
        %v546 = vmul.f32 %v537, %v545
        %vm547 = vcmp.eq.f32.partialorder %v537, inf
        %v548 = vsel %vm547, %v537, %v546
        %vm549 = vcmp.eq.f32.partialorder %v537, 0.0
        %v550 = vand.u32 %v537, 2147483648
        %v551 = vsel %vm549, %v550, %v548
        %v552 = vmax.f32 %v544, 1e-12
        %v553 = vmax.f32 %v551, 1e-12
        %v554 = vrcp.pop %v552
        %v555 = vmul.f32 %v476, %v554
        %v556 = vrcp.pop %v553
        %v557 = vmul.f32 %v477, %v556
        %v558 = vmul.f32 %v478, %v554
        %v559 = vmul.f32 %v479, %v556
        %v560 = vmul.f32 %v480, %v554
        %v561 = vmul.f32 %v481, %v556
        %v562 = vmul.f32 %v482, %v554
        %v563 = vmul.f32 %v483, %v556
        %v564 = vmul.f32 %v484, %v554
        %v565 = vmul.f32 %v485, %v556
        %v566 = vmul.f32 %v486, %v554
        %v567 = vmul.f32 %v487, %v556
        %v568 = vmul.f32 %v488, %v554
        %v569 = vmul.f32 %v489, %v556
        %v570 = vmul.f32 %v490, %v554
        %v571 = vmul.f32 %v491, %v556
        %s572 = scalar_lea.vmem [#allocation2], 24
        %573 = vst.msk [vmem:[%s572 + $0x1] sm:$0xff] %vm399, %v555
        %574 = vst.msk [vmem:[%s572 + $0x9] sm:$0xff] %vm399, %v557
        %575 = vst.msk [vmem:[%s572 + $0x19] sm:$0xff] %vm399, %v558
        %576 = vst.msk [vmem:[%s572 + $0x21] sm:$0xff] %vm399, %v559
        %577 = vst.msk [vmem:[%s572 + $0x31] sm:$0xff] %vm399, %v560
        %578 = vst.msk [vmem:[%s572 + $0x39] sm:$0xff] %vm399, %v561
        %579 = vst.msk [vmem:[%s572 + $0x49] sm:$0xff] %vm399, %v562
        %580 = vst.msk [vmem:[%s572 + $0x51] sm:$0xff] %vm399, %v563
        %581 = vst.msk [vmem:[%s572 + $0x61] sm:$0xff] %vm399, %v564
        %582 = vst.msk [vmem:[%s572 + $0x69] sm:$0xff] %vm399, %v565
        %583 = vst.msk [vmem:[%s572 + $0x79] sm:$0xff] %vm399, %v566
        %584 = vst.msk [vmem:[%s572 + $0x81] sm:$0xff] %vm399, %v567
        %585 = vst.msk [vmem:[%s572 + $0x91] sm:$0xff] %vm399, %v568
        %586 = vst.msk [vmem:[%s572 + $0x99] sm:$0xff] %vm399, %v569
        %587 = vst.msk [vmem:[%s572 + $0xa9] sm:$0xff] %vm399, %v570
        %588 = vst.msk [vmem:[%s572 + $0xb1] sm:$0xff] %vm399, %v571
        %v589 = vld [vmem:[#allocation2] sm:$0xff]
        %v590 = vld [vmem:[#allocation2 + $0x8] sm:$0xff]
        %v591 = vld [vmem:[#allocation2 + $0x18] sm:$0xff]
        %v592 = vld [vmem:[#allocation2 + $0x20] sm:$0xff]
        %v593 = vld [vmem:[#allocation2 + $0x30] sm:$0xff]
        %v594 = vld [vmem:[#allocation2 + $0x38] sm:$0xff]
        %v595 = vld [vmem:[#allocation2 + $0x48] sm:$0xff]
        %v596 = vld [vmem:[#allocation2 + $0x50] sm:$0xff]
        %v597 = vld [vmem:[#allocation2 + $0x60] sm:$0xff]
        %v598 = vld [vmem:[#allocation2 + $0x68] sm:$0xff]
        %v599 = vld [vmem:[#allocation2 + $0x78] sm:$0xff]
        %v600 = vld [vmem:[#allocation2 + $0x80] sm:$0xff]
        %v601 = vld [vmem:[#allocation2 + $0x90] sm:$0xff]
        %v602 = vld [vmem:[#allocation2 + $0x98] sm:$0xff]
        %v603 = vld [vmem:[#allocation2 + $0xa8] sm:$0xff]
        %v604 = vld [vmem:[#allocation2 + $0xb0] sm:$0xff]
        %605 = vst.msk [vmem:[#allocation4] sm:$0xff] %vm399, %v589
        %606 = vst.msk [vmem:[#allocation4 + $0x8] sm:$0xff] %vm399, %v590
        %607 = vst.msk [vmem:[#allocation4 + $0x10] sm:$0xff] %vm399, %v591
        %608 = vst.msk [vmem:[#allocation4 + $0x18] sm:$0xff] %vm399, %v592
        %609 = vst.msk [vmem:[#allocation4 + $0x20] sm:$0xff] %vm399, %v593
        %610 = vst.msk [vmem:[#allocation4 + $0x28] sm:$0xff] %vm399, %v594
        %611 = vst.msk [vmem:[#allocation4 + $0x30] sm:$0xff] %vm399, %v595
        %612 = vst.msk [vmem:[#allocation4 + $0x38] sm:$0xff] %vm399, %v596
        %613 = vst.msk [vmem:[#allocation4 + $0x40] sm:$0xff] %vm399, %v597
        %614 = vst.msk [vmem:[#allocation4 + $0x48] sm:$0xff] %vm399, %v598
        %615 = vst.msk [vmem:[#allocation4 + $0x50] sm:$0xff] %vm399, %v599
        %616 = vst.msk [vmem:[#allocation4 + $0x58] sm:$0xff] %vm399, %v600
        %617 = vst.msk [vmem:[#allocation4 + $0x60] sm:$0xff] %vm399, %v601
        %618 = vst.msk [vmem:[#allocation4 + $0x68] sm:$0xff] %vm399, %v602
        %619 = vst.msk [vmem:[#allocation4 + $0x70] sm:$0xff] %vm399, %v603
        %620 = vst.msk [vmem:[#allocation4 + $0x78] sm:$0xff] %vm399, %v604
        %v621 = vld [vmem:[#allocation2 + $0x1] sm:$0xff]
        %v622 = vld [vmem:[#allocation2 + $0x9] sm:$0xff]
        %v623 = vld [vmem:[#allocation2 + $0x19] sm:$0xff]
        %v624 = vld [vmem:[#allocation2 + $0x21] sm:$0xff]
        %v625 = vld [vmem:[#allocation2 + $0x31] sm:$0xff]
        %v626 = vld [vmem:[#allocation2 + $0x39] sm:$0xff]
        %v627 = vld [vmem:[#allocation2 + $0x49] sm:$0xff]
        %v628 = vld [vmem:[#allocation2 + $0x51] sm:$0xff]
        %v629 = vld [vmem:[#allocation2 + $0x61] sm:$0xff]
        %v630 = vld [vmem:[#allocation2 + $0x69] sm:$0xff]
        %v631 = vld [vmem:[#allocation2 + $0x79] sm:$0xff]
        %v632 = vld [vmem:[#allocation2 + $0x81] sm:$0xff]
        %v633 = vld [vmem:[#allocation2 + $0x91] sm:$0xff]
        %v634 = vld [vmem:[#allocation2 + $0x99] sm:$0xff]
        %v635 = vld [vmem:[#allocation2 + $0xa9] sm:$0xff]
        %v636 = vld [vmem:[#allocation2 + $0xb1] sm:$0xff]
        %653 = vrot.lane.b32.xlu0 %v621, 1
        %v654 = vpop.permute.xlu0 %653
        %655 = vrot.lane.b32.xlu0 %v622, 1
        %v656 = vpop.permute.xlu0 %655
        %657 = vrot.lane.b32.xlu0 %v623, 1
        %v658 = vpop.permute.xlu0 %657
        %659 = vrot.lane.b32.xlu0 %v624, 1
        %v660 = vpop.permute.xlu0 %659
        %661 = vrot.lane.b32.xlu0 %v625, 1
        %v662 = vpop.permute.xlu0 %661
        %663 = vrot.lane.b32.xlu0 %v626, 1
        %v664 = vpop.permute.xlu0 %663
        %665 = vrot.lane.b32.xlu0 %v627, 1
        %v666 = vpop.permute.xlu0 %665
        %667 = vrot.lane.b32.xlu0 %v628, 1
        %v668 = vpop.permute.xlu0 %667
        %669 = vrot.lane.b32.xlu0 %v629, 1
        %v670 = vpop.permute.xlu0 %669
        %671 = vrot.lane.b32.xlu0 %v630, 1
        %v672 = vpop.permute.xlu0 %671
        %673 = vrot.lane.b32.xlu0 %v631, 1
        %v674 = vpop.permute.xlu0 %673
        %675 = vrot.lane.b32.xlu0 %v632, 1
        %v676 = vpop.permute.xlu0 %675
        %677 = vrot.lane.b32.xlu0 %v633, 1
        %v678 = vpop.permute.xlu0 %677
        %679 = vrot.lane.b32.xlu0 %v634, 1
        %v680 = vpop.permute.xlu0 %679
        %681 = vrot.lane.b32.xlu0 %v635, 1
        %v682 = vpop.permute.xlu0 %681
        %683 = vrot.lane.b32.xlu0 %v636, 1
        %v684 = vpop.permute.xlu0 %683
        %vm701 = vcmask 15368
        %702 = vst.msk [vmem:[#allocation4] sm:$0xff] %vm701, %v654
        %703 = vst.msk [vmem:[#allocation4 + $0x8] sm:$0xff] %vm701, %v656
        %704 = vst.msk [vmem:[#allocation4 + $0x10] sm:$0xff] %vm701, %v658
        %705 = vst.msk [vmem:[#allocation4 + $0x18] sm:$0xff] %vm701, %v660
        %706 = vst.msk [vmem:[#allocation4 + $0x20] sm:$0xff] %vm701, %v662
        %707 = vst.msk [vmem:[#allocation4 + $0x28] sm:$0xff] %vm701, %v664
        %708 = vst.msk [vmem:[#allocation4 + $0x30] sm:$0xff] %vm701, %v666
        %709 = vst.msk [vmem:[#allocation4 + $0x38] sm:$0xff] %vm701, %v668
        %710 = vst.msk [vmem:[#allocation4 + $0x40] sm:$0xff] %vm701, %v670
        %711 = vst.msk [vmem:[#allocation4 + $0x48] sm:$0xff] %vm701, %v672
        %712 = vst.msk [vmem:[#allocation4 + $0x50] sm:$0xff] %vm701, %v674
        %713 = vst.msk [vmem:[#allocation4 + $0x58] sm:$0xff] %vm701, %v676
        %714 = vst.msk [vmem:[#allocation4 + $0x60] sm:$0xff] %vm701, %v678
        %715 = vst.msk [vmem:[#allocation4 + $0x68] sm:$0xff] %vm701, %v680
        %716 = vst.msk [vmem:[#allocation4 + $0x70] sm:$0xff] %vm701, %v682
        %717 = vst.msk [vmem:[#allocation4 + $0x78] sm:$0xff] %vm701, %v684
        %v718 = vld [vmem:[#allocation2 + $0x2] sm:$0xff]
        %v719 = vld [vmem:[#allocation2 + $0xa] sm:$0xff]
        %v720 = vld [vmem:[#allocation2 + $0x1a] sm:$0xff]
        %v721 = vld [vmem:[#allocation2 + $0x22] sm:$0xff]
        %v722 = vld [vmem:[#allocation2 + $0x32] sm:$0xff]
        %v723 = vld [vmem:[#allocation2 + $0x3a] sm:$0xff]
        %v724 = vld [vmem:[#allocation2 + $0x4a] sm:$0xff]
        %v725 = vld [vmem:[#allocation2 + $0x52] sm:$0xff]
        %v726 = vld [vmem:[#allocation2 + $0x62] sm:$0xff]
        %v727 = vld [vmem:[#allocation2 + $0x6a] sm:$0xff]
        %v728 = vld [vmem:[#allocation2 + $0x7a] sm:$0xff]
        %v729 = vld [vmem:[#allocation2 + $0x82] sm:$0xff]
        %v730 = vld [vmem:[#allocation2 + $0x92] sm:$0xff]
        %v731 = vld [vmem:[#allocation2 + $0x9a] sm:$0xff]
        %v732 = vld [vmem:[#allocation2 + $0xaa] sm:$0xff]
        %v733 = vld [vmem:[#allocation2 + $0xb2] sm:$0xff]
        %750 = vrot.lane.b32.xlu0 %v718, 2
        %v751 = vpop.permute.xlu0 %750
        %752 = vrot.lane.b32.xlu0 %v719, 2
        %v753 = vpop.permute.xlu0 %752
        %754 = vrot.lane.b32.xlu0 %v720, 2
        %v755 = vpop.permute.xlu0 %754
        %756 = vrot.lane.b32.xlu0 %v721, 2
        %v757 = vpop.permute.xlu0 %756
        %758 = vrot.lane.b32.xlu0 %v722, 2
        %v759 = vpop.permute.xlu0 %758
        %760 = vrot.lane.b32.xlu0 %v723, 2
        %v761 = vpop.permute.xlu0 %760
        %762 = vrot.lane.b32.xlu0 %v724, 2
        %v763 = vpop.permute.xlu0 %762
        %764 = vrot.lane.b32.xlu0 %v725, 2
        %v765 = vpop.permute.xlu0 %764
        %766 = vrot.lane.b32.xlu0 %v726, 2
        %v767 = vpop.permute.xlu0 %766
        %768 = vrot.lane.b32.xlu0 %v727, 2
        %v769 = vpop.permute.xlu0 %768
        %770 = vrot.lane.b32.xlu0 %v728, 2
        %v771 = vpop.permute.xlu0 %770
        %772 = vrot.lane.b32.xlu0 %v729, 2
        %v773 = vpop.permute.xlu0 %772
        %774 = vrot.lane.b32.xlu0 %v730, 2
        %v775 = vpop.permute.xlu0 %774
        %776 = vrot.lane.b32.xlu0 %v731, 2
        %v777 = vpop.permute.xlu0 %776
        %778 = vrot.lane.b32.xlu0 %v732, 2
        %v779 = vpop.permute.xlu0 %778
        %780 = vrot.lane.b32.xlu0 %v733, 2
        %v781 = vpop.permute.xlu0 %780
        %vm798 = vcmask 23568
        %799 = vst.msk [vmem:[#allocation4] sm:$0xff] %vm798, %v751
        %800 = vst.msk [vmem:[#allocation4 + $0x8] sm:$0xff] %vm798, %v753
        %801 = vst.msk [vmem:[#allocation4 + $0x10] sm:$0xff] %vm798, %v755
        %802 = vst.msk [vmem:[#allocation4 + $0x18] sm:$0xff] %vm798, %v757
        %803 = vst.msk [vmem:[#allocation4 + $0x20] sm:$0xff] %vm798, %v759
        %804 = vst.msk [vmem:[#allocation4 + $0x28] sm:$0xff] %vm798, %v761
        %805 = vst.msk [vmem:[#allocation4 + $0x30] sm:$0xff] %vm798, %v763
        %806 = vst.msk [vmem:[#allocation4 + $0x38] sm:$0xff] %vm798, %v765
        %807 = vst.msk [vmem:[#allocation4 + $0x40] sm:$0xff] %vm798, %v767
        %808 = vst.msk [vmem:[#allocation4 + $0x48] sm:$0xff] %vm798, %v769
        %809 = vst.msk [vmem:[#allocation4 + $0x50] sm:$0xff] %vm798, %v771
        %810 = vst.msk [vmem:[#allocation4 + $0x58] sm:$0xff] %vm798, %v773
        %811 = vst.msk [vmem:[#allocation4 + $0x60] sm:$0xff] %vm798, %v775
        %812 = vst.msk [vmem:[#allocation4 + $0x68] sm:$0xff] %vm798, %v777
        %813 = vst.msk [vmem:[#allocation4 + $0x70] sm:$0xff] %vm798, %v779
        %814 = vst.msk [vmem:[#allocation4 + $0x78] sm:$0xff] %vm798, %v781
        %v815 = vld [vmem:[%s572] sm:$0xff]
        %v816 = vld [vmem:[%s572 + $0x8] sm:$0xff]
        %v817 = vld [vmem:[%s572 + $0x18] sm:$0xff]
        %v818 = vld [vmem:[%s572 + $0x20] sm:$0xff]
        %v819 = vld [vmem:[%s572 + $0x30] sm:$0xff]
        %v820 = vld [vmem:[%s572 + $0x38] sm:$0xff]
        %v821 = vld [vmem:[%s572 + $0x48] sm:$0xff]
        %v822 = vld [vmem:[%s572 + $0x50] sm:$0xff]
        %v823 = vld [vmem:[%s572 + $0x60] sm:$0xff]
        %v824 = vld [vmem:[%s572 + $0x68] sm:$0xff]
        %v825 = vld [vmem:[%s572 + $0x78] sm:$0xff]
        %v826 = vld [vmem:[%s572 + $0x80] sm:$0xff]
        %v827 = vld [vmem:[%s572 + $0x90] sm:$0xff]
        %v828 = vld [vmem:[%s572 + $0x98] sm:$0xff]
        %v829 = vld [vmem:[%s572 + $0xa8] sm:$0xff]
        %v830 = vld [vmem:[%s572 + $0xb0] sm:$0xff]
        %847 = vrot.lane.b32.xlu0 %v815, 3
        %v848 = vpop.permute.xlu0 %847
        %849 = vrot.lane.b32.xlu0 %v816, 3
        %v850 = vpop.permute.xlu0 %849
        %851 = vrot.lane.b32.xlu0 %v817, 3
        %v852 = vpop.permute.xlu0 %851
        %853 = vrot.lane.b32.xlu0 %v818, 3
        %v854 = vpop.permute.xlu0 %853
        %855 = vrot.lane.b32.xlu0 %v819, 3
        %v856 = vpop.permute.xlu0 %855
        %857 = vrot.lane.b32.xlu0 %v820, 3
        %v858 = vpop.permute.xlu0 %857
        %859 = vrot.lane.b32.xlu0 %v821, 3
        %v860 = vpop.permute.xlu0 %859
        %861 = vrot.lane.b32.xlu0 %v822, 3
        %v862 = vpop.permute.xlu0 %861
        %863 = vrot.lane.b32.xlu0 %v823, 3
        %v864 = vpop.permute.xlu0 %863
        %865 = vrot.lane.b32.xlu0 %v824, 3
        %v866 = vpop.permute.xlu0 %865
        %867 = vrot.lane.b32.xlu0 %v825, 3
        %v868 = vpop.permute.xlu0 %867
        %869 = vrot.lane.b32.xlu0 %v826, 3
        %v870 = vpop.permute.xlu0 %869
        %871 = vrot.lane.b32.xlu0 %v827, 3
        %v872 = vpop.permute.xlu0 %871
        %873 = vrot.lane.b32.xlu0 %v828, 3
        %v874 = vpop.permute.xlu0 %873
        %875 = vrot.lane.b32.xlu0 %v829, 3
        %v876 = vpop.permute.xlu0 %875
        %877 = vrot.lane.b32.xlu0 %v830, 3
        %v878 = vpop.permute.xlu0 %877
        %vm895 = vcmask 31768
        %896 = vst.msk [vmem:[#allocation4] sm:$0xff] %vm895, %v848
        %897 = vst.msk [vmem:[#allocation4 + $0x8] sm:$0xff] %vm895, %v850
        %898 = vst.msk [vmem:[#allocation4 + $0x10] sm:$0xff] %vm895, %v852
        %899 = vst.msk [vmem:[#allocation4 + $0x18] sm:$0xff] %vm895, %v854
        %900 = vst.msk [vmem:[#allocation4 + $0x20] sm:$0xff] %vm895, %v856
        %901 = vst.msk [vmem:[#allocation4 + $0x28] sm:$0xff] %vm895, %v858
        %902 = vst.msk [vmem:[#allocation4 + $0x30] sm:$0xff] %vm895, %v860
        %903 = vst.msk [vmem:[#allocation4 + $0x38] sm:$0xff] %vm895, %v862
        %904 = vst.msk [vmem:[#allocation4 + $0x40] sm:$0xff] %vm895, %v864
        %905 = vst.msk [vmem:[#allocation4 + $0x48] sm:$0xff] %vm895, %v866
        %906 = vst.msk [vmem:[#allocation4 + $0x50] sm:$0xff] %vm895, %v868
        %907 = vst.msk [vmem:[#allocation4 + $0x58] sm:$0xff] %vm895, %v870
        %908 = vst.msk [vmem:[#allocation4 + $0x60] sm:$0xff] %vm895, %v872
        %909 = vst.msk [vmem:[#allocation4 + $0x68] sm:$0xff] %vm895, %v874
        %910 = vst.msk [vmem:[#allocation4 + $0x70] sm:$0xff] %vm895, %v876
        %911 = vst.msk [vmem:[#allocation4 + $0x78] sm:$0xff] %vm895, %v878
        %v912 = vld [vmem:[%s572 + $0x1] sm:$0xff]
        %v913 = vld [vmem:[%s572 + $0x9] sm:$0xff]
        %v914 = vld [vmem:[%s572 + $0x19] sm:$0xff]
        %v915 = vld [vmem:[%s572 + $0x21] sm:$0xff]
        %v916 = vld [vmem:[%s572 + $0x31] sm:$0xff]
        %v917 = vld [vmem:[%s572 + $0x39] sm:$0xff]
        %v918 = vld [vmem:[%s572 + $0x49] sm:$0xff]
        %v919 = vld [vmem:[%s572 + $0x51] sm:$0xff]
        %v920 = vld [vmem:[%s572 + $0x61] sm:$0xff]
        %v921 = vld [vmem:[%s572 + $0x69] sm:$0xff]
        %v922 = vld [vmem:[%s572 + $0x79] sm:$0xff]
        %v923 = vld [vmem:[%s572 + $0x81] sm:$0xff]
        %v924 = vld [vmem:[%s572 + $0x91] sm:$0xff]
        %v925 = vld [vmem:[%s572 + $0x99] sm:$0xff]
        %v926 = vld [vmem:[%s572 + $0xa9] sm:$0xff]
        %v927 = vld [vmem:[%s572 + $0xb1] sm:$0xff]
        %944 = vrot.lane.b32.xlu0 %v912, 4
        %v945 = vpop.permute.xlu0 %944
        %946 = vrot.lane.b32.xlu0 %v913, 4
        %v947 = vpop.permute.xlu0 %946
        %948 = vrot.lane.b32.xlu0 %v914, 4
        %v949 = vpop.permute.xlu0 %948
        %950 = vrot.lane.b32.xlu0 %v915, 4
        %v951 = vpop.permute.xlu0 %950
        %952 = vrot.lane.b32.xlu0 %v916, 4
        %v953 = vpop.permute.xlu0 %952
        %954 = vrot.lane.b32.xlu0 %v917, 4
        %v955 = vpop.permute.xlu0 %954
        %956 = vrot.lane.b32.xlu0 %v918, 4
        %v957 = vpop.permute.xlu0 %956
        %958 = vrot.lane.b32.xlu0 %v919, 4
        %v959 = vpop.permute.xlu0 %958
        %960 = vrot.lane.b32.xlu0 %v920, 4
        %v961 = vpop.permute.xlu0 %960
        %962 = vrot.lane.b32.xlu0 %v921, 4
        %v963 = vpop.permute.xlu0 %962
        %964 = vrot.lane.b32.xlu0 %v922, 4
        %v965 = vpop.permute.xlu0 %964
        %966 = vrot.lane.b32.xlu0 %v923, 4
        %v967 = vpop.permute.xlu0 %966
        %968 = vrot.lane.b32.xlu0 %v924, 4
        %v969 = vpop.permute.xlu0 %968
        %970 = vrot.lane.b32.xlu0 %v925, 4
        %v971 = vpop.permute.xlu0 %970
        %972 = vrot.lane.b32.xlu0 %v926, 4
        %v973 = vpop.permute.xlu0 %972
        %974 = vrot.lane.b32.xlu0 %v927, 4
        %v975 = vpop.permute.xlu0 %974
        %vm992 = vcmask 39968
        %993 = vst.msk [vmem:[#allocation4] sm:$0xff] %vm992, %v945
        %994 = vst.msk [vmem:[#allocation4 + $0x8] sm:$0xff] %vm992, %v947
        %995 = vst.msk [vmem:[#allocation4 + $0x10] sm:$0xff] %vm992, %v949
        %996 = vst.msk [vmem:[#allocation4 + $0x18] sm:$0xff] %vm992, %v951
        %997 = vst.msk [vmem:[#allocation4 + $0x20] sm:$0xff] %vm992, %v953
        %998 = vst.msk [vmem:[#allocation4 + $0x28] sm:$0xff] %vm992, %v955
        %999 = vst.msk [vmem:[#allocation4 + $0x30] sm:$0xff] %vm992, %v957
        %1000 = vst.msk [vmem:[#allocation4 + $0x38] sm:$0xff] %vm992, %v959
        %1001 = vst.msk [vmem:[#allocation4 + $0x40] sm:$0xff] %vm992, %v961
        %1002 = vst.msk [vmem:[#allocation4 + $0x48] sm:$0xff] %vm992, %v963
        %1003 = vst.msk [vmem:[#allocation4 + $0x50] sm:$0xff] %vm992, %v965
        %1004 = vst.msk [vmem:[#allocation4 + $0x58] sm:$0xff] %vm992, %v967
        %1005 = vst.msk [vmem:[#allocation4 + $0x60] sm:$0xff] %vm992, %v969
        %1006 = vst.msk [vmem:[#allocation4 + $0x68] sm:$0xff] %vm992, %v971
        %1007 = vst.msk [vmem:[#allocation4 + $0x70] sm:$0xff] %vm992, %v973
        %1008 = vst.msk [vmem:[#allocation4 + $0x78] sm:$0xff] %vm992, %v975
        %v1009 = vld [vmem:[%s572 + $0x2] sm:$0xff]
        %v1010 = vld [vmem:[%s572 + $0xa] sm:$0xff]
        %v1011 = vld [vmem:[%s572 + $0x1a] sm:$0xff]
        %v1012 = vld [vmem:[%s572 + $0x22] sm:$0xff]
        %v1013 = vld [vmem:[%s572 + $0x32] sm:$0xff]
        %v1014 = vld [vmem:[%s572 + $0x3a] sm:$0xff]
        %v1015 = vld [vmem:[%s572 + $0x4a] sm:$0xff]
        %v1016 = vld [vmem:[%s572 + $0x52] sm:$0xff]
        %v1017 = vld [vmem:[%s572 + $0x62] sm:$0xff]
        %v1018 = vld [vmem:[%s572 + $0x6a] sm:$0xff]
        %v1019 = vld [vmem:[%s572 + $0x7a] sm:$0xff]
        %v1020 = vld [vmem:[%s572 + $0x82] sm:$0xff]
        %v1021 = vld [vmem:[%s572 + $0x92] sm:$0xff]
        %v1022 = vld [vmem:[%s572 + $0x9a] sm:$0xff]
        %v1023 = vld [vmem:[%s572 + $0xaa] sm:$0xff]
        %v1024 = vld [vmem:[%s572 + $0xb2] sm:$0xff]
        %1041 = vrot.lane.b32.xlu0 %v1009, 5
        %v1042 = vpop.permute.xlu0 %1041
        %1043 = vrot.lane.b32.xlu0 %v1010, 5
        %v1044 = vpop.permute.xlu0 %1043
        %1045 = vrot.lane.b32.xlu0 %v1011, 5
        %v1046 = vpop.permute.xlu0 %1045
        %1047 = vrot.lane.b32.xlu0 %v1012, 5
        %v1048 = vpop.permute.xlu0 %1047
        %1049 = vrot.lane.b32.xlu0 %v1013, 5
        %v1050 = vpop.permute.xlu0 %1049
        %1051 = vrot.lane.b32.xlu0 %v1014, 5
        %v1052 = vpop.permute.xlu0 %1051
        %1053 = vrot.lane.b32.xlu0 %v1015, 5
        %v1054 = vpop.permute.xlu0 %1053
        %1055 = vrot.lane.b32.xlu0 %v1016, 5
        %v1056 = vpop.permute.xlu0 %1055
        %1057 = vrot.lane.b32.xlu0 %v1017, 5
        %v1058 = vpop.permute.xlu0 %1057
        %1059 = vrot.lane.b32.xlu0 %v1018, 5
        %v1060 = vpop.permute.xlu0 %1059
        %1061 = vrot.lane.b32.xlu0 %v1019, 5
        %v1062 = vpop.permute.xlu0 %1061
        %1063 = vrot.lane.b32.xlu0 %v1020, 5
        %v1064 = vpop.permute.xlu0 %1063
        %1065 = vrot.lane.b32.xlu0 %v1021, 5
        %v1066 = vpop.permute.xlu0 %1065
        %1067 = vrot.lane.b32.xlu0 %v1022, 5
        %v1068 = vpop.permute.xlu0 %1067
        %1069 = vrot.lane.b32.xlu0 %v1023, 5
        %v1070 = vpop.permute.xlu0 %1069
        %1071 = vrot.lane.b32.xlu0 %v1024, 5
        %v1072 = vpop.permute.xlu0 %1071
        %vm1089 = vcmask 48168
        %1090 = vst.msk [vmem:[#allocation4] sm:$0xff] %vm1089, %v1042
        %1091 = vst.msk [vmem:[#allocation4 + $0x8] sm:$0xff] %vm1089, %v1044
        %1092 = vst.msk [vmem:[#allocation4 + $0x10] sm:$0xff] %vm1089, %v1046
        %1093 = vst.msk [vmem:[#allocation4 + $0x18] sm:$0xff] %vm1089, %v1048
        %1094 = vst.msk [vmem:[#allocation4 + $0x20] sm:$0xff] %vm1089, %v1050
        %1095 = vst.msk [vmem:[#allocation4 + $0x28] sm:$0xff] %vm1089, %v1052
        %1096 = vst.msk [vmem:[#allocation4 + $0x30] sm:$0xff] %vm1089, %v1054
        %1097 = vst.msk [vmem:[#allocation4 + $0x38] sm:$0xff] %vm1089, %v1056
        %1098 = vst.msk [vmem:[#allocation4 + $0x40] sm:$0xff] %vm1089, %v1058
        %1099 = vst.msk [vmem:[#allocation4 + $0x48] sm:$0xff] %vm1089, %v1060
        %1100 = vst.msk [vmem:[#allocation4 + $0x50] sm:$0xff] %vm1089, %v1062
        %1101 = vst.msk [vmem:[#allocation4 + $0x58] sm:$0xff] %vm1089, %v1064
        %1102 = vst.msk [vmem:[#allocation4 + $0x60] sm:$0xff] %vm1089, %v1066
        %1103 = vst.msk [vmem:[#allocation4 + $0x68] sm:$0xff] %vm1089, %v1068
        %1104 = vst.msk [vmem:[#allocation4 + $0x70] sm:$0xff] %vm1089, %v1070
        %1105 = vst.msk [vmem:[#allocation4 + $0x78] sm:$0xff] %vm1089, %v1072
        %s1106 = scalar_lea.vmem [#allocation2], 48
        %v1107 = vld [vmem:[%s1106] sm:$0xff]
        %v1108 = vld [vmem:[%s1106 + $0x8] sm:$0xff]
        %v1109 = vld [vmem:[%s1106 + $0x18] sm:$0xff]
        %v1110 = vld [vmem:[%s1106 + $0x20] sm:$0xff]
        %v1111 = vld [vmem:[%s1106 + $0x30] sm:$0xff]
        %v1112 = vld [vmem:[%s1106 + $0x38] sm:$0xff]
        %v1113 = vld [vmem:[%s1106 + $0x48] sm:$0xff]
        %v1114 = vld [vmem:[%s1106 + $0x50] sm:$0xff]
        %v1115 = vld [vmem:[%s1106 + $0x60] sm:$0xff]
        %v1116 = vld [vmem:[%s1106 + $0x68] sm:$0xff]
        %v1117 = vld [vmem:[%s1106 + $0x78] sm:$0xff]
        %v1118 = vld [vmem:[%s1106 + $0x80] sm:$0xff]
        %v1119 = vld [vmem:[%s1106 + $0x90] sm:$0xff]
        %v1120 = vld [vmem:[%s1106 + $0x98] sm:$0xff]
        %v1121 = vld [vmem:[%s1106 + $0xa8] sm:$0xff]
        %v1122 = vld [vmem:[%s1106 + $0xb0] sm:$0xff]
        %1139 = vrot.lane.b32.xlu0 %v1107, 6
        %v1140 = vpop.permute.xlu0 %1139
        %1141 = vrot.lane.b32.xlu0 %v1108, 6
        %v1142 = vpop.permute.xlu0 %1141
        %1143 = vrot.lane.b32.xlu0 %v1109, 6
        %v1144 = vpop.permute.xlu0 %1143
        %1145 = vrot.lane.b32.xlu0 %v1110, 6
        %v1146 = vpop.permute.xlu0 %1145
        %1147 = vrot.lane.b32.xlu0 %v1111, 6
        %v1148 = vpop.permute.xlu0 %1147
        %1149 = vrot.lane.b32.xlu0 %v1112, 6
        %v1150 = vpop.permute.xlu0 %1149
        %1151 = vrot.lane.b32.xlu0 %v1113, 6
        %v1152 = vpop.permute.xlu0 %1151
        %1153 = vrot.lane.b32.xlu0 %v1114, 6
        %v1154 = vpop.permute.xlu0 %1153
        %1155 = vrot.lane.b32.xlu0 %v1115, 6
        %v1156 = vpop.permute.xlu0 %1155
        %1157 = vrot.lane.b32.xlu0 %v1116, 6
        %v1158 = vpop.permute.xlu0 %1157
        %1159 = vrot.lane.b32.xlu0 %v1117, 6
        %v1160 = vpop.permute.xlu0 %1159
        %1161 = vrot.lane.b32.xlu0 %v1118, 6
        %v1162 = vpop.permute.xlu0 %1161
        %1163 = vrot.lane.b32.xlu0 %v1119, 6
        %v1164 = vpop.permute.xlu0 %1163
        %1165 = vrot.lane.b32.xlu0 %v1120, 6
        %v1166 = vpop.permute.xlu0 %1165
        %1167 = vrot.lane.b32.xlu0 %v1121, 6
        %v1168 = vpop.permute.xlu0 %1167
        %1169 = vrot.lane.b32.xlu0 %v1122, 6
        %v1170 = vpop.permute.xlu0 %1169
        %vm1187 = vcmask 56368
        %1188 = vst.msk [vmem:[#allocation4] sm:$0xff] %vm1187, %v1140
        %1189 = vst.msk [vmem:[#allocation4 + $0x8] sm:$0xff] %vm1187, %v1142
        %1190 = vst.msk [vmem:[#allocation4 + $0x10] sm:$0xff] %vm1187, %v1144
        %1191 = vst.msk [vmem:[#allocation4 + $0x18] sm:$0xff] %vm1187, %v1146
        %1192 = vst.msk [vmem:[#allocation4 + $0x20] sm:$0xff] %vm1187, %v1148
        %1193 = vst.msk [vmem:[#allocation4 + $0x28] sm:$0xff] %vm1187, %v1150
        %1194 = vst.msk [vmem:[#allocation4 + $0x30] sm:$0xff] %vm1187, %v1152
        %1195 = vst.msk [vmem:[#allocation4 + $0x38] sm:$0xff] %vm1187, %v1154
        %1196 = vst.msk [vmem:[#allocation4 + $0x40] sm:$0xff] %vm1187, %v1156
        %1197 = vst.msk [vmem:[#allocation4 + $0x48] sm:$0xff] %vm1187, %v1158
        %1198 = vst.msk [vmem:[#allocation4 + $0x50] sm:$0xff] %vm1187, %v1160
        %1199 = vst.msk [vmem:[#allocation4 + $0x58] sm:$0xff] %vm1187, %v1162
        %1200 = vst.msk [vmem:[#allocation4 + $0x60] sm:$0xff] %vm1187, %v1164
        %1201 = vst.msk [vmem:[#allocation4 + $0x68] sm:$0xff] %vm1187, %v1166
        %1202 = vst.msk [vmem:[#allocation4 + $0x70] sm:$0xff] %vm1187, %v1168
        %1203 = vst.msk [vmem:[#allocation4 + $0x78] sm:$0xff] %vm1187, %v1170
        %v1204 = vld [vmem:[%s1106 + $0x1] sm:$0xff]
        %v1205 = vld [vmem:[%s1106 + $0x9] sm:$0xff]
        %v1206 = vld [vmem:[%s1106 + $0x19] sm:$0xff]
        %v1207 = vld [vmem:[%s1106 + $0x21] sm:$0xff]
        %v1208 = vld [vmem:[%s1106 + $0x31] sm:$0xff]
        %v1209 = vld [vmem:[%s1106 + $0x39] sm:$0xff]
        %v1210 = vld [vmem:[%s1106 + $0x49] sm:$0xff]
        %v1211 = vld [vmem:[%s1106 + $0x51] sm:$0xff]
        %v1212 = vld [vmem:[%s1106 + $0x61] sm:$0xff]
        %v1213 = vld [vmem:[%s1106 + $0x69] sm:$0xff]
        %v1214 = vld [vmem:[%s1106 + $0x79] sm:$0xff]
        %v1215 = vld [vmem:[%s1106 + $0x81] sm:$0xff]
        %v1216 = vld [vmem:[%s1106 + $0x91] sm:$0xff]
        %v1217 = vld [vmem:[%s1106 + $0x99] sm:$0xff]
        %v1218 = vld [vmem:[%s1106 + $0xa9] sm:$0xff]
        %v1219 = vld [vmem:[%s1106 + $0xb1] sm:$0xff]
        %1236 = vrot.lane.b32.xlu0 %v1204, 7
        %v1237 = vpop.permute.xlu0 %1236
        %1238 = vrot.lane.b32.xlu0 %v1205, 7
        %v1239 = vpop.permute.xlu0 %1238
        %1240 = vrot.lane.b32.xlu0 %v1206, 7
        %v1241 = vpop.permute.xlu0 %1240
        %1242 = vrot.lane.b32.xlu0 %v1207, 7
        %v1243 = vpop.permute.xlu0 %1242
        %1244 = vrot.lane.b32.xlu0 %v1208, 7
        %v1245 = vpop.permute.xlu0 %1244
        %1246 = vrot.lane.b32.xlu0 %v1209, 7
        %v1247 = vpop.permute.xlu0 %1246
        %1248 = vrot.lane.b32.xlu0 %v1210, 7
        %v1249 = vpop.permute.xlu0 %1248
        %1250 = vrot.lane.b32.xlu0 %v1211, 7
        %v1251 = vpop.permute.xlu0 %1250
        %1252 = vrot.lane.b32.xlu0 %v1212, 7
        %v1253 = vpop.permute.xlu0 %1252
        %1254 = vrot.lane.b32.xlu0 %v1213, 7
        %v1255 = vpop.permute.xlu0 %1254
        %1256 = vrot.lane.b32.xlu0 %v1214, 7
        %v1257 = vpop.permute.xlu0 %1256
        %1258 = vrot.lane.b32.xlu0 %v1215, 7
        %v1259 = vpop.permute.xlu0 %1258
        %1260 = vrot.lane.b32.xlu0 %v1216, 7
        %v1261 = vpop.permute.xlu0 %1260
        %1262 = vrot.lane.b32.xlu0 %v1217, 7
        %v1263 = vpop.permute.xlu0 %1262
        %1264 = vrot.lane.b32.xlu0 %v1218, 7
        %v1265 = vpop.permute.xlu0 %1264
        %1266 = vrot.lane.b32.xlu0 %v1219, 7
        %v1267 = vpop.permute.xlu0 %1266
        %vm1284 = vcmask 64568
        %1285 = vst.msk [vmem:[#allocation4] sm:$0xff] %vm1284, %v1237
        %1286 = vst.msk [vmem:[#allocation4 + $0x8] sm:$0xff] %vm1284, %v1239
        %1287 = vst.msk [vmem:[#allocation4 + $0x10] sm:$0xff] %vm1284, %v1241
        %1288 = vst.msk [vmem:[#allocation4 + $0x18] sm:$0xff] %vm1284, %v1243
        %1289 = vst.msk [vmem:[#allocation4 + $0x20] sm:$0xff] %vm1284, %v1245
        %1290 = vst.msk [vmem:[#allocation4 + $0x28] sm:$0xff] %vm1284, %v1247
        %1291 = vst.msk [vmem:[#allocation4 + $0x30] sm:$0xff] %vm1284, %v1249
        %1292 = vst.msk [vmem:[#allocation4 + $0x38] sm:$0xff] %vm1284, %v1251
        %1293 = vst.msk [vmem:[#allocation4 + $0x40] sm:$0xff] %vm1284, %v1253
        %1294 = vst.msk [vmem:[#allocation4 + $0x48] sm:$0xff] %vm1284, %v1255
        %1295 = vst.msk [vmem:[#allocation4 + $0x50] sm:$0xff] %vm1284, %v1257
        %1296 = vst.msk [vmem:[#allocation4 + $0x58] sm:$0xff] %vm1284, %v1259
        %1297 = vst.msk [vmem:[#allocation4 + $0x60] sm:$0xff] %vm1284, %v1261
        %1298 = vst.msk [vmem:[#allocation4 + $0x68] sm:$0xff] %vm1284, %v1263
        %1299 = vst.msk [vmem:[#allocation4 + $0x70] sm:$0xff] %vm1284, %v1265
        %1300 = vst.msk [vmem:[#allocation4 + $0x78] sm:$0xff] %vm1284, %v1267
        %v1301 = vld [vmem:[%s1106 + $0x2] sm:$0xff]
        %v1302 = vld [vmem:[%s1106 + $0xa] sm:$0xff]
        %v1303 = vld [vmem:[%s1106 + $0x1a] sm:$0xff]
        %v1304 = vld [vmem:[%s1106 + $0x22] sm:$0xff]
        %v1305 = vld [vmem:[%s1106 + $0x32] sm:$0xff]
        %v1306 = vld [vmem:[%s1106 + $0x3a] sm:$0xff]
        %v1307 = vld [vmem:[%s1106 + $0x4a] sm:$0xff]
        %v1308 = vld [vmem:[%s1106 + $0x52] sm:$0xff]
        %v1309 = vld [vmem:[%s1106 + $0x62] sm:$0xff]
        %v1310 = vld [vmem:[%s1106 + $0x6a] sm:$0xff]
        %v1311 = vld [vmem:[%s1106 + $0x7a] sm:$0xff]
        %v1312 = vld [vmem:[%s1106 + $0x82] sm:$0xff]
        %v1313 = vld [vmem:[%s1106 + $0x92] sm:$0xff]
        %v1314 = vld [vmem:[%s1106 + $0x9a] sm:$0xff]
        %v1315 = vld [vmem:[%s1106 + $0xaa] sm:$0xff]
        %v1316 = vld [vmem:[%s1106 + $0xb2] sm:$0xff]
        %1333 = vrot.lane.b32.xlu0 %v1301, 8
        %v1334 = vpop.permute.xlu0 %1333
        %1335 = vrot.lane.b32.xlu0 %v1302, 8
        %v1336 = vpop.permute.xlu0 %1335
        %1337 = vrot.lane.b32.xlu0 %v1303, 8
        %v1338 = vpop.permute.xlu0 %1337
        %1339 = vrot.lane.b32.xlu0 %v1304, 8
        %v1340 = vpop.permute.xlu0 %1339
        %1341 = vrot.lane.b32.xlu0 %v1305, 8
        %v1342 = vpop.permute.xlu0 %1341
        %1343 = vrot.lane.b32.xlu0 %v1306, 8
        %v1344 = vpop.permute.xlu0 %1343
        %1345 = vrot.lane.b32.xlu0 %v1307, 8
        %v1346 = vpop.permute.xlu0 %1345
        %1347 = vrot.lane.b32.xlu0 %v1308, 8
        %v1348 = vpop.permute.xlu0 %1347
        %1349 = vrot.lane.b32.xlu0 %v1309, 8
        %v1350 = vpop.permute.xlu0 %1349
        %1351 = vrot.lane.b32.xlu0 %v1310, 8
        %v1352 = vpop.permute.xlu0 %1351
        %1353 = vrot.lane.b32.xlu0 %v1311, 8
        %v1354 = vpop.permute.xlu0 %1353
        %1355 = vrot.lane.b32.xlu0 %v1312, 8
        %v1356 = vpop.permute.xlu0 %1355
        %1357 = vrot.lane.b32.xlu0 %v1313, 8
        %v1358 = vpop.permute.xlu0 %1357
        %1359 = vrot.lane.b32.xlu0 %v1314, 8
        %v1360 = vpop.permute.xlu0 %1359
        %1361 = vrot.lane.b32.xlu0 %v1315, 8
        %v1362 = vpop.permute.xlu0 %1361
        %1363 = vrot.lane.b32.xlu0 %v1316, 8
        %v1364 = vpop.permute.xlu0 %1363
        %vm1381 = vcmask 72768
        %1382 = vst.msk [vmem:[#allocation4] sm:$0xff] %vm1381, %v1334
        %1383 = vst.msk [vmem:[#allocation4 + $0x8] sm:$0xff] %vm1381, %v1336
        %1384 = vst.msk [vmem:[#allocation4 + $0x10] sm:$0xff] %vm1381, %v1338
        %1385 = vst.msk [vmem:[#allocation4 + $0x18] sm:$0xff] %vm1381, %v1340
        %1386 = vst.msk [vmem:[#allocation4 + $0x20] sm:$0xff] %vm1381, %v1342
        %1387 = vst.msk [vmem:[#allocation4 + $0x28] sm:$0xff] %vm1381, %v1344
        %1388 = vst.msk [vmem:[#allocation4 + $0x30] sm:$0xff] %vm1381, %v1346
        %1389 = vst.msk [vmem:[#allocation4 + $0x38] sm:$0xff] %vm1381, %v1348
        %1390 = vst.msk [vmem:[#allocation4 + $0x40] sm:$0xff] %vm1381, %v1350
        %1391 = vst.msk [vmem:[#allocation4 + $0x48] sm:$0xff] %vm1381, %v1352
        %1392 = vst.msk [vmem:[#allocation4 + $0x50] sm:$0xff] %vm1381, %v1354
        %1393 = vst.msk [vmem:[#allocation4 + $0x58] sm:$0xff] %vm1381, %v1356
        %1394 = vst.msk [vmem:[#allocation4 + $0x60] sm:$0xff] %vm1381, %v1358
        %1395 = vst.msk [vmem:[#allocation4 + $0x68] sm:$0xff] %vm1381, %v1360
        %1396 = vst.msk [vmem:[#allocation4 + $0x70] sm:$0xff] %vm1381, %v1362
        %1397 = vst.msk [vmem:[#allocation4 + $0x78] sm:$0xff] %vm1381, %v1364
        %v1398 = vld [vmem:[#allocation4] sm:$0xff]
        %v1399 = vld [vmem:[#allocation4 + $0x8] sm:$0xff]
        %v1400 = vld [vmem:[#allocation4 + $0x10] sm:$0xff]
        %v1401 = vld [vmem:[#allocation4 + $0x18] sm:$0xff]
        %v1402 = vld [vmem:[#allocation4 + $0x20] sm:$0xff]
        %v1403 = vld [vmem:[#allocation4 + $0x28] sm:$0xff]
        %v1404 = vld [vmem:[#allocation4 + $0x30] sm:$0xff]
        %v1405 = vld [vmem:[#allocation4 + $0x38] sm:$0xff]
        %v1406 = vld [vmem:[#allocation4 + $0x40] sm:$0xff]
        %v1407 = vld [vmem:[#allocation4 + $0x48] sm:$0xff]
        %v1408 = vld [vmem:[#allocation4 + $0x50] sm:$0xff]
        %v1409 = vld [vmem:[#allocation4 + $0x58] sm:$0xff]
        %v1410 = vld [vmem:[#allocation4 + $0x60] sm:$0xff]
        %v1411 = vld [vmem:[#allocation4 + $0x68] sm:$0xff]
        %v1412 = vld [vmem:[#allocation4 + $0x70] sm:$0xff]
        %v1413 = vld [vmem:[#allocation4 + $0x78] sm:$0xff]
        %v1414 = vld [vmem:[%s1] sm:$0xff]
        %v1415 = vld [vmem:[%s1 + $0x8] sm:$0xff]
        %v1416 = vld [vmem:[%s2] sm:$0x1]
        %v1418 = vlaneseq
        %v1419 = vshrl.u32 %v1418, 7
        %v1420 = vsub.s32 0, %v1419
        %v1421 = vrot.slane %v1416, %v1420
        %vm1423 = vcmask 130048
        %v1425 = vsel %vm1423, %v1398, 0
        %v1428 = vsel %vm1423, %v1399, 0
        %v1431 = vsel %vm1423, %v1400, 0
        %v1434 = vsel %vm1423, %v1401, 0
        %v1437 = vsel %vm1423, %v1402, 0
        %v1440 = vsel %vm1423, %v1403, 0
        %v1443 = vsel %vm1423, %v1404, 0
        %v1446 = vsel %vm1423, %v1405, 0
        %v1449 = vsel %vm1423, %v1406, 0
        %v1452 = vsel %vm1423, %v1407, 0
        %v1455 = vsel %vm1423, %v1408, 0
        %v1458 = vsel %vm1423, %v1409, 0
        %v1461 = vsel %vm1423, %v1410, 0
        %v1464 = vsel %vm1423, %v1411, 0
        %v1467 = vsel %vm1423, %v1412, 0
        %v1470 = vsel %vm1423, %v1413, 0
        %1472 = vmatprep.subr.mxu0 0.0
        %1473 = vmatpush1.msra.mxu0 %v1414
        %1474 = vmatprep.subr.mxu0 0.0
        %1475 = vmatpush1.msra.mxu0 %v1415
        %1476 = vmatprep.subr.mxu0 0.0
        %1477 = vmatpush1.msra.mxu0 0.0
        %1478 = vmatprep.subr.mxu0 0.0
        %1479 = vmatpush1.msra.mxu0 0.0
        %1480 = vmatprep.subr.mxu0 0.0
        %1481 = vmatpush1.msra.mxu0 0.0
        %1482 = vmatprep.subr.mxu0 0.0
        %1483 = vmatpush1.msra.mxu0 0.0
        %1484 = vmatprep.subr.mxu0 0.0
        %1485 = vmatpush1.msra.mxu0 0.0
        %1486 = vmatprep.subr.mxu0 0.0
        %1487 = vmatpush1.msra.mxu0 0.0
        %1488 = vmatprep.subr.mxu0 0.0
        %1489 = vmatpush1.msra.mxu0 0.0
        %1490 = vmatprep.subr.mxu0 0.0
        %1491 = vmatpush1.msra.mxu0 0.0
        %1492 = vmatprep.subr.mxu0 0.0
        %1493 = vmatpush1.msra.mxu0 0.0
        %1494 = vmatprep.subr.mxu0 0.0
        %1495 = vmatpush1.msra.mxu0 0.0
        %1496 = vmatprep.subr.mxu0 0.0
        %1497 = vmatpush1.msra.mxu0 0.0
        %1498 = vmatprep.subr.mxu0 0.0
        %1499 = vmatpush1.msra.mxu0 0.0
        %1500 = vmatprep.subr.mxu0 0.0
        %1501 = vmatpush1.msra.mxu0 0.0
        %1502 = vmatprep.subr.mxu0 0.0
        %1503 = vmatpush1.msra.mxu0 0.0
        %1504 = vmatprep.subr.mxu0 0.0
        %1505 = vmatpush1.msra.mxu0 0.0
        %1506 = vmatprep.subr.mxu0 0.0
        %1507 = vmatpush1.msra.mxu0 0.0
        %1508 = vmatprep.subr.mxu0 0.0
        %1509 = vmatpush1.msra.mxu0 0.0
        %1510 = vmatprep.subr.mxu0 0.0
        %1511 = vmatpush1.msra.mxu0 0.0
        %1512 = vmatprep.subr.mxu0 0.0
        %1513 = vmatpush1.msra.mxu0 0.0
        %1514 = vmatprep.subr.mxu0 0.0
        %1515 = vmatpush1.msra.mxu0 0.0
        %1516 = vmatprep.subr.mxu0 0.0
        %1517 = vmatpush1.msra.mxu0 0.0
        %1518 = vmatprep.subr.mxu0 0.0
        %1519 = vmatpush1.msra.mxu0 0.0
        %1520 = vmatprep.subr.mxu0 0.0
        %1521 = vmatpush1.msra.mxu0 0.0
        %1522 = vmatprep.subr.mxu0 0.0
        %1523 = vmatpush1.msra.mxu0 0.0
        %1524 = vmatprep.subr.mxu0 0.0
        %1525 = vmatpush1.msra.mxu0 0.0
        %1526 = vmatprep.subr.mxu0 0.0
        %1527 = vmatpush1.msra.mxu0 0.0
        %1528 = vmatprep.subr.mxu0 0.0
        %1529 = vmatpush1.msra.mxu0 0.0
        %1530 = vmatprep.subr.mxu0 0.0
        %1531 = vmatpush1.msra.mxu0 0.0
        %1532 = vmatprep.subr.mxu0 0.0
        %1533 = vmatpush1.msra.mxu0 0.0
        %1534 = vmatprep.subr.mxu0 0.0
        %1535 = vmatpush1.msra.mxu0 0.0
        %1536 = vmatprep.mubr.f32.mxu0 0.0
        %1537 = vmatmul.mubr.f32.gmra.mrb[0].mxu0 %v1425
        %v1538 = vpop.f32.mrb[0].mxu0
        %v1539 = vadd.f32 %v1421, %v1538
        %v1540 = vpop.f32.mrb[0].mxu0
        %1541 = vmatprep.mubr.f32.mxu0 0.0
        %1542 = vmatmul.mubr.f32.gmra.mrb[0].mxu0 %v1428
        %v1543 = vpop.f32.mrb[0].mxu0
        %v1544 = vadd.f32 %v1421, %v1543
        %v1545 = vpop.f32.mrb[0].mxu0
        %1546 = vmatprep.mubr.f32.mxu0 0.0
        %1547 = vmatmul.mubr.f32.gmra.mrb[0].mxu0 %v1431
        %v1548 = vpop.f32.mrb[0].mxu0
        %v1549 = vadd.f32 %v1421, %v1548
        %v1550 = vpop.f32.mrb[0].mxu0
        %1551 = vmatprep.mubr.f32.mxu0 0.0
        %1552 = vmatmul.mubr.f32.gmra.mrb[0].mxu0 %v1434
        %v1553 = vpop.f32.mrb[0].mxu0
        %v1554 = vadd.f32 %v1421, %v1553
        %v1555 = vpop.f32.mrb[0].mxu0
        %1556 = vmatprep.mubr.f32.mxu0 0.0
        %1557 = vmatmul.mubr.f32.gmra.mrb[0].mxu0 %v1437
        %v1558 = vpop.f32.mrb[0].mxu0
        %v1559 = vadd.f32 %v1421, %v1558
        %v1560 = vpop.f32.mrb[0].mxu0
        %1561 = vmatprep.mubr.f32.mxu0 0.0
        %1562 = vmatmul.mubr.f32.gmra.mrb[0].mxu0 %v1440
        %v1563 = vpop.f32.mrb[0].mxu0
        %v1564 = vadd.f32 %v1421, %v1563
        %v1565 = vpop.f32.mrb[0].mxu0
        %1566 = vmatprep.mubr.f32.mxu0 0.0
        %1567 = vmatmul.mubr.f32.gmra.mrb[0].mxu0 %v1443
        %v1568 = vpop.f32.mrb[0].mxu0
        %v1569 = vadd.f32 %v1421, %v1568
        %v1570 = vpop.f32.mrb[0].mxu0
        %1571 = vmatprep.mubr.f32.mxu0 0.0
        %1572 = vmatmul.mubr.f32.gmra.mrb[0].mxu0 %v1446
        %v1573 = vpop.f32.mrb[0].mxu0
        %v1574 = vadd.f32 %v1421, %v1573
        %v1575 = vpop.f32.mrb[0].mxu0
        %1576 = vmatprep.mubr.f32.mxu0 0.0
        %1577 = vmatmul.mubr.f32.gmra.mrb[0].mxu0 %v1449
        %v1578 = vpop.f32.mrb[0].mxu0
        %v1579 = vadd.f32 %v1421, %v1578
        %v1580 = vpop.f32.mrb[0].mxu0
        %1581 = vmatprep.mubr.f32.mxu0 0.0
        %1582 = vmatmul.mubr.f32.gmra.mrb[0].mxu0 %v1452
        %v1583 = vpop.f32.mrb[0].mxu0
        %v1584 = vadd.f32 %v1421, %v1583
        %v1585 = vpop.f32.mrb[0].mxu0
        %1586 = vmatprep.mubr.f32.mxu0 0.0
        %1587 = vmatmul.mubr.f32.gmra.mrb[0].mxu0 %v1455
        %v1588 = vpop.f32.mrb[0].mxu0
        %v1589 = vadd.f32 %v1421, %v1588
        %v1590 = vpop.f32.mrb[0].mxu0
        %1591 = vmatprep.mubr.f32.mxu0 0.0
        %1592 = vmatmul.mubr.f32.gmra.mrb[0].mxu0 %v1458
        %v1593 = vpop.f32.mrb[0].mxu0
        %v1594 = vadd.f32 %v1421, %v1593
        %v1595 = vpop.f32.mrb[0].mxu0
        %1596 = vmatprep.mubr.f32.mxu0 0.0
        %1597 = vmatmul.mubr.f32.gmra.mrb[0].mxu0 %v1461
        %v1598 = vpop.f32.mrb[0].mxu0
        %v1599 = vadd.f32 %v1421, %v1598
        %v1600 = vpop.f32.mrb[0].mxu0
        %1601 = vmatprep.mubr.f32.mxu0 0.0
        %1602 = vmatmul.mubr.f32.gmra.mrb[0].mxu0 %v1464
        %v1603 = vpop.f32.mrb[0].mxu0
        %v1604 = vadd.f32 %v1421, %v1603
        %v1605 = vpop.f32.mrb[0].mxu0
        %1606 = vmatprep.mubr.f32.mxu0 0.0
        %1607 = vmatmul.mubr.f32.gmra.mrb[0].mxu0 %v1467
        %v1608 = vpop.f32.mrb[0].mxu0
        %v1609 = vadd.f32 %v1421, %v1608
        %v1610 = vpop.f32.mrb[0].mxu0
        %1611 = vmatprep.mubr.f32.mxu0 0.0
        %1612 = vmatmul.mubr.f32.gmra.mrb[0].mxu0 %v1470
        %v1613 = vpop.f32.mrb[0].mxu0
        %v1614 = vadd.f32 %v1421, %v1613
        %v1615 = vpop.f32.mrb[0].mxu0
        %1616 = vdwg.mxu0
        %v1617 = vmax.f32 %v1539, 0.0
        %v1618 = vmax.f32 %v1544, 0.0
        %v1619 = vmax.f32 %v1549, 0.0
        %v1620 = vmax.f32 %v1554, 0.0
        %v1621 = vmax.f32 %v1559, 0.0
        %v1622 = vmax.f32 %v1564, 0.0
        %v1623 = vmax.f32 %v1569, 0.0
        %v1624 = vmax.f32 %v1574, 0.0
        %v1625 = vmax.f32 %v1579, 0.0
        %v1626 = vmax.f32 %v1584, 0.0
        %v1627 = vmax.f32 %v1589, 0.0
        %v1628 = vmax.f32 %v1594, 0.0
        %v1629 = vmax.f32 %v1599, 0.0
        %v1630 = vmax.f32 %v1604, 0.0
        %v1631 = vmax.f32 %v1609, 0.0
        %v1632 = vmax.f32 %v1614, 0.0
        %s1633 = scalar_lea.vmem [#allocation3], 24
        %1634 = vst.msk [vmem:[%s1633 + $0x1] sm:$0xff] %vm429, %v1617
        %1635 = vst.msk [vmem:[%s1633 + $0x9] sm:$0xff] %vm429, %v1618
        %1636 = vst.msk [vmem:[%s1633 + $0x19] sm:$0xff] %vm429, %v1619
        %1637 = vst.msk [vmem:[%s1633 + $0x21] sm:$0xff] %vm429, %v1620
        %1638 = vst.msk [vmem:[%s1633 + $0x31] sm:$0xff] %vm429, %v1621
        %1639 = vst.msk [vmem:[%s1633 + $0x39] sm:$0xff] %vm429, %v1622
        %1640 = vst.msk [vmem:[%s1633 + $0x49] sm:$0xff] %vm429, %v1623
        %1641 = vst.msk [vmem:[%s1633 + $0x51] sm:$0xff] %vm429, %v1624
        %1642 = vst.msk [vmem:[%s1633 + $0x61] sm:$0xff] %vm429, %v1625
        %1643 = vst.msk [vmem:[%s1633 + $0x69] sm:$0xff] %vm429, %v1626
        %1644 = vst.msk [vmem:[%s1633 + $0x79] sm:$0xff] %vm429, %v1627
        %1645 = vst.msk [vmem:[%s1633 + $0x81] sm:$0xff] %vm429, %v1628
        %1646 = vst.msk [vmem:[%s1633 + $0x91] sm:$0xff] %vm429, %v1629
        %1647 = vst.msk [vmem:[%s1633 + $0x99] sm:$0xff] %vm429, %v1630
        %1648 = vst.msk [vmem:[%s1633 + $0xa9] sm:$0xff] %vm429, %v1631
        %1649 = vst.msk [vmem:[%s1633 + $0xb1] sm:$0xff] %vm429, %v1632
        %v1650 = vld [vmem:[#allocation3] sm:$0xff]
        %v1651 = vld [vmem:[#allocation3 + $0x8] sm:$0xff]
        %v1652 = vld [vmem:[#allocation3 + $0x18] sm:$0xff]
        %v1653 = vld [vmem:[#allocation3 + $0x20] sm:$0xff]
        %v1654 = vld [vmem:[#allocation3 + $0x30] sm:$0xff]
        %v1655 = vld [vmem:[#allocation3 + $0x38] sm:$0xff]
        %v1656 = vld [vmem:[#allocation3 + $0x48] sm:$0xff]
        %v1657 = vld [vmem:[#allocation3 + $0x50] sm:$0xff]
        %v1658 = vld [vmem:[#allocation3 + $0x60] sm:$0xff]
        %v1659 = vld [vmem:[#allocation3 + $0x68] sm:$0xff]
        %v1660 = vld [vmem:[#allocation3 + $0x78] sm:$0xff]
        %v1661 = vld [vmem:[#allocation3 + $0x80] sm:$0xff]
        %v1662 = vld [vmem:[#allocation3 + $0x90] sm:$0xff]
        %v1663 = vld [vmem:[#allocation3 + $0x98] sm:$0xff]
        %v1664 = vld [vmem:[#allocation3 + $0xa8] sm:$0xff]
        %v1665 = vld [vmem:[#allocation3 + $0xb0] sm:$0xff]
        %v1666 = vld [vmem:[#allocation3 + $0xc0] sm:$0xff]
        %v1667 = vld [vmem:[#allocation3 + $0xc8] sm:$0xff]
        %v1668 = vld [vmem:[#allocation3 + $0xd8] sm:$0xff]
        %v1669 = vld [vmem:[#allocation3 + $0xe0] sm:$0xff]
        %v1670 = vld [vmem:[#allocation3 + $0x1] sm:$0xff]
        %v1671 = vld [vmem:[#allocation3 + $0x9] sm:$0xff]
        %v1672 = vld [vmem:[#allocation3 + $0x19] sm:$0xff]
        %v1673 = vld [vmem:[#allocation3 + $0x21] sm:$0xff]
        %v1674 = vld [vmem:[#allocation3 + $0x31] sm:$0xff]
        %v1675 = vld [vmem:[#allocation3 + $0x39] sm:$0xff]
        %v1676 = vld [vmem:[#allocation3 + $0x49] sm:$0xff]
        %v1677 = vld [vmem:[#allocation3 + $0x51] sm:$0xff]
        %v1678 = vld [vmem:[#allocation3 + $0x61] sm:$0xff]
        %v1679 = vld [vmem:[#allocation3 + $0x69] sm:$0xff]
        %v1680 = vld [vmem:[#allocation3 + $0x79] sm:$0xff]
        %v1681 = vld [vmem:[#allocation3 + $0x81] sm:$0xff]
        %v1682 = vld [vmem:[#allocation3 + $0x91] sm:$0xff]
        %v1683 = vld [vmem:[#allocation3 + $0x99] sm:$0xff]
        %v1684 = vld [vmem:[#allocation3 + $0xa9] sm:$0xff]
        %v1685 = vld [vmem:[#allocation3 + $0xb1] sm:$0xff]
        %v1686 = vld [vmem:[#allocation3 + $0xc1] sm:$0xff]
        %v1687 = vld [vmem:[#allocation3 + $0xc9] sm:$0xff]
        %v1688 = vld [vmem:[#allocation3 + $0xd9] sm:$0xff]
        %v1689 = vld [vmem:[#allocation3 + $0xe1] sm:$0xff]
        %v1690 = vmax.f32 %v1650, %v1670
        %v1691 = vmax.f32 %v1651, %v1671
        %v1692 = vmax.f32 %v1652, %v1672
        %v1693 = vmax.f32 %v1653, %v1673
        %v1694 = vmax.f32 %v1654, %v1674
        %v1695 = vmax.f32 %v1655, %v1675
        %v1696 = vmax.f32 %v1656, %v1676
        %v1697 = vmax.f32 %v1657, %v1677
        %v1698 = vmax.f32 %v1658, %v1678
        %v1699 = vmax.f32 %v1659, %v1679
        %v1700 = vmax.f32 %v1660, %v1680
        %v1701 = vmax.f32 %v1661, %v1681
        %v1702 = vmax.f32 %v1662, %v1682
        %v1703 = vmax.f32 %v1663, %v1683
        %v1704 = vmax.f32 %v1664, %v1684
        %v1705 = vmax.f32 %v1665, %v1685
        %v1706 = vmax.f32 %v1666, %v1686
        %v1707 = vmax.f32 %v1667, %v1687
        %v1708 = vmax.f32 %v1668, %v1688
        %v1709 = vmax.f32 %v1669, %v1689
        %v1710 = vld [vmem:[#allocation3 + $0x2] sm:$0xff]
        %v1711 = vld [vmem:[#allocation3 + $0xa] sm:$0xff]
        %v1712 = vld [vmem:[#allocation3 + $0x1a] sm:$0xff]
        %v1713 = vld [vmem:[#allocation3 + $0x22] sm:$0xff]
        %v1714 = vld [vmem:[#allocation3 + $0x32] sm:$0xff]
        %v1715 = vld [vmem:[#allocation3 + $0x3a] sm:$0xff]
        %v1716 = vld [vmem:[#allocation3 + $0x4a] sm:$0xff]
        %v1717 = vld [vmem:[#allocation3 + $0x52] sm:$0xff]
        %v1718 = vld [vmem:[#allocation3 + $0x62] sm:$0xff]
        %v1719 = vld [vmem:[#allocation3 + $0x6a] sm:$0xff]
        %v1720 = vld [vmem:[#allocation3 + $0x7a] sm:$0xff]
        %v1721 = vld [vmem:[#allocation3 + $0x82] sm:$0xff]
        %v1722 = vld [vmem:[#allocation3 + $0x92] sm:$0xff]
        %v1723 = vld [vmem:[#allocation3 + $0x9a] sm:$0xff]
        %v1724 = vld [vmem:[#allocation3 + $0xaa] sm:$0xff]
        %v1725 = vld [vmem:[#allocation3 + $0xb2] sm:$0xff]
        %v1726 = vld [vmem:[#allocation3 + $0xc2] sm:$0xff]
        %v1727 = vld [vmem:[#allocation3 + $0xca] sm:$0xff]
        %v1728 = vld [vmem:[#allocation3 + $0xda] sm:$0xff]
        %v1729 = vld [vmem:[#allocation3 + $0xe2] sm:$0xff]
        %v1730 = vmax.f32 %v1690, %v1710
        %v1731 = vmax.f32 %v1691, %v1711
        %v1732 = vmax.f32 %v1692, %v1712
        %v1733 = vmax.f32 %v1693, %v1713
        %v1734 = vmax.f32 %v1694, %v1714
        %v1735 = vmax.f32 %v1695, %v1715
        %v1736 = vmax.f32 %v1696, %v1716
        %v1737 = vmax.f32 %v1697, %v1717
        %v1738 = vmax.f32 %v1698, %v1718
        %v1739 = vmax.f32 %v1699, %v1719
        %v1740 = vmax.f32 %v1700, %v1720
        %v1741 = vmax.f32 %v1701, %v1721
        %v1742 = vmax.f32 %v1702, %v1722
        %v1743 = vmax.f32 %v1703, %v1723
        %v1744 = vmax.f32 %v1704, %v1724
        %v1745 = vmax.f32 %v1705, %v1725
        %v1746 = vmax.f32 %v1706, %v1726
        %v1747 = vmax.f32 %v1707, %v1727
        %v1748 = vmax.f32 %v1708, %v1728
        %v1749 = vmax.f32 %v1709, %v1729
        %v1750 = vmax.f32 %v1730, %v1732
        %v1751 = vmax.f32 %v1731, %v1733
        %v1752 = vmax.f32 %v1732, %v1734
        %v1753 = vmax.f32 %v1733, %v1735
        %v1754 = vmax.f32 %v1734, %v1736
        %v1755 = vmax.f32 %v1735, %v1737
        %v1756 = vmax.f32 %v1736, %v1738
        %v1757 = vmax.f32 %v1737, %v1739
        %v1758 = vmax.f32 %v1738, %v1740
        %v1759 = vmax.f32 %v1739, %v1741
        %v1760 = vmax.f32 %v1740, %v1742
        %v1761 = vmax.f32 %v1741, %v1743
        %v1762 = vmax.f32 %v1742, %v1744
        %v1763 = vmax.f32 %v1743, %v1745
        %v1764 = vmax.f32 %v1744, %v1746
        %v1765 = vmax.f32 %v1745, %v1747
        %v1766 = vmax.f32 %v1750, %v1734
        %v1767 = vmax.f32 %v1751, %v1735
        %v1768 = vmax.f32 %v1752, %v1736
        %v1769 = vmax.f32 %v1753, %v1737
        %v1770 = vmax.f32 %v1754, %v1738
        %v1771 = vmax.f32 %v1755, %v1739
        %v1772 = vmax.f32 %v1756, %v1740
        %v1773 = vmax.f32 %v1757, %v1741
        %v1774 = vmax.f32 %v1758, %v1742
        %v1775 = vmax.f32 %v1759, %v1743
        %v1776 = vmax.f32 %v1760, %v1744
        %v1777 = vmax.f32 %v1761, %v1745
        %v1778 = vmax.f32 %v1762, %v1746
        %v1779 = vmax.f32 %v1763, %v1747
        %v1780 = vmax.f32 %v1764, %v1748
        %v1781 = vmax.f32 %v1765, %v1749
        %1782 = vst.msk [vmem:[%s1633 + $0x1] sm:$0xff] %vm429, %v1766
        %1783 = vst.msk [vmem:[%s1633 + $0x9] sm:$0xff] %vm429, %v1767
        %1784 = vst.msk [vmem:[%s1633 + $0x19] sm:$0xff] %vm429, %v1768
        %1785 = vst.msk [vmem:[%s1633 + $0x21] sm:$0xff] %vm429, %v1769
        %1786 = vst.msk [vmem:[%s1633 + $0x31] sm:$0xff] %vm429, %v1770
        %1787 = vst.msk [vmem:[%s1633 + $0x39] sm:$0xff] %vm429, %v1771
        %1788 = vst.msk [vmem:[%s1633 + $0x49] sm:$0xff] %vm429, %v1772
        %1789 = vst.msk [vmem:[%s1633 + $0x51] sm:$0xff] %vm429, %v1773
        %1790 = vst.msk [vmem:[%s1633 + $0x61] sm:$0xff] %vm429, %v1774
        %1791 = vst.msk [vmem:[%s1633 + $0x69] sm:$0xff] %vm429, %v1775
        %1792 = vst.msk [vmem:[%s1633 + $0x79] sm:$0xff] %vm429, %v1776
        %1793 = vst.msk [vmem:[%s1633 + $0x81] sm:$0xff] %vm429, %v1777
        %1794 = vst.msk [vmem:[%s1633 + $0x91] sm:$0xff] %vm429, %v1778
        %1795 = vst.msk [vmem:[%s1633 + $0x99] sm:$0xff] %vm429, %v1779
        %1796 = vst.msk [vmem:[%s1633 + $0xa9] sm:$0xff] %vm429, %v1780
        %1797 = vst.msk [vmem:[%s1633 + $0xb1] sm:$0xff] %vm429, %v1781
        %v1798 = vld [vmem:[#allocation3] sm:$0xff]
        %v1799 = vld [vmem:[#allocation3 + $0x8] sm:$0xff]
        %v1800 = vld [vmem:[#allocation3 + $0x18] sm:$0xff]
        %v1801 = vld [vmem:[#allocation3 + $0x20] sm:$0xff]
        %v1802 = vld [vmem:[#allocation3 + $0x30] sm:$0xff]
        %v1803 = vld [vmem:[#allocation3 + $0x38] sm:$0xff]
        %v1804 = vld [vmem:[#allocation3 + $0x48] sm:$0xff]
        %v1805 = vld [vmem:[#allocation3 + $0x50] sm:$0xff]
        %v1806 = vld [vmem:[#allocation3 + $0x60] sm:$0xff]
        %v1807 = vld [vmem:[#allocation3 + $0x68] sm:$0xff]
        %v1808 = vld [vmem:[#allocation3 + $0x78] sm:$0xff]
        %v1809 = vld [vmem:[#allocation3 + $0x80] sm:$0xff]
        %v1810 = vld [vmem:[#allocation3 + $0x90] sm:$0xff]
        %v1811 = vld [vmem:[#allocation3 + $0x98] sm:$0xff]
        %v1812 = vld [vmem:[#allocation3 + $0xa8] sm:$0xff]
        %v1813 = vld [vmem:[#allocation3 + $0xb0] sm:$0xff]
        %v1814 = vpack.c.bf16 %v1799, %v1798
        %v1815 = vpack.c.bf16 %v1801, %v1800
        %v1816 = vpack.c.bf16 %v1803, %v1802
        %v1817 = vpack.c.bf16 %v1805, %v1804
        %v1818 = vpack.c.bf16 %v1807, %v1806
        %v1819 = vpack.c.bf16 %v1809, %v1808
        %v1820 = vpack.c.bf16 %v1811, %v1810
        %v1821 = vpack.c.bf16 %v1813, %v1812
        %1822 = vst.msk [vmem:[#allocation5] sm:$0xff] %vm429, %v1814
        %1823 = vst.msk [vmem:[#allocation5 + $0x28] sm:$0xff] %vm429, %v1815
        %1824 = vst.msk [vmem:[#allocation5 + $0x50] sm:$0xff] %vm429, %v1816
        %1825 = vst.msk [vmem:[#allocation5 + $0x78] sm:$0xff] %vm429, %v1817
        %1826 = vst.msk [vmem:[#allocation5 + $0xa0] sm:$0xff] %vm429, %v1818
        %1827 = vst.msk [vmem:[#allocation5 + $0xc8] sm:$0xff] %vm429, %v1819
        %1828 = vst.msk [vmem:[#allocation5 + $0xf0] sm:$0xff] %vm429, %v1820
        %1829 = vst.msk [vmem:[#allocation5 + $0x118] sm:$0xff] %vm429, %v1821
        %v1830 = vld [vmem:[#allocation3 + $0x1] sm:$0xff]
        %v1831 = vld [vmem:[#allocation3 + $0x9] sm:$0xff]
        %v1832 = vld [vmem:[#allocation3 + $0x19] sm:$0xff]
        %v1833 = vld [vmem:[#allocation3 + $0x21] sm:$0xff]
        %v1834 = vld [vmem:[#allocation3 + $0x31] sm:$0xff]
        %v1835 = vld [vmem:[#allocation3 + $0x39] sm:$0xff]
        %v1836 = vld [vmem:[#allocation3 + $0x49] sm:$0xff]
        %v1837 = vld [vmem:[#allocation3 + $0x51] sm:$0xff]
        %v1838 = vld [vmem:[#allocation3 + $0x61] sm:$0xff]
        %v1839 = vld [vmem:[#allocation3 + $0x69] sm:$0xff]
        %v1840 = vld [vmem:[#allocation3 + $0x79] sm:$0xff]
        %v1841 = vld [vmem:[#allocation3 + $0x81] sm:$0xff]
        %v1842 = vld [vmem:[#allocation3 + $0x91] sm:$0xff]
        %v1843 = vld [vmem:[#allocation3 + $0x99] sm:$0xff]
        %v1844 = vld [vmem:[#allocation3 + $0xa9] sm:$0xff]
        %v1845 = vld [vmem:[#allocation3 + $0xb1] sm:$0xff]
        %v1846 = vpack.c.bf16 %v1831, %v1830
        %v1847 = vpack.c.bf16 %v1833, %v1832
        %v1848 = vpack.c.bf16 %v1835, %v1834
        %v1849 = vpack.c.bf16 %v1837, %v1836
        %v1850 = vpack.c.bf16 %v1839, %v1838
        %v1851 = vpack.c.bf16 %v1841, %v1840
        %v1852 = vpack.c.bf16 %v1843, %v1842
        %v1853 = vpack.c.bf16 %v1845, %v1844
        %1862 = vrot.lane.b32.xlu0 %v1846, 64
        %v1863 = vpop.permute.xlu0 %1862
        %1864 = vrot.lane.b32.xlu0 %v1847, 64
        %v1865 = vpop.permute.xlu0 %1864
        %1866 = vrot.lane.b32.xlu0 %v1848, 64
        %v1867 = vpop.permute.xlu0 %1866
        %1868 = vrot.lane.b32.xlu0 %v1849, 64
        %v1869 = vpop.permute.xlu0 %1868
        %1870 = vrot.lane.b32.xlu0 %v1850, 64
        %v1871 = vpop.permute.xlu0 %1870
        %1872 = vrot.lane.b32.xlu0 %v1851, 64
        %v1873 = vpop.permute.xlu0 %1872
        %1874 = vrot.lane.b32.xlu0 %v1852, 64
        %v1875 = vpop.permute.xlu0 %1874
        %1876 = vrot.lane.b32.xlu0 %v1853, 64
        %v1877 = vpop.permute.xlu0 %1876
        %vm1886 = vcmask 1048064
        %1887 = vst.msk [vmem:[#allocation5] sm:$0xff] %vm1886, %v1863
        %1888 = vst.msk [vmem:[#allocation5 + $0x28] sm:$0xff] %vm1886, %v1865
        %1889 = vst.msk [vmem:[#allocation5 + $0x50] sm:$0xff] %vm1886, %v1867
        %1890 = vst.msk [vmem:[#allocation5 + $0x78] sm:$0xff] %vm1886, %v1869
        %1891 = vst.msk [vmem:[#allocation5 + $0xa0] sm:$0xff] %vm1886, %v1871
        %1892 = vst.msk [vmem:[#allocation5 + $0xc8] sm:$0xff] %vm1886, %v1873
        %1893 = vst.msk [vmem:[#allocation5 + $0xf0] sm:$0xff] %vm1886, %v1875
        %1894 = vst.msk [vmem:[#allocation5 + $0x118] sm:$0xff] %vm1886, %v1877
        %v1895 = vld [vmem:[#allocation3 + $0x2] sm:$0xff]
        %v1896 = vld [vmem:[#allocation3 + $0xa] sm:$0xff]
        %v1897 = vld [vmem:[#allocation3 + $0x1a] sm:$0xff]
        %v1898 = vld [vmem:[#allocation3 + $0x22] sm:$0xff]
        %v1899 = vld [vmem:[#allocation3 + $0x32] sm:$0xff]
        %v1900 = vld [vmem:[#allocation3 + $0x3a] sm:$0xff]
        %v1901 = vld [vmem:[#allocation3 + $0x4a] sm:$0xff]
        %v1902 = vld [vmem:[#allocation3 + $0x52] sm:$0xff]
        %v1903 = vld [vmem:[#allocation3 + $0x62] sm:$0xff]
        %v1904 = vld [vmem:[#allocation3 + $0x6a] sm:$0xff]
        %v1905 = vld [vmem:[#allocation3 + $0x7a] sm:$0xff]
        %v1906 = vld [vmem:[#allocation3 + $0x82] sm:$0xff]
        %v1907 = vld [vmem:[#allocation3 + $0x92] sm:$0xff]
        %v1908 = vld [vmem:[#allocation3 + $0x9a] sm:$0xff]
        %v1909 = vld [vmem:[#allocation3 + $0xaa] sm:$0xff]
        %v1910 = vld [vmem:[#allocation3 + $0xb2] sm:$0xff]
        %v1911 = vpack.c.bf16 %v1896, %v1895
        %v1912 = vpack.c.bf16 %v1898, %v1897
        %v1913 = vpack.c.bf16 %v1900, %v1899
        %v1914 = vpack.c.bf16 %v1902, %v1901
        %v1915 = vpack.c.bf16 %v1904, %v1903
        %v1916 = vpack.c.bf16 %v1906, %v1905
        %v1917 = vpack.c.bf16 %v1908, %v1907
        %v1918 = vpack.c.bf16 %v1910, %v1909
        %1919 = vst.msk [vmem:[#allocation5 + $0x8] sm:$0xff] %vm429, %v1911
        %1920 = vst.msk [vmem:[#allocation5 + $0x30] sm:$0xff] %vm429, %v1912
        %1921 = vst.msk [vmem:[#allocation5 + $0x58] sm:$0xff] %vm429, %v1913
        %1922 = vst.msk [vmem:[#allocation5 + $0x80] sm:$0xff] %vm429, %v1914
        %1923 = vst.msk [vmem:[#allocation5 + $0xa8] sm:$0xff] %vm429, %v1915
        %1924 = vst.msk [vmem:[#allocation5 + $0xd0] sm:$0xff] %vm429, %v1916
        %1925 = vst.msk [vmem:[#allocation5 + $0xf8] sm:$0xff] %vm429, %v1917
        %1926 = vst.msk [vmem:[#allocation5 + $0x120] sm:$0xff] %vm429, %v1918
        %v1927 = vld [vmem:[%s1633] sm:$0xff]
        %v1928 = vld [vmem:[%s1633 + $0x8] sm:$0xff]
        %v1929 = vld [vmem:[%s1633 + $0x18] sm:$0xff]
        %v1930 = vld [vmem:[%s1633 + $0x20] sm:$0xff]
        %v1931 = vld [vmem:[%s1633 + $0x30] sm:$0xff]
        %v1932 = vld [vmem:[%s1633 + $0x38] sm:$0xff]
        %v1933 = vld [vmem:[%s1633 + $0x48] sm:$0xff]
        %v1934 = vld [vmem:[%s1633 + $0x50] sm:$0xff]
        %v1935 = vld [vmem:[%s1633 + $0x60] sm:$0xff]
        %v1936 = vld [vmem:[%s1633 + $0x68] sm:$0xff]
        %v1937 = vld [vmem:[%s1633 + $0x78] sm:$0xff]
        %v1938 = vld [vmem:[%s1633 + $0x80] sm:$0xff]
        %v1939 = vld [vmem:[%s1633 + $0x90] sm:$0xff]
        %v1940 = vld [vmem:[%s1633 + $0x98] sm:$0xff]
        %v1941 = vld [vmem:[%s1633 + $0xa8] sm:$0xff]
        %v1942 = vld [vmem:[%s1633 + $0xb0] sm:$0xff]
        %v1943 = vpack.c.bf16 %v1928, %v1927
        %v1944 = vpack.c.bf16 %v1930, %v1929
        %v1945 = vpack.c.bf16 %v1932, %v1931
        %v1946 = vpack.c.bf16 %v1934, %v1933
        %v1947 = vpack.c.bf16 %v1936, %v1935
        %v1948 = vpack.c.bf16 %v1938, %v1937
        %v1949 = vpack.c.bf16 %v1940, %v1939
        %v1950 = vpack.c.bf16 %v1942, %v1941
        %1959 = vrot.lane.b32.xlu0 %v1943, 64
        %v1960 = vpop.permute.xlu0 %1959
        %1961 = vrot.lane.b32.xlu0 %v1944, 64
        %v1962 = vpop.permute.xlu0 %1961
        %1963 = vrot.lane.b32.xlu0 %v1945, 64
        %v1964 = vpop.permute.xlu0 %1963
        %1965 = vrot.lane.b32.xlu0 %v1946, 64
        %v1966 = vpop.permute.xlu0 %1965
        %1967 = vrot.lane.b32.xlu0 %v1947, 64
        %v1968 = vpop.permute.xlu0 %1967
        %1969 = vrot.lane.b32.xlu0 %v1948, 64
        %v1970 = vpop.permute.xlu0 %1969
        %1971 = vrot.lane.b32.xlu0 %v1949, 64
        %v1972 = vpop.permute.xlu0 %1971
        %1973 = vrot.lane.b32.xlu0 %v1950, 64
        %v1974 = vpop.permute.xlu0 %1973
        %1983 = vst.msk [vmem:[#allocation5 + $0x8] sm:$0xff] %vm1886, %v1960
        %1984 = vst.msk [vmem:[#allocation5 + $0x30] sm:$0xff] %vm1886, %v1962
        %1985 = vst.msk [vmem:[#allocation5 + $0x58] sm:$0xff] %vm1886, %v1964
        %1986 = vst.msk [vmem:[#allocation5 + $0x80] sm:$0xff] %vm1886, %v1966
        %1987 = vst.msk [vmem:[#allocation5 + $0xa8] sm:$0xff] %vm1886, %v1968
        %1988 = vst.msk [vmem:[#allocation5 + $0xd0] sm:$0xff] %vm1886, %v1970
        %1989 = vst.msk [vmem:[#allocation5 + $0xf8] sm:$0xff] %vm1886, %v1972
        %1990 = vst.msk [vmem:[#allocation5 + $0x120] sm:$0xff] %vm1886, %v1974
        %v1991 = vld [vmem:[%s1633 + $0x1] sm:$0xff]
        %v1992 = vld [vmem:[%s1633 + $0x9] sm:$0xff]
        %v1993 = vld [vmem:[%s1633 + $0x19] sm:$0xff]
        %v1994 = vld [vmem:[%s1633 + $0x21] sm:$0xff]
        %v1995 = vld [vmem:[%s1633 + $0x31] sm:$0xff]
        %v1996 = vld [vmem:[%s1633 + $0x39] sm:$0xff]
        %v1997 = vld [vmem:[%s1633 + $0x49] sm:$0xff]
        %v1998 = vld [vmem:[%s1633 + $0x51] sm:$0xff]
        %v1999 = vld [vmem:[%s1633 + $0x61] sm:$0xff]
        %v2000 = vld [vmem:[%s1633 + $0x69] sm:$0xff]
        %v2001 = vld [vmem:[%s1633 + $0x79] sm:$0xff]
        %v2002 = vld [vmem:[%s1633 + $0x81] sm:$0xff]
        %v2003 = vld [vmem:[%s1633 + $0x91] sm:$0xff]
        %v2004 = vld [vmem:[%s1633 + $0x99] sm:$0xff]
        %v2005 = vld [vmem:[%s1633 + $0xa9] sm:$0xff]
        %v2006 = vld [vmem:[%s1633 + $0xb1] sm:$0xff]
        %v2007 = vpack.c.bf16 %v1992, %v1991
        %v2008 = vpack.c.bf16 %v1994, %v1993
        %v2009 = vpack.c.bf16 %v1996, %v1995
        %v2010 = vpack.c.bf16 %v1998, %v1997
        %v2011 = vpack.c.bf16 %v2000, %v1999
        %v2012 = vpack.c.bf16 %v2002, %v2001
        %v2013 = vpack.c.bf16 %v2004, %v2003
        %v2014 = vpack.c.bf16 %v2006, %v2005
        %2015 = vst.msk [vmem:[#allocation5 + $0x10] sm:$0xff] %vm429, %v2007
        %2016 = vst.msk [vmem:[#allocation5 + $0x38] sm:$0xff] %vm429, %v2008
        %2017 = vst.msk [vmem:[#allocation5 + $0x60] sm:$0xff] %vm429, %v2009
        %2018 = vst.msk [vmem:[#allocation5 + $0x88] sm:$0xff] %vm429, %v2010
        %2019 = vst.msk [vmem:[#allocation5 + $0xb0] sm:$0xff] %vm429, %v2011
        %2020 = vst.msk [vmem:[#allocation5 + $0xd8] sm:$0xff] %vm429, %v2012
        %2021 = vst.msk [vmem:[#allocation5 + $0x100] sm:$0xff] %vm429, %v2013
        %2022 = vst.msk [vmem:[#allocation5 + $0x128] sm:$0xff] %vm429, %v2014
        %v2023 = vld [vmem:[%s1633 + $0x2] sm:$0xff]
        %v2024 = vld [vmem:[%s1633 + $0xa] sm:$0xff]
        %v2025 = vld [vmem:[%s1633 + $0x1a] sm:$0xff]
        %v2026 = vld [vmem:[%s1633 + $0x22] sm:$0xff]
        %v2027 = vld [vmem:[%s1633 + $0x32] sm:$0xff]
        %v2028 = vld [vmem:[%s1633 + $0x3a] sm:$0xff]
        %v2029 = vld [vmem:[%s1633 + $0x4a] sm:$0xff]
        %v2030 = vld [vmem:[%s1633 + $0x52] sm:$0xff]
        %v2031 = vld [vmem:[%s1633 + $0x62] sm:$0xff]
        %v2032 = vld [vmem:[%s1633 + $0x6a] sm:$0xff]
        %v2033 = vld [vmem:[%s1633 + $0x7a] sm:$0xff]
        %v2034 = vld [vmem:[%s1633 + $0x82] sm:$0xff]
        %v2035 = vld [vmem:[%s1633 + $0x92] sm:$0xff]
        %v2036 = vld [vmem:[%s1633 + $0x9a] sm:$0xff]
        %v2037 = vld [vmem:[%s1633 + $0xaa] sm:$0xff]
        %v2038 = vld [vmem:[%s1633 + $0xb2] sm:$0xff]
        %v2039 = vpack.c.bf16 %v2024, %v2023
        %v2040 = vpack.c.bf16 %v2026, %v2025
        %v2041 = vpack.c.bf16 %v2028, %v2027
        %v2042 = vpack.c.bf16 %v2030, %v2029
        %v2043 = vpack.c.bf16 %v2032, %v2031
        %v2044 = vpack.c.bf16 %v2034, %v2033
        %v2045 = vpack.c.bf16 %v2036, %v2035
        %v2046 = vpack.c.bf16 %v2038, %v2037
        %2055 = vrot.lane.b32.xlu0 %v2039, 64
        %v2056 = vpop.permute.xlu0 %2055
        %2057 = vrot.lane.b32.xlu0 %v2040, 64
        %v2058 = vpop.permute.xlu0 %2057
        %2059 = vrot.lane.b32.xlu0 %v2041, 64
        %v2060 = vpop.permute.xlu0 %2059
        %2061 = vrot.lane.b32.xlu0 %v2042, 64
        %v2062 = vpop.permute.xlu0 %2061
        %2063 = vrot.lane.b32.xlu0 %v2043, 64
        %v2064 = vpop.permute.xlu0 %2063
        %2065 = vrot.lane.b32.xlu0 %v2044, 64
        %v2066 = vpop.permute.xlu0 %2065
        %2067 = vrot.lane.b32.xlu0 %v2045, 64
        %v2068 = vpop.permute.xlu0 %2067
        %2069 = vrot.lane.b32.xlu0 %v2046, 64
        %v2070 = vpop.permute.xlu0 %2069
        %2079 = vst.msk [vmem:[#allocation5 + $0x10] sm:$0xff] %vm1886, %v2056
        %2080 = vst.msk [vmem:[#allocation5 + $0x38] sm:$0xff] %vm1886, %v2058
        %2081 = vst.msk [vmem:[#allocation5 + $0x60] sm:$0xff] %vm1886, %v2060
        %2082 = vst.msk [vmem:[#allocation5 + $0x88] sm:$0xff] %vm1886, %v2062
        %2083 = vst.msk [vmem:[#allocation5 + $0xb0] sm:$0xff] %vm1886, %v2064
        %2084 = vst.msk [vmem:[#allocation5 + $0xd8] sm:$0xff] %vm1886, %v2066
        %2085 = vst.msk [vmem:[#allocation5 + $0x100] sm:$0xff] %vm1886, %v2068
        %2086 = vst.msk [vmem:[#allocation5 + $0x128] sm:$0xff] %vm1886, %v2070
        %s2087 = scalar_lea.vmem [#allocation3], 48
        %v2088 = vld [vmem:[%s2087] sm:$0xff]
        %v2089 = vld [vmem:[%s2087 + $0x8] sm:$0xff]
        %v2090 = vld [vmem:[%s2087 + $0x18] sm:$0xff]
        %v2091 = vld [vmem:[%s2087 + $0x20] sm:$0xff]
        %v2092 = vld [vmem:[%s2087 + $0x30] sm:$0xff]
        %v2093 = vld [vmem:[%s2087 + $0x38] sm:$0xff]
        %v2094 = vld [vmem:[%s2087 + $0x48] sm:$0xff]
        %v2095 = vld [vmem:[%s2087 + $0x50] sm:$0xff]
        %v2096 = vld [vmem:[%s2087 + $0x60] sm:$0xff]
        %v2097 = vld [vmem:[%s2087 + $0x68] sm:$0xff]
        %v2098 = vld [vmem:[%s2087 + $0x78] sm:$0xff]
        %v2099 = vld [vmem:[%s2087 + $0x80] sm:$0xff]
        %v2100 = vld [vmem:[%s2087 + $0x90] sm:$0xff]
        %v2101 = vld [vmem:[%s2087 + $0x98] sm:$0xff]
        %v2102 = vld [vmem:[%s2087 + $0xa8] sm:$0xff]
        %v2103 = vld [vmem:[%s2087 + $0xb0] sm:$0xff]
        %v2104 = vpack.c.bf16 %v2089, %v2088
        %v2105 = vpack.c.bf16 %v2091, %v2090
        %v2106 = vpack.c.bf16 %v2093, %v2092
        %v2107 = vpack.c.bf16 %v2095, %v2094
        %v2108 = vpack.c.bf16 %v2097, %v2096
        %v2109 = vpack.c.bf16 %v2099, %v2098
        %v2110 = vpack.c.bf16 %v2101, %v2100
        %v2111 = vpack.c.bf16 %v2103, %v2102
        %2112 = vst.msk [vmem:[#allocation5 + $0x18] sm:$0xff] %vm429, %v2104
        %2113 = vst.msk [vmem:[#allocation5 + $0x40] sm:$0xff] %vm429, %v2105
        %2114 = vst.msk [vmem:[#allocation5 + $0x68] sm:$0xff] %vm429, %v2106
        %2115 = vst.msk [vmem:[#allocation5 + $0x90] sm:$0xff] %vm429, %v2107
        %2116 = vst.msk [vmem:[#allocation5 + $0xb8] sm:$0xff] %vm429, %v2108
        %2117 = vst.msk [vmem:[#allocation5 + $0xe0] sm:$0xff] %vm429, %v2109
        %2118 = vst.msk [vmem:[#allocation5 + $0x108] sm:$0xff] %vm429, %v2110
        %2119 = vst.msk [vmem:[#allocation5 + $0x130] sm:$0xff] %vm429, %v2111
        %v2120 = vld [vmem:[%s2087 + $0x1] sm:$0xff]
        %v2121 = vld [vmem:[%s2087 + $0x9] sm:$0xff]
        %v2122 = vld [vmem:[%s2087 + $0x19] sm:$0xff]
        %v2123 = vld [vmem:[%s2087 + $0x21] sm:$0xff]
        %v2124 = vld [vmem:[%s2087 + $0x31] sm:$0xff]
        %v2125 = vld [vmem:[%s2087 + $0x39] sm:$0xff]
        %v2126 = vld [vmem:[%s2087 + $0x49] sm:$0xff]
        %v2127 = vld [vmem:[%s2087 + $0x51] sm:$0xff]
        %v2128 = vld [vmem:[%s2087 + $0x61] sm:$0xff]
        %v2129 = vld [vmem:[%s2087 + $0x69] sm:$0xff]
        %v2130 = vld [vmem:[%s2087 + $0x79] sm:$0xff]
        %v2131 = vld [vmem:[%s2087 + $0x81] sm:$0xff]
        %v2132 = vld [vmem:[%s2087 + $0x91] sm:$0xff]
        %v2133 = vld [vmem:[%s2087 + $0x99] sm:$0xff]
        %v2134 = vld [vmem:[%s2087 + $0xa9] sm:$0xff]
        %v2135 = vld [vmem:[%s2087 + $0xb1] sm:$0xff]
        %v2136 = vpack.c.bf16 %v2121, %v2120
        %v2137 = vpack.c.bf16 %v2123, %v2122
        %v2138 = vpack.c.bf16 %v2125, %v2124
        %v2139 = vpack.c.bf16 %v2127, %v2126
        %v2140 = vpack.c.bf16 %v2129, %v2128
        %v2141 = vpack.c.bf16 %v2131, %v2130
        %v2142 = vpack.c.bf16 %v2133, %v2132
        %v2143 = vpack.c.bf16 %v2135, %v2134
        %2152 = vrot.lane.b32.xlu0 %v2136, 64
        %v2153 = vpop.permute.xlu0 %2152
        %2154 = vrot.lane.b32.xlu0 %v2137, 64
        %v2155 = vpop.permute.xlu0 %2154
        %2156 = vrot.lane.b32.xlu0 %v2138, 64
        %v2157 = vpop.permute.xlu0 %2156
        %2158 = vrot.lane.b32.xlu0 %v2139, 64
        %v2159 = vpop.permute.xlu0 %2158
        %2160 = vrot.lane.b32.xlu0 %v2140, 64
        %v2161 = vpop.permute.xlu0 %2160
        %2162 = vrot.lane.b32.xlu0 %v2141, 64
        %v2163 = vpop.permute.xlu0 %2162
        %2164 = vrot.lane.b32.xlu0 %v2142, 64
        %v2165 = vpop.permute.xlu0 %2164
        %2166 = vrot.lane.b32.xlu0 %v2143, 64
        %v2167 = vpop.permute.xlu0 %2166
        %2176 = vst.msk [vmem:[#allocation5 + $0x18] sm:$0xff] %vm1886, %v2153
        %2177 = vst.msk [vmem:[#allocation5 + $0x40] sm:$0xff] %vm1886, %v2155
        %2178 = vst.msk [vmem:[#allocation5 + $0x68] sm:$0xff] %vm1886, %v2157
        %2179 = vst.msk [vmem:[#allocation5 + $0x90] sm:$0xff] %vm1886, %v2159
        %2180 = vst.msk [vmem:[#allocation5 + $0xb8] sm:$0xff] %vm1886, %v2161
        %2181 = vst.msk [vmem:[#allocation5 + $0xe0] sm:$0xff] %vm1886, %v2163
        %2182 = vst.msk [vmem:[#allocation5 + $0x108] sm:$0xff] %vm1886, %v2165
        %2183 = vst.msk [vmem:[#allocation5 + $0x130] sm:$0xff] %vm1886, %v2167
        %v2184 = vld [vmem:[%s2087 + $0x2] sm:$0xff]
        %v2185 = vld [vmem:[%s2087 + $0xa] sm:$0xff]
        %v2186 = vld [vmem:[%s2087 + $0x1a] sm:$0xff]
        %v2187 = vld [vmem:[%s2087 + $0x22] sm:$0xff]
        %v2188 = vld [vmem:[%s2087 + $0x32] sm:$0xff]
        %v2189 = vld [vmem:[%s2087 + $0x3a] sm:$0xff]
        %v2190 = vld [vmem:[%s2087 + $0x4a] sm:$0xff]
        %v2191 = vld [vmem:[%s2087 + $0x52] sm:$0xff]
        %v2192 = vld [vmem:[%s2087 + $0x62] sm:$0xff]
        %v2193 = vld [vmem:[%s2087 + $0x6a] sm:$0xff]
        %v2194 = vld [vmem:[%s2087 + $0x7a] sm:$0xff]
        %v2195 = vld [vmem:[%s2087 + $0x82] sm:$0xff]
        %v2196 = vld [vmem:[%s2087 + $0x92] sm:$0xff]
        %v2197 = vld [vmem:[%s2087 + $0x9a] sm:$0xff]
        %v2198 = vld [vmem:[%s2087 + $0xaa] sm:$0xff]
        %v2199 = vld [vmem:[%s2087 + $0xb2] sm:$0xff]
        %v2200 = vpack.c.bf16 %v2185, %v2184
        %v2201 = vpack.c.bf16 %v2187, %v2186
        %v2202 = vpack.c.bf16 %v2189, %v2188
        %v2203 = vpack.c.bf16 %v2191, %v2190
        %v2204 = vpack.c.bf16 %v2193, %v2192
        %v2205 = vpack.c.bf16 %v2195, %v2194
        %v2206 = vpack.c.bf16 %v2197, %v2196
        %v2207 = vpack.c.bf16 %v2199, %v2198
        %2208 = vst.msk [vmem:[#allocation5 + $0x20] sm:$0xff] %vm429, %v2200
        %2209 = vst.msk [vmem:[#allocation5 + $0x48] sm:$0xff] %vm429, %v2201
        %2210 = vst.msk [vmem:[#allocation5 + $0x70] sm:$0xff] %vm429, %v2202
        %2211 = vst.msk [vmem:[#allocation5 + $0x98] sm:$0xff] %vm429, %v2203
        %2212 = vst.msk [vmem:[#allocation5 + $0xc0] sm:$0xff] %vm429, %v2204
        %2213 = vst.msk [vmem:[#allocation5 + $0xe8] sm:$0xff] %vm429, %v2205
        %2214 = vst.msk [vmem:[#allocation5 + $0x110] sm:$0xff] %vm429, %v2206
        %2215 = vst.msk [vmem:[#allocation5 + $0x138] sm:$0xff] %vm429, %v2207
        %v2216 = vld [vmem:[#allocation5] sm:$0xff]
        %v2217 = vld [vmem:[#allocation5 + $0x8] sm:$0xff]
        %v2218 = vld [vmem:[#allocation5 + $0x10] sm:$0xff]
        %v2219 = vld [vmem:[#allocation5 + $0x18] sm:$0xff]
        %v2220 = vld [vmem:[#allocation5 + $0x20] sm:$0xff]
        %v2221 = vld [vmem:[#allocation5 + $0x28] sm:$0xff]
        %v2222 = vld [vmem:[#allocation5 + $0x30] sm:$0xff]
        %v2223 = vld [vmem:[#allocation5 + $0x38] sm:$0xff]
        %v2224 = vld [vmem:[#allocation5 + $0x40] sm:$0xff]
        %v2225 = vld [vmem:[#allocation5 + $0x48] sm:$0xff]
        %v2226 = vld [vmem:[#allocation5 + $0x50] sm:$0xff]
        %v2227 = vld [vmem:[#allocation5 + $0x58] sm:$0xff]
        %v2228 = vld [vmem:[#allocation5 + $0x60] sm:$0xff]
        %v2229 = vld [vmem:[#allocation5 + $0x68] sm:$0xff]
        %v2230 = vld [vmem:[#allocation5 + $0x70] sm:$0xff]
        %v2231 = vld [vmem:[#allocation5 + $0x78] sm:$0xff]
        %v2232 = vld [vmem:[#allocation5 + $0x80] sm:$0xff]
        %v2233 = vld [vmem:[#allocation5 + $0x88] sm:$0xff]
        %v2234 = vld [vmem:[#allocation5 + $0x90] sm:$0xff]
        %v2235 = vld [vmem:[#allocation5 + $0x98] sm:$0xff]
        %v2236 = vld [vmem:[#allocation5 + $0xa0] sm:$0xff]
        %v2237 = vld [vmem:[#allocation5 + $0xa8] sm:$0xff]
        %v2238 = vld [vmem:[#allocation5 + $0xb0] sm:$0xff]
        %v2239 = vld [vmem:[#allocation5 + $0xb8] sm:$0xff]
        %v2240 = vld [vmem:[#allocation5 + $0xc0] sm:$0xff]
        %v2241 = vld [vmem:[#allocation5 + $0xc8] sm:$0xff]
        %v2242 = vld [vmem:[#allocation5 + $0xd0] sm:$0xff]
        %v2243 = vld [vmem:[#allocation5 + $0xd8] sm:$0xff]
        %v2244 = vld [vmem:[#allocation5 + $0xe0] sm:$0xff]
        %v2245 = vld [vmem:[#allocation5 + $0xe8] sm:$0xff]
        %v2246 = vld [vmem:[#allocation5 + $0xf0] sm:$0xff]
        %v2247 = vld [vmem:[#allocation5 + $0xf8] sm:$0xff]
        %v2248 = vld [vmem:[#allocation5 + $0x100] sm:$0xff]
        %v2249 = vld [vmem:[#allocation5 + $0x108] sm:$0xff]
        %v2250 = vld [vmem:[#allocation5 + $0x110] sm:$0xff]
        %v2251 = vld [vmem:[#allocation5 + $0x118] sm:$0xff]
        %v2252 = vld [vmem:[#allocation5 + $0x120] sm:$0xff]
        %v2253 = vld [vmem:[#allocation5 + $0x128] sm:$0xff]
        %v2254 = vld [vmem:[#allocation5 + $0x130] sm:$0xff]
        %v2255 = vld [vmem:[#allocation5 + $0x138] sm:$0xff]
        %v2256 = vld [vmem:[%s3] sm:$0xf]
        %v2257 = vld [vmem:[%s3 + $0x4] sm:$0xf]
        %v2258 = vld [vmem:[%s3 + $0x8] sm:$0xf]
        %v2259 = vld [vmem:[%s3 + $0xc] sm:$0xf]
        %v2260 = vld [vmem:[%s3 + $0x10] sm:$0xf]
        %v2261 = vld [vmem:[%s3 + $0x14] sm:$0xf]
        %v2262 = vld [vmem:[%s3 + $0x18] sm:$0xf]
        %v2263 = vld [vmem:[%s3 + $0x1c] sm:$0xf]
        %v2264 = vld [vmem:[%s3 + $0x20] sm:$0xf]
        %v2265 = vld [vmem:[%s3 + $0x24] sm:$0xf]
        %v2266 = vld [vmem:[%s3 + $0x28] sm:$0xf]
        %v2267 = vld [vmem:[%s3 + $0x2c] sm:$0xf]
        %v2268 = vld [vmem:[%s3 + $0x30] sm:$0xf]
        %v2269 = vld [vmem:[%s3 + $0x34] sm:$0xf]
        %v2270 = vld [vmem:[%s3 + $0x38] sm:$0xf]
        %v2271 = vld [vmem:[%s3 + $0x3c] sm:$0xf]
        %v2272 = vld [vmem:[%s3 + $0x40] sm:$0xf]
        %v2273 = vld [vmem:[%s3 + $0x44] sm:$0xf]
        %v2274 = vld [vmem:[%s3 + $0x48] sm:$0xf]
        %v2275 = vld [vmem:[%s3 + $0x4c] sm:$0xf]
        %v2276 = vld [vmem:[%s3 + $0x50] sm:$0xf]
        %v2277 = vld [vmem:[%s3 + $0x54] sm:$0xf]
        %v2278 = vld [vmem:[%s3 + $0x58] sm:$0xf]
        %v2279 = vld [vmem:[%s3 + $0x5c] sm:$0xf]
        %v2280 = vld [vmem:[%s3 + $0x60] sm:$0xf]
        %v2281 = vld [vmem:[%s3 + $0x64] sm:$0xf]
        %v2282 = vld [vmem:[%s3 + $0x68] sm:$0xf]
        %v2283 = vld [vmem:[%s3 + $0x6c] sm:$0xf]
        %v2284 = vld [vmem:[%s3 + $0x70] sm:$0xf]
        %v2285 = vld [vmem:[%s3 + $0x74] sm:$0xf]
        %v2286 = vld [vmem:[%s3 + $0x78] sm:$0xf]
        %v2287 = vld [vmem:[%s3 + $0x7c] sm:$0xf]
        %v2288 = vld [vmem:[%s3 + $0x80] sm:$0xf]
        %v2289 = vld [vmem:[%s3 + $0x84] sm:$0xf]
        %v2290 = vld [vmem:[%s3 + $0x88] sm:$0xf]
        %v2291 = vld [vmem:[%s3 + $0x8c] sm:$0xf]
        %v2292 = vld [vmem:[%s3 + $0x90] sm:$0xf]
        %v2293 = vld [vmem:[%s3 + $0x94] sm:$0xf]
        %v2294 = vld [vmem:[%s3 + $0x98] sm:$0xf]
        %v2295 = vld [vmem:[%s3 + $0x9c] sm:$0xf]
        %v2296 = vld [vmem:[%s3 + $0xa0] sm:$0xf]
        %v2297 = vld [vmem:[%s3 + $0xa4] sm:$0xf]
        %v2298 = vld [vmem:[%s3 + $0xa8] sm:$0xf]
        %v2299 = vld [vmem:[%s3 + $0xac] sm:$0xf]
        %v2300 = vld [vmem:[%s3 + $0xb0] sm:$0xf]
        %v2301 = vld [vmem:[%s3 + $0xb4] sm:$0xf]
        %v2302 = vld [vmem:[%s3 + $0xb8] sm:$0xf]
        %v2303 = vld [vmem:[%s3 + $0xbc] sm:$0xf]
        %v2304 = vld [vmem:[%s3 + $0xc0] sm:$0xf]
        %v2305 = vld [vmem:[%s3 + $0xc4] sm:$0xf]
        %v2306 = vld [vmem:[%s3 + $0xc8] sm:$0xf]
        %v2307 = vld [vmem:[%s3 + $0xcc] sm:$0xf]
        %v2308 = vld [vmem:[%s3 + $0xd0] sm:$0xf]
        %v2309 = vld [vmem:[%s3 + $0xd4] sm:$0xf]
        %v2310 = vld [vmem:[%s3 + $0xd8] sm:$0xf]
        %v2311 = vld [vmem:[%s3 + $0xdc] sm:$0xf]
        %v2312 = vld [vmem:[%s3 + $0xe0] sm:$0xf]
        %v2313 = vld [vmem:[%s3 + $0xe4] sm:$0xf]
        %v2314 = vld [vmem:[%s3 + $0xe8] sm:$0xf]
        %v2315 = vld [vmem:[%s3 + $0xec] sm:$0xf]
        %v2316 = vld [vmem:[%s3 + $0xf0] sm:$0xf]
        %v2317 = vld [vmem:[%s3 + $0xf4] sm:$0xf]
        %v2318 = vld [vmem:[%s3 + $0xf8] sm:$0xf]
        %v2319 = vld [vmem:[%s3 + $0xfc] sm:$0xf]
        %v2320 = vld [vmem:[%s3 + $0x100] sm:$0xf]
        %v2321 = vld [vmem:[%s3 + $0x104] sm:$0xf]
        %v2322 = vld [vmem:[%s3 + $0x108] sm:$0xf]
        %v2323 = vld [vmem:[%s3 + $0x10c] sm:$0xf]
        %v2324 = vld [vmem:[%s3 + $0x110] sm:$0xf]
        %v2325 = vld [vmem:[%s3 + $0x114] sm:$0xf]
        %v2326 = vld [vmem:[%s3 + $0x118] sm:$0xf]
        %v2327 = vld [vmem:[%s3 + $0x11c] sm:$0xf]
        %v2328 = vld [vmem:[%s4] sm:$0x1]
        %v2330 = vlaneseq
        %v2331 = vshrl.u32 %v2330, 7
        %v2332 = vsub.s32 0, %v2331
        %v2333 = vrot.slane %v2328, %v2332
        %v2407 = vunpack.c.l.b16 %v2256
        %v2408 = vunpack.c.l.b16 %v2257
        %v2409 = vunpack.c.l.b16 %v2258
        %v2410 = vunpack.c.l.b16 %v2259
        %v2411 = vunpack.c.l.b16 %v2260
        %v2412 = vunpack.c.l.b16 %v2261
        %v2413 = vunpack.c.l.b16 %v2262
        %v2414 = vunpack.c.l.b16 %v2263
        %v2415 = vunpack.c.l.b16 %v2264
        %v2416 = vunpack.c.l.b16 %v2265
        %v2417 = vunpack.c.l.b16 %v2266
        %v2418 = vunpack.c.l.b16 %v2267
        %v2419 = vunpack.c.l.b16 %v2268
        %v2420 = vunpack.c.l.b16 %v2269
        %v2421 = vunpack.c.l.b16 %v2270
        %v2422 = vunpack.c.l.b16 %v2271
        %v2423 = vunpack.c.l.b16 %v2272
        %v2424 = vunpack.c.l.b16 %v2273
        %v2425 = vunpack.c.l.b16 %v2274
        %v2426 = vunpack.c.l.b16 %v2275
        %v2427 = vunpack.c.l.b16 %v2276
        %v2428 = vunpack.c.l.b16 %v2277
        %v2429 = vunpack.c.l.b16 %v2278
        %v2430 = vunpack.c.l.b16 %v2279
        %v2431 = vunpack.c.l.b16 %v2280
        %v2432 = vunpack.c.l.b16 %v2281
        %v2433 = vunpack.c.l.b16 %v2282
        %v2434 = vunpack.c.l.b16 %v2283
        %v2435 = vunpack.c.l.b16 %v2284
        %v2436 = vunpack.c.l.b16 %v2285
        %v2437 = vunpack.c.l.b16 %v2286
        %v2438 = vunpack.c.l.b16 %v2287
        %v2439 = vunpack.c.l.b16 %v2288
        %v2440 = vunpack.c.l.b16 %v2289
        %v2441 = vunpack.c.l.b16 %v2290
        %v2442 = vunpack.c.l.b16 %v2291
        %v2443 = vunpack.c.l.b16 %v2292
        %v2444 = vunpack.c.l.b16 %v2293
        %v2445 = vunpack.c.l.b16 %v2294
        %v2446 = vunpack.c.l.b16 %v2295
        %v2447 = vunpack.c.l.b16 %v2296
        %v2448 = vunpack.c.l.b16 %v2297
        %v2449 = vunpack.c.l.b16 %v2298
        %v2450 = vunpack.c.l.b16 %v2299
        %v2451 = vunpack.c.l.b16 %v2300
        %v2452 = vunpack.c.l.b16 %v2301
        %v2453 = vunpack.c.l.b16 %v2302
        %v2454 = vunpack.c.l.b16 %v2303
        %v2455 = vunpack.c.l.b16 %v2304
        %v2456 = vunpack.c.l.b16 %v2305
        %v2457 = vunpack.c.l.b16 %v2306
        %v2458 = vunpack.c.l.b16 %v2307
        %v2459 = vunpack.c.l.b16 %v2308
        %v2460 = vunpack.c.l.b16 %v2309
        %v2461 = vunpack.c.l.b16 %v2310
        %v2462 = vunpack.c.l.b16 %v2311
        %v2463 = vunpack.c.l.b16 %v2312
        %v2464 = vunpack.c.l.b16 %v2313
        %v2465 = vunpack.c.l.b16 %v2314
        %v2466 = vunpack.c.l.b16 %v2315
        %v2467 = vunpack.c.l.b16 %v2316
        %v2468 = vunpack.c.l.b16 %v2317
        %v2469 = vunpack.c.l.b16 %v2318
        %v2470 = vunpack.c.l.b16 %v2319
        %v2471 = vunpack.c.l.b16 %v2320
        %v2472 = vunpack.c.l.b16 %v2321
        %v2473 = vunpack.c.l.b16 %v2322
        %v2474 = vunpack.c.l.b16 %v2323
        %v2475 = vunpack.c.l.b16 %v2324
        %v2476 = vunpack.c.l.b16 %v2325
        %v2477 = vunpack.c.l.b16 %v2326
        %v2478 = vunpack.c.l.b16 %v2327
        %v2479 = vpack.c.b16 %v2408, %v2407
        %v2480 = vpack.c.b16 %v2410, %v2409
        %v2481 = vpack.c.b16 %v2412, %v2411
        %v2482 = vpack.c.b16 %v2414, %v2413
        %v2483 = vpack.c.b16 %v2416, %v2415
        %v2484 = vpack.c.b16 %v2418, %v2417
        %v2485 = vpack.c.b16 %v2420, %v2419
        %v2486 = vpack.c.b16 %v2422, %v2421
        %v2487 = vpack.c.b16 %v2424, %v2423
        %v2488 = vpack.c.b16 %v2426, %v2425
        %v2489 = vpack.c.b16 %v2428, %v2427
        %v2490 = vpack.c.b16 %v2430, %v2429
        %v2491 = vpack.c.b16 %v2432, %v2431
        %v2492 = vpack.c.b16 %v2434, %v2433
        %v2493 = vpack.c.b16 %v2436, %v2435
        %v2494 = vpack.c.b16 %v2438, %v2437
        %v2495 = vpack.c.b16 %v2440, %v2439
        %v2496 = vpack.c.b16 %v2442, %v2441
        %v2497 = vpack.c.b16 %v2444, %v2443
        %v2498 = vpack.c.b16 %v2446, %v2445
        %v2499 = vpack.c.b16 %v2448, %v2447
        %v2500 = vpack.c.b16 %v2450, %v2449
        %v2501 = vpack.c.b16 %v2452, %v2451
        %v2502 = vpack.c.b16 %v2454, %v2453
        %v2503 = vpack.c.b16 %v2456, %v2455
        %v2504 = vpack.c.b16 %v2458, %v2457
        %v2505 = vpack.c.b16 %v2460, %v2459
        %v2506 = vpack.c.b16 %v2462, %v2461
        %v2507 = vpack.c.b16 %v2464, %v2463
        %v2508 = vpack.c.b16 %v2466, %v2465
        %v2509 = vpack.c.b16 %v2468, %v2467
        %v2510 = vpack.c.b16 %v2470, %v2469
        %v2511 = vpack.c.b16 %v2472, %v2471
        %v2512 = vpack.c.b16 %v2474, %v2473
        %v2513 = vpack.c.b16 %v2476, %v2475
        %v2514 = vpack.c.b16 %v2478, %v2477
        %v2552 = vsel %vm429, %v2220, 0
        %v2555 = vsel %vm429, %v2225, 0
        %v2558 = vsel %vm429, %v2230, 0
        %v2561 = vsel %vm429, %v2235, 0
        %v2564 = vsel %vm429, %v2240, 0
        %v2567 = vsel %vm429, %v2245, 0
        %v2570 = vsel %vm429, %v2250, 0
        %v2573 = vsel %vm429, %v2255, 0
        %2575 = vmatprep.subr.bf16.mxu0 0
        %2576 = vmatpush1.bf16.msra.mxu0 %v2479
        %2577 = vmatprep.subr.bf16.mxu0 0
        %2578 = vmatpush1.bf16.msra.mxu0 %v2480
        %2579 = vmatprep.subr.bf16.mxu0 0
        %2580 = vmatpush1.bf16.msra.mxu0 %v2481
        %2581 = vmatprep.subr.bf16.mxu0 0
        %2582 = vmatpush1.bf16.msra.mxu0 %v2482
        %2583 = vmatprep.subr.bf16.mxu0 0
        %2584 = vmatpush1.bf16.msra.mxu0 %v2483
        %2585 = vmatprep.subr.bf16.mxu0 0
        %2586 = vmatpush1.bf16.msra.mxu0 %v2484
        %2587 = vmatprep.subr.bf16.mxu0 0
        %2588 = vmatpush1.bf16.msra.mxu0 %v2485
        %2589 = vmatprep.subr.bf16.mxu0 0
        %2590 = vmatpush1.bf16.msra.mxu0 %v2486
        %2591 = vmatprep.subr.bf16.mxu0 0
        %2592 = vmatpush1.bf16.msra.mxu0 %v2487
        %2593 = vmatprep.subr.bf16.mxu0 0
        %2594 = vmatpush1.bf16.msra.mxu0 %v2488
        %2595 = vmatprep.subr.bf16.mxu0 0
        %2596 = vmatpush1.bf16.msra.mxu0 %v2489
        %2597 = vmatprep.subr.bf16.mxu0 0
        %2598 = vmatpush1.bf16.msra.mxu0 %v2490
        %2599 = vmatprep.subr.bf16.mxu0 0
        %2600 = vmatpush1.bf16.msra.mxu0 %v2491
        %2601 = vmatprep.subr.bf16.mxu0 0
        %2602 = vmatpush1.bf16.msra.mxu0 %v2492
        %2603 = vmatprep.subr.bf16.mxu0 0
        %2604 = vmatpush1.bf16.msra.mxu0 %v2493
        %2605 = vmatprep.subr.bf16.mxu0 0
        %2606 = vmatpush1.bf16.msra.mxu0 %v2494
        %2607 = vmatprep.mubr.bf16.mxu0 %v2217
        %2608 = vmatmul.mubr.bf16.gmra.mrb[0].mxu0 %v2216
        %v2609 = vpop.f32.mrb[0].mxu0
        %v2610 = vadd.f32 %v2333, %v2609
        %v2611 = vpop.f32.mrb[0].mxu0
        %v2612 = vpop.f32.mrb[0].mxu0
        %v2613 = vadd.f32 %v2333, %v2612
        %v2614 = vpop.f32.mrb[0].mxu0
        %2615 = vmatprep.mubr.bf16.mxu0 %v2222
        %2616 = vmatmul.mubr.bf16.gmra.mrb[0].mxu0 %v2221
        %v2617 = vpop.f32.mrb[0].mxu0
        %v2618 = vadd.f32 %v2333, %v2617
        %v2619 = vpop.f32.mrb[0].mxu0
        %v2620 = vpop.f32.mrb[0].mxu0
        %v2621 = vadd.f32 %v2333, %v2620
        %v2622 = vpop.f32.mrb[0].mxu0
        %2623 = vmatprep.mubr.bf16.mxu0 %v2227
        %2624 = vmatmul.mubr.bf16.gmra.mrb[0].mxu0 %v2226
        %v2625 = vpop.f32.mrb[0].mxu0
        %v2626 = vadd.f32 %v2333, %v2625
        %v2627 = vpop.f32.mrb[0].mxu0
        %v2628 = vpop.f32.mrb[0].mxu0
        %v2629 = vadd.f32 %v2333, %v2628
        %v2630 = vpop.f32.mrb[0].mxu0
        %2631 = vmatprep.mubr.bf16.mxu0 %v2232
        %2632 = vmatmul.mubr.bf16.gmra.mrb[0].mxu0 %v2231
        %v2633 = vpop.f32.mrb[0].mxu0
        %v2634 = vadd.f32 %v2333, %v2633
        %v2635 = vpop.f32.mrb[0].mxu0
        %v2636 = vpop.f32.mrb[0].mxu0
        %v2637 = vadd.f32 %v2333, %v2636
        %v2638 = vpop.f32.mrb[0].mxu0
        %2639 = vmatprep.mubr.bf16.mxu0 %v2237
        %2640 = vmatmul.mubr.bf16.gmra.mrb[0].mxu0 %v2236
        %v2641 = vpop.f32.mrb[0].mxu0
        %v2642 = vadd.f32 %v2333, %v2641
        %v2643 = vpop.f32.mrb[0].mxu0
        %v2644 = vpop.f32.mrb[0].mxu0
        %v2645 = vadd.f32 %v2333, %v2644
        %v2646 = vpop.f32.mrb[0].mxu0
        %2647 = vmatprep.mubr.bf16.mxu0 %v2242
        %2648 = vmatmul.mubr.bf16.gmra.mrb[0].mxu0 %v2241
        %v2649 = vpop.f32.mrb[0].mxu0
        %v2650 = vadd.f32 %v2333, %v2649
        %v2651 = vpop.f32.mrb[0].mxu0
        %v2652 = vpop.f32.mrb[0].mxu0
        %v2653 = vadd.f32 %v2333, %v2652
        %v2654 = vpop.f32.mrb[0].mxu0
        %2655 = vmatprep.mubr.bf16.mxu0 %v2247
        %2656 = vmatmul.mubr.bf16.gmra.mrb[0].mxu0 %v2246
        %v2657 = vpop.f32.mrb[0].mxu0
        %v2658 = vadd.f32 %v2333, %v2657
        %v2659 = vpop.f32.mrb[0].mxu0
        %v2660 = vpop.f32.mrb[0].mxu0
        %v2661 = vadd.f32 %v2333, %v2660
        %v2662 = vpop.f32.mrb[0].mxu0
        %2663 = vmatprep.mubr.bf16.mxu0 %v2252
        %2664 = vmatmul.mubr.bf16.gmra.mrb[0].mxu0 %v2251
        %v2665 = vpop.f32.mrb[0].mxu0
        %v2666 = vadd.f32 %v2333, %v2665
        %v2667 = vpop.f32.mrb[0].mxu0
        %v2668 = vpop.f32.mrb[0].mxu0
        %v2669 = vadd.f32 %v2333, %v2668
        %v2670 = vpop.f32.mrb[0].mxu0
        %2671 = vdwg.mxu0
        %2672 = vmatprep.subr.bf16.mxu0 0
        %2673 = vmatpush1.bf16.msra.mxu0 %v2495
        %2674 = vmatprep.subr.bf16.mxu0 0
        %2675 = vmatpush1.bf16.msra.mxu0 %v2496
        %2676 = vmatprep.subr.bf16.mxu0 0
        %2677 = vmatpush1.bf16.msra.mxu0 %v2497
        %2678 = vmatprep.subr.bf16.mxu0 0
        %2679 = vmatpush1.bf16.msra.mxu0 %v2498
        %2680 = vmatprep.subr.bf16.mxu0 0
        %2681 = vmatpush1.bf16.msra.mxu0 %v2499
        %2682 = vmatprep.subr.bf16.mxu0 0
        %2683 = vmatpush1.bf16.msra.mxu0 %v2500
        %2684 = vmatprep.subr.bf16.mxu0 0
        %2685 = vmatpush1.bf16.msra.mxu0 %v2501
        %2686 = vmatprep.subr.bf16.mxu0 0
        %2687 = vmatpush1.bf16.msra.mxu0 %v2502
        %2688 = vmatprep.subr.bf16.mxu0 0
        %2689 = vmatpush1.bf16.msra.mxu0 %v2503
        %2690 = vmatprep.subr.bf16.mxu0 0
        %2691 = vmatpush1.bf16.msra.mxu0 %v2504
        %2692 = vmatprep.subr.bf16.mxu0 0
        %2693 = vmatpush1.bf16.msra.mxu0 %v2505
        %2694 = vmatprep.subr.bf16.mxu0 0
        %2695 = vmatpush1.bf16.msra.mxu0 %v2506
        %2696 = vmatprep.subr.bf16.mxu0 0
        %2697 = vmatpush1.bf16.msra.mxu0 %v2507
        %2698 = vmatprep.subr.bf16.mxu0 0
        %2699 = vmatpush1.bf16.msra.mxu0 %v2508
        %2700 = vmatprep.subr.bf16.mxu0 0
        %2701 = vmatpush1.bf16.msra.mxu0 %v2509
        %2702 = vmatprep.subr.bf16.mxu0 0
        %2703 = vmatpush1.bf16.msra.mxu0 %v2510
        %2704 = vmatprep.mubr.bf16.mxu0 %v2219
        %2705 = vmatmul.mubr.bf16.gmra.mrb[0].mxu0 %v2218
        %v2706 = vpop.f32.mrb[0].mxu0
        %v2707 = vadd.f32 %v2610, %v2706
        %v2708 = vpop.f32.mrb[0].mxu0
        %v2709 = vpop.f32.mrb[0].mxu0
        %v2710 = vadd.f32 %v2613, %v2709
        %v2711 = vpop.f32.mrb[0].mxu0
        %2712 = vmatprep.mubr.bf16.mxu0 %v2224
        %2713 = vmatmul.mubr.bf16.gmra.mrb[0].mxu0 %v2223
        %v2714 = vpop.f32.mrb[0].mxu0
        %v2715 = vadd.f32 %v2618, %v2714
        %v2716 = vpop.f32.mrb[0].mxu0
        %v2717 = vpop.f32.mrb[0].mxu0
        %v2718 = vadd.f32 %v2621, %v2717
        %v2719 = vpop.f32.mrb[0].mxu0
        %2720 = vmatprep.mubr.bf16.mxu0 %v2229
        %2721 = vmatmul.mubr.bf16.gmra.mrb[0].mxu0 %v2228
        %v2722 = vpop.f32.mrb[0].mxu0
        %v2723 = vadd.f32 %v2626, %v2722
        %v2724 = vpop.f32.mrb[0].mxu0
        %v2725 = vpop.f32.mrb[0].mxu0
        %v2726 = vadd.f32 %v2629, %v2725
        %v2727 = vpop.f32.mrb[0].mxu0
        %2728 = vmatprep.mubr.bf16.mxu0 %v2234
        %2729 = vmatmul.mubr.bf16.gmra.mrb[0].mxu0 %v2233
        %v2730 = vpop.f32.mrb[0].mxu0
        %v2731 = vadd.f32 %v2634, %v2730
        %v2732 = vpop.f32.mrb[0].mxu0
        %v2733 = vpop.f32.mrb[0].mxu0
        %v2734 = vadd.f32 %v2637, %v2733
        %v2735 = vpop.f32.mrb[0].mxu0
        %2736 = vmatprep.mubr.bf16.mxu0 %v2239
        %2737 = vmatmul.mubr.bf16.gmra.mrb[0].mxu0 %v2238
        %v2738 = vpop.f32.mrb[0].mxu0
        %v2739 = vadd.f32 %v2642, %v2738
        %v2740 = vpop.f32.mrb[0].mxu0
        %v2741 = vpop.f32.mrb[0].mxu0
        %v2742 = vadd.f32 %v2645, %v2741
        %v2743 = vpop.f32.mrb[0].mxu0
        %2744 = vmatprep.mubr.bf16.mxu0 %v2244
        %2745 = vmatmul.mubr.bf16.gmra.mrb[0].mxu0 %v2243
        %v2746 = vpop.f32.mrb[0].mxu0
        %v2747 = vadd.f32 %v2650, %v2746
        %v2748 = vpop.f32.mrb[0].mxu0
        %v2749 = vpop.f32.mrb[0].mxu0
        %v2750 = vadd.f32 %v2653, %v2749
        %v2751 = vpop.f32.mrb[0].mxu0
        %2752 = vmatprep.mubr.bf16.mxu0 %v2249
        %2753 = vmatmul.mubr.bf16.gmra.mrb[0].mxu0 %v2248
        %v2754 = vpop.f32.mrb[0].mxu0
        %v2755 = vadd.f32 %v2658, %v2754
        %v2756 = vpop.f32.mrb[0].mxu0
        %v2757 = vpop.f32.mrb[0].mxu0
        %v2758 = vadd.f32 %v2661, %v2757
        %v2759 = vpop.f32.mrb[0].mxu0
        %2760 = vmatprep.mubr.bf16.mxu0 %v2254
        %2761 = vmatmul.mubr.bf16.gmra.mrb[0].mxu0 %v2253
        %v2762 = vpop.f32.mrb[0].mxu0
        %v2763 = vadd.f32 %v2666, %v2762
        %v2764 = vpop.f32.mrb[0].mxu0
        %v2765 = vpop.f32.mrb[0].mxu0
        %v2766 = vadd.f32 %v2669, %v2765
        %v2767 = vpop.f32.mrb[0].mxu0
        %2768 = vdwg.mxu0
        %2769 = vmatprep.subr.bf16.mxu0 0
        %2770 = vmatpush1.bf16.msra.mxu0 %v2511
        %2771 = vmatprep.subr.bf16.mxu0 0
        %2772 = vmatpush1.bf16.msra.mxu0 %v2512
        %2773 = vmatprep.subr.bf16.mxu0 0
        %2774 = vmatpush1.bf16.msra.mxu0 %v2513
        %2775 = vmatprep.subr.bf16.mxu0 0
        %2776 = vmatpush1.bf16.msra.mxu0 %v2514
        %2777 = vmatprep.subr.bf16.mxu0 0
        %2778 = vmatpush1.bf16.msra.mxu0 0
        %2779 = vmatprep.subr.bf16.mxu0 0
        %2780 = vmatpush1.bf16.msra.mxu0 0
        %2781 = vmatprep.subr.bf16.mxu0 0
        %2782 = vmatpush1.bf16.msra.mxu0 0
        %2783 = vmatprep.subr.bf16.mxu0 0
        %2784 = vmatpush1.bf16.msra.mxu0 0
        %2785 = vmatprep.subr.bf16.mxu0 0
        %2786 = vmatpush1.bf16.msra.mxu0 0
        %2787 = vmatprep.subr.bf16.mxu0 0
        %2788 = vmatpush1.bf16.msra.mxu0 0
        %2789 = vmatprep.subr.bf16.mxu0 0
        %2790 = vmatpush1.bf16.msra.mxu0 0
        %2791 = vmatprep.subr.bf16.mxu0 0
        %2792 = vmatpush1.bf16.msra.mxu0 0
        %2793 = vmatprep.subr.bf16.mxu0 0
        %2794 = vmatpush1.bf16.msra.mxu0 0
        %2795 = vmatprep.subr.bf16.mxu0 0
        %2796 = vmatpush1.bf16.msra.mxu0 0
        %2797 = vmatprep.subr.bf16.mxu0 0
        %2798 = vmatpush1.bf16.msra.mxu0 0
        %2799 = vmatprep.subr.bf16.mxu0 0
        %2800 = vmatpush1.bf16.msra.mxu0 0
        %2801 = vmatprep.mubr.bf16.mxu0 0
        %2802 = vmatmul.mubr.bf16.gmra.mrb[0].mxu0 %v2552
        %v2803 = vpop.f32.mrb[0].mxu0
        %v2804 = vadd.f32 %v2707, %v2803
        %v2805 = vpop.f32.mrb[0].mxu0
        %v2806 = vpop.f32.mrb[0].mxu0
        %v2807 = vadd.f32 %v2710, %v2806
        %v2808 = vpop.f32.mrb[0].mxu0
        %2809 = vmatprep.mubr.bf16.mxu0 0
        %2810 = vmatmul.mubr.bf16.gmra.mrb[0].mxu0 %v2555
        %v2811 = vpop.f32.mrb[0].mxu0
        %v2812 = vadd.f32 %v2715, %v2811
        %v2813 = vpop.f32.mrb[0].mxu0
        %v2814 = vpop.f32.mrb[0].mxu0
        %v2815 = vadd.f32 %v2718, %v2814
        %v2816 = vpop.f32.mrb[0].mxu0
        %2817 = vmatprep.mubr.bf16.mxu0 0
        %2818 = vmatmul.mubr.bf16.gmra.mrb[0].mxu0 %v2558
        %v2819 = vpop.f32.mrb[0].mxu0
        %v2820 = vadd.f32 %v2723, %v2819
        %v2821 = vpop.f32.mrb[0].mxu0
        %v2822 = vpop.f32.mrb[0].mxu0
        %v2823 = vadd.f32 %v2726, %v2822
        %v2824 = vpop.f32.mrb[0].mxu0
        %2825 = vmatprep.mubr.bf16.mxu0 0
        %2826 = vmatmul.mubr.bf16.gmra.mrb[0].mxu0 %v2561
        %v2827 = vpop.f32.mrb[0].mxu0
        %v2828 = vadd.f32 %v2731, %v2827
        %v2829 = vpop.f32.mrb[0].mxu0
        %v2830 = vpop.f32.mrb[0].mxu0
        %v2831 = vadd.f32 %v2734, %v2830
        %v2832 = vpop.f32.mrb[0].mxu0
        %2833 = vmatprep.mubr.bf16.mxu0 0
        %2834 = vmatmul.mubr.bf16.gmra.mrb[0].mxu0 %v2564
        %v2835 = vpop.f32.mrb[0].mxu0
        %v2836 = vadd.f32 %v2739, %v2835
        %v2837 = vpop.f32.mrb[0].mxu0
        %v2838 = vpop.f32.mrb[0].mxu0
        %v2839 = vadd.f32 %v2742, %v2838
        %v2840 = vpop.f32.mrb[0].mxu0
        %2841 = vmatprep.mubr.bf16.mxu0 0
        %2842 = vmatmul.mubr.bf16.gmra.mrb[0].mxu0 %v2567
        %v2843 = vpop.f32.mrb[0].mxu0
        %v2844 = vadd.f32 %v2747, %v2843
        %v2845 = vpop.f32.mrb[0].mxu0
        %v2846 = vpop.f32.mrb[0].mxu0
        %v2847 = vadd.f32 %v2750, %v2846
        %v2848 = vpop.f32.mrb[0].mxu0
        %2849 = vmatprep.mubr.bf16.mxu0 0
        %2850 = vmatmul.mubr.bf16.gmra.mrb[0].mxu0 %v2570
        %v2851 = vpop.f32.mrb[0].mxu0
        %v2852 = vadd.f32 %v2755, %v2851
        %v2853 = vpop.f32.mrb[0].mxu0
        %v2854 = vpop.f32.mrb[0].mxu0
        %v2855 = vadd.f32 %v2758, %v2854
        %v2856 = vpop.f32.mrb[0].mxu0
        %2857 = vmatprep.mubr.bf16.mxu0 0
        %2858 = vmatmul.mubr.bf16.gmra.mrb[0].mxu0 %v2573
        %v2859 = vpop.f32.mrb[0].mxu0
        %v2860 = vadd.f32 %v2763, %v2859
        %v2861 = vpop.f32.mrb[0].mxu0
        %v2862 = vpop.f32.mrb[0].mxu0
        %v2863 = vadd.f32 %v2766, %v2862
        %v2864 = vpop.f32.mrb[0].mxu0
        %2865 = vdwg.mxu0
        %v2866 = vmax.f32 %v2804, 0.0
        %v2867 = vmax.f32 %v2807, 0.0
        %v2868 = vmax.f32 %v2812, 0.0
        %v2869 = vmax.f32 %v2815, 0.0
        %v2870 = vmax.f32 %v2820, 0.0
        %v2871 = vmax.f32 %v2823, 0.0
        %v2872 = vmax.f32 %v2828, 0.0
        %v2873 = vmax.f32 %v2831, 0.0
        %v2874 = vmax.f32 %v2836, 0.0
        %v2875 = vmax.f32 %v2839, 0.0
        %v2876 = vmax.f32 %v2844, 0.0
        %v2877 = vmax.f32 %v2847, 0.0
        %v2878 = vmax.f32 %v2852, 0.0
        %v2879 = vmax.f32 %v2855, 0.0
        %v2880 = vmax.f32 %v2860, 0.0
        %v2881 = vmax.f32 %v2863, 0.0
        %2882 = vst.msk [vmem:[%s1633 + $0x1] sm:$0xff] %vm429, %v2866
        %2883 = vst.msk [vmem:[%s1633 + $0x9] sm:$0xff] %vm429, %v2867
        %2884 = vst.msk [vmem:[%s1633 + $0x19] sm:$0xff] %vm429, %v2868
        %2885 = vst.msk [vmem:[%s1633 + $0x21] sm:$0xff] %vm429, %v2869
        %2886 = vst.msk [vmem:[%s1633 + $0x31] sm:$0xff] %vm429, %v2870
        %2887 = vst.msk [vmem:[%s1633 + $0x39] sm:$0xff] %vm429, %v2871
        %2888 = vst.msk [vmem:[%s1633 + $0x49] sm:$0xff] %vm429, %v2872
        %2889 = vst.msk [vmem:[%s1633 + $0x51] sm:$0xff] %vm429, %v2873
        %2890 = vst.msk [vmem:[%s1633 + $0x61] sm:$0xff] %vm429, %v2874
        %2891 = vst.msk [vmem:[%s1633 + $0x69] sm:$0xff] %vm429, %v2875
        %2892 = vst.msk [vmem:[%s1633 + $0x79] sm:$0xff] %vm429, %v2876
        %2893 = vst.msk [vmem:[%s1633 + $0x81] sm:$0xff] %vm429, %v2877
        %2894 = vst.msk [vmem:[%s1633 + $0x91] sm:$0xff] %vm429, %v2878
        %2895 = vst.msk [vmem:[%s1633 + $0x99] sm:$0xff] %vm429, %v2879
        %2896 = vst.msk [vmem:[%s1633 + $0xa9] sm:$0xff] %vm429, %v2880
        %2897 = vst.msk [vmem:[%s1633 + $0xb1] sm:$0xff] %vm429, %v2881
        %v2898 = vld [vmem:[#allocation3] sm:$0xff]
        %v2899 = vld [vmem:[#allocation3 + $0x8] sm:$0xff]
        %v2900 = vld [vmem:[#allocation3 + $0x18] sm:$0xff]
        %v2901 = vld [vmem:[#allocation3 + $0x20] sm:$0xff]
        %v2902 = vld [vmem:[#allocation3 + $0x30] sm:$0xff]
        %v2903 = vld [vmem:[#allocation3 + $0x38] sm:$0xff]
        %v2904 = vld [vmem:[#allocation3 + $0x48] sm:$0xff]
        %v2905 = vld [vmem:[#allocation3 + $0x50] sm:$0xff]
        %v2906 = vld [vmem:[#allocation3 + $0x60] sm:$0xff]
        %v2907 = vld [vmem:[#allocation3 + $0x68] sm:$0xff]
        %v2908 = vld [vmem:[#allocation3 + $0x78] sm:$0xff]
        %v2909 = vld [vmem:[#allocation3 + $0x80] sm:$0xff]
        %v2910 = vld [vmem:[#allocation3 + $0x90] sm:$0xff]
        %v2911 = vld [vmem:[#allocation3 + $0x98] sm:$0xff]
        %v2912 = vld [vmem:[#allocation3 + $0xa8] sm:$0xff]
        %v2913 = vld [vmem:[#allocation3 + $0xb0] sm:$0xff]
        %v2914 = vld [vmem:[#allocation3 + $0xc0] sm:$0xff]
        %v2915 = vld [vmem:[#allocation3 + $0xc8] sm:$0xff]
        %v2916 = vld [vmem:[#allocation3 + $0xd8] sm:$0xff]
        %v2917 = vld [vmem:[#allocation3 + $0xe0] sm:$0xff]
        %v2918 = vld [vmem:[#allocation3 + $0x1] sm:$0xff]
        %v2919 = vld [vmem:[#allocation3 + $0x9] sm:$0xff]
        %v2920 = vld [vmem:[#allocation3 + $0x19] sm:$0xff]
        %v2921 = vld [vmem:[#allocation3 + $0x21] sm:$0xff]
        %v2922 = vld [vmem:[#allocation3 + $0x31] sm:$0xff]
        %v2923 = vld [vmem:[#allocation3 + $0x39] sm:$0xff]
        %v2924 = vld [vmem:[#allocation3 + $0x49] sm:$0xff]
        %v2925 = vld [vmem:[#allocation3 + $0x51] sm:$0xff]
        %v2926 = vld [vmem:[#allocation3 + $0x61] sm:$0xff]
        %v2927 = vld [vmem:[#allocation3 + $0x69] sm:$0xff]
        %v2928 = vld [vmem:[#allocation3 + $0x79] sm:$0xff]
        %v2929 = vld [vmem:[#allocation3 + $0x81] sm:$0xff]
        %v2930 = vld [vmem:[#allocation3 + $0x91] sm:$0xff]
        %v2931 = vld [vmem:[#allocation3 + $0x99] sm:$0xff]
        %v2932 = vld [vmem:[#allocation3 + $0xa9] sm:$0xff]
        %v2933 = vld [vmem:[#allocation3 + $0xb1] sm:$0xff]
        %v2934 = vld [vmem:[#allocation3 + $0xc1] sm:$0xff]
        %v2935 = vld [vmem:[#allocation3 + $0xc9] sm:$0xff]
        %v2936 = vld [vmem:[#allocation3 + $0xd9] sm:$0xff]
        %v2937 = vld [vmem:[#allocation3 + $0xe1] sm:$0xff]
        %v2938 = vmax.f32 %v2898, %v2918
        %v2939 = vmax.f32 %v2899, %v2919
        %v2940 = vmax.f32 %v2900, %v2920
        %v2941 = vmax.f32 %v2901, %v2921
        %v2942 = vmax.f32 %v2902, %v2922
        %v2943 = vmax.f32 %v2903, %v2923
        %v2944 = vmax.f32 %v2904, %v2924
        %v2945 = vmax.f32 %v2905, %v2925
        %v2946 = vmax.f32 %v2906, %v2926
        %v2947 = vmax.f32 %v2907, %v2927
        %v2948 = vmax.f32 %v2908, %v2928
        %v2949 = vmax.f32 %v2909, %v2929
        %v2950 = vmax.f32 %v2910, %v2930
        %v2951 = vmax.f32 %v2911, %v2931
        %v2952 = vmax.f32 %v2912, %v2932
        %v2953 = vmax.f32 %v2913, %v2933
        %v2954 = vmax.f32 %v2914, %v2934
        %v2955 = vmax.f32 %v2915, %v2935
        %v2956 = vmax.f32 %v2916, %v2936
        %v2957 = vmax.f32 %v2917, %v2937
        %v2958 = vld [vmem:[#allocation3 + $0x2] sm:$0xff]
        %v2959 = vld [vmem:[#allocation3 + $0xa] sm:$0xff]
        %v2960 = vld [vmem:[#allocation3 + $0x1a] sm:$0xff]
        %v2961 = vld [vmem:[#allocation3 + $0x22] sm:$0xff]
        %v2962 = vld [vmem:[#allocation3 + $0x32] sm:$0xff]
        %v2963 = vld [vmem:[#allocation3 + $0x3a] sm:$0xff]
        %v2964 = vld [vmem:[#allocation3 + $0x4a] sm:$0xff]
        %v2965 = vld [vmem:[#allocation3 + $0x52] sm:$0xff]
        %v2966 = vld [vmem:[#allocation3 + $0x62] sm:$0xff]
        %v2967 = vld [vmem:[#allocation3 + $0x6a] sm:$0xff]
        %v2968 = vld [vmem:[#allocation3 + $0x7a] sm:$0xff]
        %v2969 = vld [vmem:[#allocation3 + $0x82] sm:$0xff]
        %v2970 = vld [vmem:[#allocation3 + $0x92] sm:$0xff]
        %v2971 = vld [vmem:[#allocation3 + $0x9a] sm:$0xff]
        %v2972 = vld [vmem:[#allocation3 + $0xaa] sm:$0xff]
        %v2973 = vld [vmem:[#allocation3 + $0xb2] sm:$0xff]
        %v2974 = vld [vmem:[#allocation3 + $0xc2] sm:$0xff]
        %v2975 = vld [vmem:[#allocation3 + $0xca] sm:$0xff]
        %v2976 = vld [vmem:[#allocation3 + $0xda] sm:$0xff]
        %v2977 = vld [vmem:[#allocation3 + $0xe2] sm:$0xff]
        %v2978 = vmax.f32 %v2938, %v2958
        %v2979 = vmax.f32 %v2939, %v2959
        %v2980 = vmax.f32 %v2940, %v2960
        %v2981 = vmax.f32 %v2941, %v2961
        %v2982 = vmax.f32 %v2942, %v2962
        %v2983 = vmax.f32 %v2943, %v2963
        %v2984 = vmax.f32 %v2944, %v2964
        %v2985 = vmax.f32 %v2945, %v2965
        %v2986 = vmax.f32 %v2946, %v2966
        %v2987 = vmax.f32 %v2947, %v2967
        %v2988 = vmax.f32 %v2948, %v2968
        %v2989 = vmax.f32 %v2949, %v2969
        %v2990 = vmax.f32 %v2950, %v2970
        %v2991 = vmax.f32 %v2951, %v2971
        %v2992 = vmax.f32 %v2952, %v2972
        %v2993 = vmax.f32 %v2953, %v2973
        %v2994 = vmax.f32 %v2954, %v2974
        %v2995 = vmax.f32 %v2955, %v2975
        %v2996 = vmax.f32 %v2956, %v2976
        %v2997 = vmax.f32 %v2957, %v2977
        %v2998 = vmax.f32 %v2978, %v2980
        %v2999 = vmax.f32 %v2979, %v2981
        %v3000 = vmax.f32 %v2980, %v2982
        %v3001 = vmax.f32 %v2981, %v2983
        %v3002 = vmax.f32 %v2982, %v2984
        %v3003 = vmax.f32 %v2983, %v2985
        %v3004 = vmax.f32 %v2984, %v2986
        %v3005 = vmax.f32 %v2985, %v2987
        %v3006 = vmax.f32 %v2986, %v2988
        %v3007 = vmax.f32 %v2987, %v2989
        %v3008 = vmax.f32 %v2988, %v2990
        %v3009 = vmax.f32 %v2989, %v2991
        %v3010 = vmax.f32 %v2990, %v2992
        %v3011 = vmax.f32 %v2991, %v2993
        %v3012 = vmax.f32 %v2992, %v2994
        %v3013 = vmax.f32 %v2993, %v2995
        %v3014 = vmax.f32 %v2998, %v2982
        %v3015 = vmax.f32 %v2999, %v2983
        %v3016 = vmax.f32 %v3000, %v2984
        %v3017 = vmax.f32 %v3001, %v2985
        %v3018 = vmax.f32 %v3002, %v2986
        %v3019 = vmax.f32 %v3003, %v2987
        %v3020 = vmax.f32 %v3004, %v2988
        %v3021 = vmax.f32 %v3005, %v2989
        %v3022 = vmax.f32 %v3006, %v2990
        %v3023 = vmax.f32 %v3007, %v2991
        %v3024 = vmax.f32 %v3008, %v2992
        %v3025 = vmax.f32 %v3009, %v2993
        %v3026 = vmax.f32 %v3010, %v2994
        %v3027 = vmax.f32 %v3011, %v2995
        %v3028 = vmax.f32 %v3012, %v2996
        %v3029 = vmax.f32 %v3013, %v2997
        %v3030 = vpack.c.bf16 %v3014, %v3014
        %v3031 = vpack.c.bf16 %v3016, %v3016
        %v3032 = vpack.c.bf16 %v3018, %v3018
        %v3033 = vpack.c.bf16 %v3020, %v3020
        %v3034 = vpack.c.bf16 %v3022, %v3022
        %v3035 = vpack.c.bf16 %v3024, %v3024
        %v3036 = vpack.c.bf16 %v3026, %v3026
        %v3037 = vpack.c.bf16 %v3028, %v3028
        %v3046 = vunpack.c.l.b16 %v3030
        %v3047 = vunpack.c.l.b16 %v3031
        %v3048 = vunpack.c.l.b16 %v3032
        %v3049 = vunpack.c.l.b16 %v3033
        %v3050 = vunpack.c.l.b16 %v3034
        %v3051 = vunpack.c.l.b16 %v3035
        %v3052 = vunpack.c.l.b16 %v3036
        %v3053 = vunpack.c.l.b16 %v3037
        %v3054 = vpack.c.b16 %v3046, %v3046
        %v3055 = vpack.c.b16 %v3047, %v3047
        %v3056 = vpack.c.b16 %v3048, %v3048
        %v3057 = vpack.c.b16 %v3049, %v3049
        %v3058 = vpack.c.b16 %v3050, %v3050
        %v3059 = vpack.c.b16 %v3051, %v3051
        %v3060 = vpack.c.b16 %v3052, %v3052
        %v3061 = vpack.c.b16 %v3053, %v3053
        %v3062 = vunpack.c.l.b16 %v3054
        %v3063 = vunpack.c.l.b16 %v3055
        %v3064 = vunpack.c.l.b16 %v3056
        %v3065 = vunpack.c.l.b16 %v3057
        %v3066 = vunpack.c.l.b16 %v3058
        %v3067 = vunpack.c.l.b16 %v3059
        %v3068 = vunpack.c.l.b16 %v3060
        %v3069 = vunpack.c.l.b16 %v3061
        %v3070 = vrot.slane %v3063, 7
        %vm3071 = vcmask 1041409
        %v3072 = vsel %vm3071, %v3070, %v3062
        %v3073 = vrot.slane %v3064, 6
        %vm3074 = vcmask 1042434
        %v3075 = vsel %vm3074, %v3073, %v3072
        %v3076 = vrot.slane %v3065, 5
        %vm3077 = vcmask 1043459
        %v3078 = vsel %vm3077, %v3076, %v3075
        %v3079 = vrot.slane %v3066, 4
        %vm3080 = vcmask 1044484
        %v3081 = vsel %vm3080, %v3079, %v3078
        %v3082 = vrot.slane %v3067, 3
        %vm3083 = vcmask 1045509
        %v3084 = vsel %vm3083, %v3082, %v3081
        %v3085 = vrot.slane %v3068, 2
        %vm3086 = vcmask 1046534
        %v3087 = vsel %vm3086, %v3085, %v3084
        %v3088 = vrot.slane %v3069, 1
        %vm3089 = vcmask 1047559
        %v3090 = vsel %vm3089, %v3088, %v3087
        %v3091 = vpack.c.b16 %v3090, %v3090
        %vm3093 = vcmask 519168
        %3094 = vst.msk [vmem:[#allocation6] sm:$0xf] %vm3093, %v3091
        %v3095 = vrot.slane %v3062, 1
        %v3096 = vsel %vm3071, %v3063, %v3095
        %v3097 = vrot.slane %v3064, 7
        %v3098 = vsel %vm3074, %v3097, %v3096
        %v3099 = vrot.slane %v3065, 6
        %v3100 = vsel %vm3077, %v3099, %v3098
        %v3101 = vrot.slane %v3066, 5
        %v3102 = vsel %vm3080, %v3101, %v3100
        %v3103 = vrot.slane %v3067, 4
        %v3104 = vsel %vm3083, %v3103, %v3102
        %v3105 = vrot.slane %v3068, 3
        %v3106 = vsel %vm3086, %v3105, %v3104
        %v3107 = vrot.slane %v3069, 2
        %v3108 = vsel %vm3089, %v3107, %v3106
        %v3109 = vpack.c.b16 %v3108, %v3108
        %3110 = vrot.lane.b32.xlu0 %v3109, 64
        %v3111 = vpop.permute.xlu0 %3110
        %vm3113 = vcmask 1043968
        %3114 = vst.msk [vmem:[#allocation6] sm:$0xf] %vm3113, %v3111
        %v3115 = vrot.slane %v3062, 2
        %v3116 = vrot.slane %v3063, 1
        %v3117 = vsel %vm3071, %v3116, %v3115
        %v3118 = vsel %vm3074, %v3064, %v3117
        %v3119 = vrot.slane %v3065, 7
        %v3120 = vsel %vm3077, %v3119, %v3118
        %v3121 = vrot.slane %v3066, 6
        %v3122 = vsel %vm3080, %v3121, %v3120
        %v3123 = vrot.slane %v3067, 5
        %v3124 = vsel %vm3083, %v3123, %v3122
        %v3125 = vrot.slane %v3068, 4
        %v3126 = vsel %vm3086, %v3125, %v3124
        %v3127 = vrot.slane %v3069, 3
        %v3128 = vsel %vm3089, %v3127, %v3126
        %v3129 = vpack.c.b16 %v3128, %v3128
        %3131 = vst.msk [vmem:[#allocation6 + $0x4] sm:$0xf] %vm3093, %v3129
        %v3132 = vrot.slane %v3062, 3
        %v3133 = vrot.slane %v3063, 2
        %v3134 = vsel %vm3071, %v3133, %v3132
        %v3135 = vrot.slane %v3064, 1
        %v3136 = vsel %vm3074, %v3135, %v3134
        %v3137 = vsel %vm3077, %v3065, %v3136
        %v3138 = vrot.slane %v3066, 7
        %v3139 = vsel %vm3080, %v3138, %v3137
        %v3140 = vrot.slane %v3067, 6
        %v3141 = vsel %vm3083, %v3140, %v3139
        %v3142 = vrot.slane %v3068, 5
        %v3143 = vsel %vm3086, %v3142, %v3141
        %v3144 = vrot.slane %v3069, 4
        %v3145 = vsel %vm3089, %v3144, %v3143
        %v3146 = vpack.c.b16 %v3145, %v3145
        %3147 = vrot.lane.b32.xlu0 %v3146, 64
        %v3148 = vpop.permute.xlu0 %3147
        %3150 = vst.msk [vmem:[#allocation6 + $0x4] sm:$0xf] %vm3113, %v3148
        %v3151 = vrot.slane %v3062, 4
        %v3152 = vrot.slane %v3063, 3
        %v3153 = vsel %vm3071, %v3152, %v3151
        %v3154 = vrot.slane %v3064, 2
        %v3155 = vsel %vm3074, %v3154, %v3153
        %v3156 = vrot.slane %v3065, 1
        %v3157 = vsel %vm3077, %v3156, %v3155
        %v3158 = vsel %vm3080, %v3066, %v3157
        %v3159 = vrot.slane %v3067, 7
        %v3160 = vsel %vm3083, %v3159, %v3158
        %v3161 = vrot.slane %v3068, 6
        %v3162 = vsel %vm3086, %v3161, %v3160
        %v3163 = vrot.slane %v3069, 5
        %v3164 = vsel %vm3089, %v3163, %v3162
        %v3165 = vpack.c.b16 %v3164, %v3164
        %3167 = vst.msk [vmem:[#allocation6 + $0x8] sm:$0xf] %vm3093, %v3165
        %v3168 = vrot.slane %v3062, 5
        %v3169 = vrot.slane %v3063, 4
        %v3170 = vsel %vm3071, %v3169, %v3168
        %v3171 = vrot.slane %v3064, 3
        %v3172 = vsel %vm3074, %v3171, %v3170
        %v3173 = vrot.slane %v3065, 2
        %v3174 = vsel %vm3077, %v3173, %v3172
        %v3175 = vrot.slane %v3066, 1
        %v3176 = vsel %vm3080, %v3175, %v3174
        %v3177 = vsel %vm3083, %v3067, %v3176
        %v3178 = vrot.slane %v3068, 7
        %v3179 = vsel %vm3086, %v3178, %v3177
        %v3180 = vrot.slane %v3069, 6
        %v3181 = vsel %vm3089, %v3180, %v3179
        %v3182 = vpack.c.b16 %v3181, %v3181
        %3183 = vrot.lane.b32.xlu0 %v3182, 64
        %v3184 = vpop.permute.xlu0 %3183
        %3186 = vst.msk [vmem:[#allocation6 + $0x8] sm:$0xf] %vm3113, %v3184
        %v3187 = vrot.slane %v3062, 6
        %v3188 = vrot.slane %v3063, 5
        %v3189 = vsel %vm3071, %v3188, %v3187
        %v3190 = vrot.slane %v3064, 4
        %v3191 = vsel %vm3074, %v3190, %v3189
        %v3192 = vrot.slane %v3065, 3
        %v3193 = vsel %vm3077, %v3192, %v3191
        %v3194 = vrot.slane %v3066, 2
        %v3195 = vsel %vm3080, %v3194, %v3193
        %v3196 = vrot.slane %v3067, 1
        %v3197 = vsel %vm3083, %v3196, %v3195
        %v3198 = vsel %vm3086, %v3068, %v3197
        %v3199 = vrot.slane %v3069, 7
        %v3200 = vsel %vm3089, %v3199, %v3198
        %v3201 = vpack.c.b16 %v3200, %v3200
        %3203 = vst.msk [vmem:[#allocation6 + $0xc] sm:$0xf] %vm3093, %v3201
        %v3204 = vrot.slane %v3062, 7
        %v3205 = vrot.slane %v3063, 6
        %v3206 = vsel %vm3071, %v3205, %v3204
        %v3207 = vrot.slane %v3064, 5
        %v3208 = vsel %vm3074, %v3207, %v3206
        %v3209 = vrot.slane %v3065, 4
        %v3210 = vsel %vm3077, %v3209, %v3208
        %v3211 = vrot.slane %v3066, 3
        %v3212 = vsel %vm3080, %v3211, %v3210
        %v3213 = vrot.slane %v3067, 2
        %v3214 = vsel %vm3083, %v3213, %v3212
        %v3215 = vrot.slane %v3068, 1
        %v3216 = vsel %vm3086, %v3215, %v3214
        %v3217 = vsel %vm3089, %v3069, %v3216
        %v3218 = vpack.c.b16 %v3217, %v3217
        %3219 = vrot.lane.b32.xlu0 %v3218, 64
        %v3220 = vpop.permute.xlu0 %3219
        %3222 = vst.msk [vmem:[#allocation6 + $0xc] sm:$0xf] %vm3113, %v3220
        %v3223 = vpack.c.bf16 %v3015, %v3015
        %v3224 = vpack.c.bf16 %v3017, %v3017
        %v3225 = vpack.c.bf16 %v3019, %v3019
        %v3226 = vpack.c.bf16 %v3021, %v3021
        %v3227 = vpack.c.bf16 %v3023, %v3023
        %v3228 = vpack.c.bf16 %v3025, %v3025
        %v3229 = vpack.c.bf16 %v3027, %v3027
        %v3230 = vpack.c.bf16 %v3029, %v3029
        %v3239 = vunpack.c.l.b16 %v3223
        %v3240 = vunpack.c.l.b16 %v3224
        %v3241 = vunpack.c.l.b16 %v3225
        %v3242 = vunpack.c.l.b16 %v3226
        %v3243 = vunpack.c.l.b16 %v3227
        %v3244 = vunpack.c.l.b16 %v3228
        %v3245 = vunpack.c.l.b16 %v3229
        %v3246 = vunpack.c.l.b16 %v3230
        %v3247 = vpack.c.b16 %v3239, %v3239
        %v3248 = vpack.c.b16 %v3240, %v3240
        %v3249 = vpack.c.b16 %v3241, %v3241
        %v3250 = vpack.c.b16 %v3242, %v3242
        %v3251 = vpack.c.b16 %v3243, %v3243
        %v3252 = vpack.c.b16 %v3244, %v3244
        %v3253 = vpack.c.b16 %v3245, %v3245
        %v3254 = vpack.c.b16 %v3246, %v3246
        %v3255 = vunpack.c.l.b16 %v3247
        %v3256 = vunpack.c.l.b16 %v3248
        %v3257 = vunpack.c.l.b16 %v3249
        %v3258 = vunpack.c.l.b16 %v3250
        %v3259 = vunpack.c.l.b16 %v3251
        %v3260 = vunpack.c.l.b16 %v3252
        %v3261 = vunpack.c.l.b16 %v3253
        %v3262 = vunpack.c.l.b16 %v3254
        %v3263 = vrot.slane %v3256, 7
        %v3264 = vsel %vm3071, %v3263, %v3255
        %v3265 = vrot.slane %v3257, 6
        %v3266 = vsel %vm3074, %v3265, %v3264
        %v3267 = vrot.slane %v3258, 5
        %v3268 = vsel %vm3077, %v3267, %v3266
        %v3269 = vrot.slane %v3259, 4
        %v3270 = vsel %vm3080, %v3269, %v3268
        %v3271 = vrot.slane %v3260, 3
        %v3272 = vsel %vm3083, %v3271, %v3270
        %v3273 = vrot.slane %v3261, 2
        %v3274 = vsel %vm3086, %v3273, %v3272
        %v3275 = vrot.slane %v3262, 1
        %v3276 = vsel %vm3089, %v3275, %v3274
        %v3277 = vpack.c.b16 %v3276, %v3276
        %3279 = vst.msk [vmem:[#allocation6 + $0x10] sm:$0xf] %vm3093, %v3277
        %v3280 = vrot.slane %v3255, 1
        %v3281 = vsel %vm3071, %v3256, %v3280
        %v3282 = vrot.slane %v3257, 7
        %v3283 = vsel %vm3074, %v3282, %v3281
        %v3284 = vrot.slane %v3258, 6
        %v3285 = vsel %vm3077, %v3284, %v3283
        %v3286 = vrot.slane %v3259, 5
        %v3287 = vsel %vm3080, %v3286, %v3285
        %v3288 = vrot.slane %v3260, 4
        %v3289 = vsel %vm3083, %v3288, %v3287
        %v3290 = vrot.slane %v3261, 3
        %v3291 = vsel %vm3086, %v3290, %v3289
        %v3292 = vrot.slane %v3262, 2
        %v3293 = vsel %vm3089, %v3292, %v3291
        %v3294 = vpack.c.b16 %v3293, %v3293
        %3295 = vrot.lane.b32.xlu0 %v3294, 64
        %v3296 = vpop.permute.xlu0 %3295
        %3298 = vst.msk [vmem:[#allocation6 + $0x10] sm:$0xf] %vm3113, %v3296
        %v3299 = vrot.slane %v3255, 2
        %v3300 = vrot.slane %v3256, 1
        %v3301 = vsel %vm3071, %v3300, %v3299
        %v3302 = vsel %vm3074, %v3257, %v3301
        %v3303 = vrot.slane %v3258, 7
        %v3304 = vsel %vm3077, %v3303, %v3302
        %v3305 = vrot.slane %v3259, 6
        %v3306 = vsel %vm3080, %v3305, %v3304
        %v3307 = vrot.slane %v3260, 5
        %v3308 = vsel %vm3083, %v3307, %v3306
        %v3309 = vrot.slane %v3261, 4
        %v3310 = vsel %vm3086, %v3309, %v3308
        %v3311 = vrot.slane %v3262, 3
        %v3312 = vsel %vm3089, %v3311, %v3310
        %v3313 = vpack.c.b16 %v3312, %v3312
        %3315 = vst.msk [vmem:[#allocation6 + $0x14] sm:$0xf] %vm3093, %v3313
        %v3316 = vrot.slane %v3255, 3
        %v3317 = vrot.slane %v3256, 2
        %v3318 = vsel %vm3071, %v3317, %v3316
        %v3319 = vrot.slane %v3257, 1
        %v3320 = vsel %vm3074, %v3319, %v3318
        %v3321 = vsel %vm3077, %v3258, %v3320
        %v3322 = vrot.slane %v3259, 7
        %v3323 = vsel %vm3080, %v3322, %v3321
        %v3324 = vrot.slane %v3260, 6
        %v3325 = vsel %vm3083, %v3324, %v3323
        %v3326 = vrot.slane %v3261, 5
        %v3327 = vsel %vm3086, %v3326, %v3325
        %v3328 = vrot.slane %v3262, 4
        %v3329 = vsel %vm3089, %v3328, %v3327
        %v3330 = vpack.c.b16 %v3329, %v3329
        %3331 = vrot.lane.b32.xlu0 %v3330, 64
        %v3332 = vpop.permute.xlu0 %3331
        %3334 = vst.msk [vmem:[#allocation6 + $0x14] sm:$0xf] %vm3113, %v3332
        %v3335 = vrot.slane %v3255, 4
        %v3336 = vrot.slane %v3256, 3
        %v3337 = vsel %vm3071, %v3336, %v3335
        %v3338 = vrot.slane %v3257, 2
        %v3339 = vsel %vm3074, %v3338, %v3337
        %v3340 = vrot.slane %v3258, 1
        %v3341 = vsel %vm3077, %v3340, %v3339
        %v3342 = vsel %vm3080, %v3259, %v3341
        %v3343 = vrot.slane %v3260, 7
        %v3344 = vsel %vm3083, %v3343, %v3342
        %v3345 = vrot.slane %v3261, 6
        %v3346 = vsel %vm3086, %v3345, %v3344
        %v3347 = vrot.slane %v3262, 5
        %v3348 = vsel %vm3089, %v3347, %v3346
        %v3349 = vpack.c.b16 %v3348, %v3348
        %3351 = vst.msk [vmem:[#allocation6 + $0x18] sm:$0xf] %vm3093, %v3349
        %v3352 = vrot.slane %v3255, 5
        %v3353 = vrot.slane %v3256, 4
        %v3354 = vsel %vm3071, %v3353, %v3352
        %v3355 = vrot.slane %v3257, 3
        %v3356 = vsel %vm3074, %v3355, %v3354
        %v3357 = vrot.slane %v3258, 2
        %v3358 = vsel %vm3077, %v3357, %v3356
        %v3359 = vrot.slane %v3259, 1
        %v3360 = vsel %vm3080, %v3359, %v3358
        %v3361 = vsel %vm3083, %v3260, %v3360
        %v3362 = vrot.slane %v3261, 7
        %v3363 = vsel %vm3086, %v3362, %v3361
        %v3364 = vrot.slane %v3262, 6
        %v3365 = vsel %vm3089, %v3364, %v3363
        %v3366 = vpack.c.b16 %v3365, %v3365
        %3367 = vrot.lane.b32.xlu0 %v3366, 64
        %v3368 = vpop.permute.xlu0 %3367
        %3370 = vst.msk [vmem:[#allocation6 + $0x18] sm:$0xf] %vm3113, %v3368
        %v3371 = vrot.slane %v3255, 6
        %v3372 = vrot.slane %v3256, 5
        %v3373 = vsel %vm3071, %v3372, %v3371
        %v3374 = vrot.slane %v3257, 4
        %v3375 = vsel %vm3074, %v3374, %v3373
        %v3376 = vrot.slane %v3258, 3
        %v3377 = vsel %vm3077, %v3376, %v3375
        %v3378 = vrot.slane %v3259, 2
        %v3379 = vsel %vm3080, %v3378, %v3377
        %v3380 = vrot.slane %v3260, 1
        %v3381 = vsel %vm3083, %v3380, %v3379
        %v3382 = vsel %vm3086, %v3261, %v3381
        %v3383 = vrot.slane %v3262, 7
        %v3384 = vsel %vm3089, %v3383, %v3382
        %v3385 = vpack.c.b16 %v3384, %v3384
        %3387 = vst.msk [vmem:[#allocation6 + $0x1c] sm:$0xf] %vm3093, %v3385
        %v3388 = vrot.slane %v3255, 7
        %v3389 = vrot.slane %v3256, 6
        %v3390 = vsel %vm3071, %v3389, %v3388
        %v3391 = vrot.slane %v3257, 5
        %v3392 = vsel %vm3074, %v3391, %v3390
        %v3393 = vrot.slane %v3258, 4
        %v3394 = vsel %vm3077, %v3393, %v3392
        %v3395 = vrot.slane %v3259, 3
        %v3396 = vsel %vm3080, %v3395, %v3394
        %v3397 = vrot.slane %v3260, 2
        %v3398 = vsel %vm3083, %v3397, %v3396
        %v3399 = vrot.slane %v3261, 1
        %v3400 = vsel %vm3086, %v3399, %v3398
        %v3401 = vsel %vm3089, %v3262, %v3400
        %v3402 = vpack.c.b16 %v3401, %v3401
        %3403 = vrot.lane.b32.xlu0 %v3402, 64
        %v3404 = vpop.permute.xlu0 %3403
        %3406 = vst.msk [vmem:[#allocation6 + $0x1c] sm:$0xf] %vm3113, %v3404
        %v3407 = vld [vmem:[#allocation6] sm:$0xff]
        %v3408 = vld [vmem:[#allocation6 + $0x8] sm:$0xff]
        %v3409 = vld [vmem:[#allocation6 + $0x10] sm:$0xff]
        %v3410 = vld [vmem:[#allocation6 + $0x18] sm:$0xff]
        %v3411 = vld [vmem:[#allocation7] sm:$0xff]
        %v3412 = vld [vmem:[#allocation7 + $0x8] sm:$0xff]
        %v3413 = vld [vmem:[#allocation7 + $0x10] sm:$0xff]
        %v3414 = vld [vmem:[#allocation7 + $0x18] sm:$0xff]
        %v3415 = vld [vmem:[#allocation7 + $0x20] sm:$0xff]
        %v3416 = vld [vmem:[#allocation7 + $0x28] sm:$0xff]
        %v3417 = vld [vmem:[#allocation7 + $0x30] sm:$0xff]
        %v3418 = vld [vmem:[#allocation7 + $0x38] sm:$0xff]
        %v3419 = vld [vmem:[#allocation7 + $0x40] sm:$0xff]
        %v3420 = vld [vmem:[#allocation7 + $0x48] sm:$0xff]
        %v3421 = vld [vmem:[#allocation7 + $0x50] sm:$0xff]
        %v3422 = vld [vmem:[#allocation7 + $0x58] sm:$0xff]
        %v3423 = vld [vmem:[#allocation7 + $0x60] sm:$0xff]
        %v3424 = vld [vmem:[#allocation7 + $0x68] sm:$0xff]
        %v3425 = vld [vmem:[#allocation7 + $0x70] sm:$0xff]
        %v3426 = vld [vmem:[#allocation7 + $0x78] sm:$0xff]
        %v3427 = vld [vmem:[#allocation7 + $0x80] sm:$0xff]
        %v3428 = vld [vmem:[#allocation7 + $0x88] sm:$0xff]
        %v3429 = vld [vmem:[#allocation7 + $0x90] sm:$0xff]
        %v3430 = vld [vmem:[#allocation7 + $0x98] sm:$0xff]
        %v3431 = vld [vmem:[#allocation7 + $0xa0] sm:$0xff]
        %v3432 = vld [vmem:[#allocation7 + $0xa8] sm:$0xff]
        %v3433 = vld [vmem:[#allocation7 + $0xb0] sm:$0xff]
        %v3434 = vld [vmem:[#allocation7 + $0xb8] sm:$0xff]
        %v3435 = vld [vmem:[#allocation7 + $0xc0] sm:$0xff]
        %v3436 = vld [vmem:[#allocation7 + $0xc8] sm:$0xff]
        %v3437 = vld [vmem:[#allocation7 + $0xd0] sm:$0xff]
        %v3438 = vld [vmem:[#allocation7 + $0xd8] sm:$0xff]
        %v3439 = vld [vmem:[#allocation7 + $0xe0] sm:$0xff]
        %v3440 = vld [vmem:[#allocation7 + $0xe8] sm:$0xff]
        %v3441 = vld [vmem:[#allocation7 + $0xf0] sm:$0xff]
        %v3442 = vld [vmem:[#allocation7 + $0xf8] sm:$0xff]
        %v3443 = vld [vmem:[#allocation7 + $0x100] sm:$0xff]
        %v3444 = vld [vmem:[#allocation7 + $0x108] sm:$0xff]
        %v3445 = vld [vmem:[#allocation7 + $0x110] sm:$0xff]
        %v3446 = vld [vmem:[#allocation7 + $0x118] sm:$0xff]
        %v3447 = vld [vmem:[#allocation7 + $0x120] sm:$0xff]
        %v3448 = vld [vmem:[#allocation7 + $0x128] sm:$0xff]
        %v3449 = vld [vmem:[#allocation7 + $0x130] sm:$0xff]
        %v3450 = vld [vmem:[#allocation7 + $0x138] sm:$0xff]
        %v3451 = vld [vmem:[#allocation7 + $0x140] sm:$0xff]
        %v3452 = vld [vmem:[#allocation7 + $0x148] sm:$0xff]
        %v3453 = vld [vmem:[#allocation7 + $0x150] sm:$0xff]
        %v3454 = vld [vmem:[#allocation7 + $0x158] sm:$0xff]
        %v3455 = vld [vmem:[#allocation7 + $0x160] sm:$0xff]
        %v3456 = vld [vmem:[#allocation7 + $0x168] sm:$0xff]
        %v3457 = vld [vmem:[#allocation7 + $0x170] sm:$0xff]
        %v3458 = vld [vmem:[#allocation7 + $0x178] sm:$0xff]
        %v3459 = vld [vmem:[#allocation7 + $0x180] sm:$0xff]
        %v3460 = vld [vmem:[#allocation7 + $0x188] sm:$0xff]
        %v3461 = vld [vmem:[#allocation7 + $0x190] sm:$0xff]
        %v3462 = vld [vmem:[#allocation7 + $0x198] sm:$0xff]
        %v3463 = vld [vmem:[#allocation7 + $0x1a0] sm:$0xff]
        %v3464 = vld [vmem:[#allocation7 + $0x1a8] sm:$0xff]
        %v3465 = vld [vmem:[#allocation7 + $0x1b0] sm:$0xff]
        %v3466 = vld [vmem:[#allocation7 + $0x1b8] sm:$0xff]
        %v3467 = vld [vmem:[#allocation7 + $0x1c0] sm:$0xff]
        %v3468 = vld [vmem:[#allocation7 + $0x1c8] sm:$0xff]
        %v3469 = vld [vmem:[#allocation7 + $0x1d0] sm:$0xff]
        %v3470 = vld [vmem:[#allocation7 + $0x1d8] sm:$0xff]
        %v3471 = vld [vmem:[#allocation7 + $0x1e0] sm:$0xff]
        %v3472 = vld [vmem:[#allocation7 + $0x1e8] sm:$0xff]
        %v3473 = vld [vmem:[#allocation7 + $0x1f0] sm:$0xff]
        %v3474 = vld [vmem:[#allocation7 + $0x1f8] sm:$0xff]
        %v3475 = vld [vmem:[#allocation7 + $0x200] sm:$0xff]
        %v3476 = vld [vmem:[#allocation7 + $0x208] sm:$0xff]
        %v3477 = vld [vmem:[#allocation7 + $0x210] sm:$0xff]
        %v3478 = vld [vmem:[#allocation7 + $0x218] sm:$0xff]
        %v3479 = vld [vmem:[#allocation7 + $0x220] sm:$0xff]
        %v3480 = vld [vmem:[#allocation7 + $0x228] sm:$0xff]
        %v3481 = vld [vmem:[#allocation7 + $0x230] sm:$0xff]
        %v3482 = vld [vmem:[#allocation7 + $0x238] sm:$0xff]
        %v3483 = vld [vmem:[#allocation7 + $0x240] sm:$0xff]
        %v3484 = vld [vmem:[#allocation7 + $0x248] sm:$0xff]
        %v3485 = vld [vmem:[#allocation7 + $0x250] sm:$0xff]
        %v3486 = vld [vmem:[#allocation7 + $0x258] sm:$0xff]
        %v3487 = vld [vmem:[#allocation7 + $0x260] sm:$0xff]
        %v3488 = vld [vmem:[#allocation7 + $0x268] sm:$0xff]
        %v3489 = vld [vmem:[#allocation7 + $0x270] sm:$0xff]
        %v3490 = vld [vmem:[#allocation7 + $0x278] sm:$0xff]
        %v3491 = vld [vmem:[#allocation7 + $0x280] sm:$0xff]
        %v3492 = vld [vmem:[#allocation7 + $0x288] sm:$0xff]
        %v3493 = vld [vmem:[#allocation7 + $0x290] sm:$0xff]
        %v3494 = vld [vmem:[#allocation7 + $0x298] sm:$0xff]
        %v3495 = vld [vmem:[#allocation7 + $0x2a0] sm:$0xff]
        %v3496 = vld [vmem:[#allocation7 + $0x2a8] sm:$0xff]
        %v3497 = vld [vmem:[#allocation7 + $0x2b0] sm:$0xff]
        %v3498 = vld [vmem:[#allocation7 + $0x2b8] sm:$0xff]
        %v3499 = vld [vmem:[#allocation7 + $0x2c0] sm:$0xff]
        %v3500 = vld [vmem:[#allocation7 + $0x2c8] sm:$0xff]
        %v3501 = vld [vmem:[#allocation7 + $0x2d0] sm:$0xff]
        %v3502 = vld [vmem:[#allocation7 + $0x2d8] sm:$0xff]
        %v3503 = vld [vmem:[#allocation7 + $0x2e0] sm:$0xff]
        %v3504 = vld [vmem:[#allocation7 + $0x2e8] sm:$0xff]
        %v3505 = vld [vmem:[#allocation7 + $0x2f0] sm:$0xff]
        %v3506 = vld [vmem:[#allocation7 + $0x2f8] sm:$0xff]
        %v3507 = vld [vmem:[#allocation7 + $0x300] sm:$0xff]
        %v3508 = vld [vmem:[#allocation7 + $0x308] sm:$0xff]
        %v3509 = vld [vmem:[#allocation7 + $0x310] sm:$0xff]
        %v3510 = vld [vmem:[#allocation7 + $0x318] sm:$0xff]
        %v3511 = vld [vmem:[#allocation7 + $0x320] sm:$0xff]
        %v3512 = vld [vmem:[#allocation7 + $0x328] sm:$0xff]
        %v3513 = vld [vmem:[#allocation7 + $0x330] sm:$0xff]
        %v3514 = vld [vmem:[#allocation7 + $0x338] sm:$0xff]
        %v3515 = vld [vmem:[#allocation7 + $0x340] sm:$0xff]
        %v3516 = vld [vmem:[#allocation7 + $0x348] sm:$0xff]
        %v3517 = vld [vmem:[#allocation7 + $0x350] sm:$0xff]
        %v3518 = vld [vmem:[#allocation7 + $0x358] sm:$0xff]
        %v3519 = vld [vmem:[#allocation7 + $0x360] sm:$0xff]
        %v3520 = vld [vmem:[#allocation7 + $0x368] sm:$0xff]
        %v3521 = vld [vmem:[#allocation7 + $0x370] sm:$0xff]
        %v3522 = vld [vmem:[#allocation7 + $0x378] sm:$0xff]
        %v3523 = vld [vmem:[#allocation7 + $0x380] sm:$0xff]
        %v3524 = vld [vmem:[#allocation7 + $0x388] sm:$0xff]
        %v3525 = vld [vmem:[#allocation7 + $0x390] sm:$0xff]
        %v3526 = vld [vmem:[#allocation7 + $0x398] sm:$0xff]
        %v3527 = vld [vmem:[#allocation7 + $0x3a0] sm:$0xff]
        %v3528 = vld [vmem:[#allocation7 + $0x3a8] sm:$0xff]
        %v3529 = vld [vmem:[#allocation7 + $0x3b0] sm:$0xff]
        %v3530 = vld [vmem:[#allocation7 + $0x3b8] sm:$0xff]
        %v3531 = vld [vmem:[#allocation7 + $0x3c0] sm:$0xff]
        %v3532 = vld [vmem:[#allocation7 + $0x3c8] sm:$0xff]
        %v3533 = vld [vmem:[#allocation7 + $0x3d0] sm:$0xff]
        %v3534 = vld [vmem:[#allocation7 + $0x3d8] sm:$0xff]
        %v3535 = vld [vmem:[#allocation7 + $0x3e0] sm:$0xff]
        %v3536 = vld [vmem:[#allocation7 + $0x3e8] sm:$0xff]
        %v3537 = vld [vmem:[#allocation7 + $0x3f0] sm:$0xff]
        %v3538 = vld [vmem:[#allocation7 + $0x3f8] sm:$0xff]
        %v3539 = vld [vmem:[#allocation7 + $0x400] sm:$0xff]
        %v3540 = vld [vmem:[#allocation7 + $0x408] sm:$0xff]
        %v3541 = vld [vmem:[#allocation7 + $0x410] sm:$0xff]
        %v3542 = vld [vmem:[#allocation7 + $0x418] sm:$0xff]
        %v3543 = vld [vmem:[#allocation7 + $0x420] sm:$0xff]
        %v3544 = vld [vmem:[#allocation7 + $0x428] sm:$0xff]
        %v3545 = vld [vmem:[#allocation7 + $0x430] sm:$0xff]
        %v3546 = vld [vmem:[#allocation7 + $0x438] sm:$0xff]
        %v3547 = vld [vmem:[#allocation7 + $0x440] sm:$0xff]
        %v3548 = vld [vmem:[#allocation7 + $0x448] sm:$0xff]
        %v3549 = vld [vmem:[#allocation7 + $0x450] sm:$0xff]
        %v3550 = vld [vmem:[#allocation7 + $0x458] sm:$0xff]
        %v3551 = vld [vmem:[#allocation7 + $0x460] sm:$0xff]
        %v3552 = vld [vmem:[#allocation7 + $0x468] sm:$0xff]
        %v3553 = vld [vmem:[#allocation7 + $0x470] sm:$0xff]
        %v3554 = vld [vmem:[#allocation7 + $0x478] sm:$0xff]
        %v3555 = vld [vmem:[#allocation7 + $0x480] sm:$0xff]
        %v3556 = vld [vmem:[#allocation7 + $0x488] sm:$0xff]
        %v3557 = vld [vmem:[#allocation7 + $0x490] sm:$0xff]
        %v3558 = vld [vmem:[#allocation7 + $0x498] sm:$0xff]
        %v3559 = vld [vmem:[#allocation7 + $0x4a0] sm:$0xff]
        %v3560 = vld [vmem:[#allocation7 + $0x4a8] sm:$0xff]
        %v3561 = vld [vmem:[#allocation7 + $0x4b0] sm:$0xff]
        %v3562 = vld [vmem:[#allocation7 + $0x4b8] sm:$0xff]
        %v3563 = vld [vmem:[#allocation7 + $0x4c0] sm:$0xff]
        %v3564 = vld [vmem:[#allocation7 + $0x4c8] sm:$0xff]
        %v3565 = vld [vmem:[#allocation7 + $0x4d0] sm:$0xff]
        %v3566 = vld [vmem:[#allocation7 + $0x4d8] sm:$0xff]
        %v3567 = vld [vmem:[#allocation7 + $0x4e0] sm:$0xff]
        %v3568 = vld [vmem:[#allocation7 + $0x4e8] sm:$0xff]
        %v3569 = vld [vmem:[#allocation7 + $0x4f0] sm:$0xff]
        %v3570 = vld [vmem:[#allocation7 + $0x4f8] sm:$0xff]
        %v3571 = vld [vmem:[#allocation7 + $0x500] sm:$0xff]
        %v3572 = vld [vmem:[#allocation7 + $0x508] sm:$0xff]
        %v3573 = vld [vmem:[#allocation7 + $0x510] sm:$0xff]
        %v3574 = vld [vmem:[#allocation7 + $0x518] sm:$0xff]
        %v3575 = vld [vmem:[#allocation7 + $0x520] sm:$0xff]
        %v3576 = vld [vmem:[#allocation7 + $0x528] sm:$0xff]
        %v3577 = vld [vmem:[#allocation7 + $0x530] sm:$0xff]
        %v3578 = vld [vmem:[#allocation7 + $0x538] sm:$0xff]
        %v3579 = vld [vmem:[#allocation7 + $0x540] sm:$0xff]
        %v3580 = vld [vmem:[#allocation7 + $0x548] sm:$0xff]
        %v3581 = vld [vmem:[#allocation7 + $0x550] sm:$0xff]
        %v3582 = vld [vmem:[#allocation7 + $0x558] sm:$0xff]
        %v3583 = vld [vmem:[#allocation7 + $0x560] sm:$0xff]
        %v3584 = vld [vmem:[#allocation7 + $0x568] sm:$0xff]
        %v3585 = vld [vmem:[#allocation7 + $0x570] sm:$0xff]
        %v3586 = vld [vmem:[#allocation7 + $0x578] sm:$0xff]
        %v3587 = vld [vmem:[#allocation7 + $0x580] sm:$0xff]
        %v3588 = vld [vmem:[#allocation7 + $0x588] sm:$0xff]
        %v3589 = vld [vmem:[#allocation7 + $0x590] sm:$0xff]
        %v3590 = vld [vmem:[#allocation7 + $0x598] sm:$0xff]
        %v3591 = vld [vmem:[#allocation7 + $0x5a0] sm:$0xff]
        %v3592 = vld [vmem:[#allocation7 + $0x5a8] sm:$0xff]
        %v3593 = vld [vmem:[#allocation7 + $0x5b0] sm:$0xff]
        %v3594 = vld [vmem:[#allocation7 + $0x5b8] sm:$0xff]
        %v3595 = vld [vmem:[#allocation7 + $0x5c0] sm:$0xff]
        %v3596 = vld [vmem:[#allocation7 + $0x5c8] sm:$0xff]
        %v3597 = vld [vmem:[#allocation7 + $0x5d0] sm:$0xff]
        %v3598 = vld [vmem:[#allocation7 + $0x5d8] sm:$0xff]
        %v3599 = vld [vmem:[#allocation7 + $0x5e0] sm:$0xff]
        %v3600 = vld [vmem:[#allocation7 + $0x5e8] sm:$0xff]
        %v3601 = vld [vmem:[#allocation7 + $0x5f0] sm:$0xff]
        %v3602 = vld [vmem:[#allocation7 + $0x5f8] sm:$0xff]
        %v3603 = vld [vmem:[#allocation7 + $0x600] sm:$0xff]
        %v3604 = vld [vmem:[#allocation7 + $0x608] sm:$0xff]
        %v3605 = vld [vmem:[#allocation7 + $0x610] sm:$0xff]
        %v3606 = vld [vmem:[#allocation7 + $0x618] sm:$0xff]
        %v3607 = vld [vmem:[#allocation7 + $0x620] sm:$0xff]
        %v3608 = vld [vmem:[#allocation7 + $0x628] sm:$0xff]
        %v3609 = vld [vmem:[#allocation7 + $0x630] sm:$0xff]
        %v3610 = vld [vmem:[#allocation7 + $0x638] sm:$0xff]
        %v3611 = vld [vmem:[#allocation7 + $0x640] sm:$0xff]
        %v3612 = vld [vmem:[#allocation7 + $0x648] sm:$0xff]
        %v3613 = vld [vmem:[#allocation7 + $0x650] sm:$0xff]
        %v3614 = vld [vmem:[#allocation7 + $0x658] sm:$0xff]
        %v3615 = vld [vmem:[#allocation7 + $0x660] sm:$0xff]
        %v3616 = vld [vmem:[#allocation7 + $0x668] sm:$0xff]
        %v3617 = vld [vmem:[#allocation7 + $0x670] sm:$0xff]
        %v3618 = vld [vmem:[#allocation7 + $0x678] sm:$0xff]
        %v3619 = vld [vmem:[#allocation7 + $0x680] sm:$0xff]
        %v3620 = vld [vmem:[#allocation7 + $0x688] sm:$0xff]
        %v3621 = vld [vmem:[#allocation7 + $0x690] sm:$0xff]
        %v3622 = vld [vmem:[#allocation7 + $0x698] sm:$0xff]
        %v3623 = vld [vmem:[#allocation7 + $0x6a0] sm:$0xff]
        %v3624 = vld [vmem:[#allocation7 + $0x6a8] sm:$0xff]
        %v3625 = vld [vmem:[#allocation7 + $0x6b0] sm:$0xff]
        %v3626 = vld [vmem:[#allocation7 + $0x6b8] sm:$0xff]
        %v3627 = vld [vmem:[#allocation7 + $0x6c0] sm:$0xff]
        %v3628 = vld [vmem:[#allocation7 + $0x6c8] sm:$0xff]
        %v3629 = vld [vmem:[#allocation7 + $0x6d0] sm:$0xff]
        %v3630 = vld [vmem:[#allocation7 + $0x6d8] sm:$0xff]
        %v3631 = vld [vmem:[#allocation7 + $0x6e0] sm:$0xff]
        %v3632 = vld [vmem:[#allocation7 + $0x6e8] sm:$0xff]
        %v3633 = vld [vmem:[#allocation7 + $0x6f0] sm:$0xff]
        %v3634 = vld [vmem:[#allocation7 + $0x6f8] sm:$0xff]
        %v3635 = vld [vmem:[#allocation7 + $0x700] sm:$0xff]
        %v3636 = vld [vmem:[#allocation7 + $0x708] sm:$0xff]
        %v3637 = vld [vmem:[#allocation7 + $0x710] sm:$0xff]
        %v3638 = vld [vmem:[#allocation7 + $0x718] sm:$0xff]
        %v3639 = vld [vmem:[#allocation7 + $0x720] sm:$0xff]
        %v3640 = vld [vmem:[#allocation7 + $0x728] sm:$0xff]
        %v3641 = vld [vmem:[#allocation7 + $0x730] sm:$0xff]
        %v3642 = vld [vmem:[#allocation7 + $0x738] sm:$0xff]
        %v3643 = vld [vmem:[#allocation7 + $0x740] sm:$0xff]
        %v3644 = vld [vmem:[#allocation7 + $0x748] sm:$0xff]
        %v3645 = vld [vmem:[#allocation7 + $0x750] sm:$0xff]
        %v3646 = vld [vmem:[#allocation7 + $0x758] sm:$0xff]
        %v3647 = vld [vmem:[#allocation7 + $0x760] sm:$0xff]
        %v3648 = vld [vmem:[#allocation7 + $0x768] sm:$0xff]
        %v3649 = vld [vmem:[#allocation7 + $0x770] sm:$0xff]
        %v3650 = vld [vmem:[#allocation7 + $0x778] sm:$0xff]
        %v3651 = vld [vmem:[#allocation7 + $0x780] sm:$0xff]
        %v3652 = vld [vmem:[#allocation7 + $0x788] sm:$0xff]
        %v3653 = vld [vmem:[#allocation7 + $0x790] sm:$0xff]
        %v3654 = vld [vmem:[#allocation7 + $0x798] sm:$0xff]
        %v3655 = vld [vmem:[#allocation7 + $0x7a0] sm:$0xff]
        %v3656 = vld [vmem:[#allocation7 + $0x7a8] sm:$0xff]
        %v3657 = vld [vmem:[#allocation7 + $0x7b0] sm:$0xff]
        %v3658 = vld [vmem:[#allocation7 + $0x7b8] sm:$0xff]
        %v3659 = vld [vmem:[#allocation7 + $0x7c0] sm:$0xff]
        %v3660 = vld [vmem:[#allocation7 + $0x7c8] sm:$0xff]
        %v3661 = vld [vmem:[#allocation7 + $0x7d0] sm:$0xff]
        %v3662 = vld [vmem:[#allocation7 + $0x7d8] sm:$0xff]
        %v3663 = vld [vmem:[#allocation7 + $0x7e0] sm:$0xff]
        %v3664 = vld [vmem:[#allocation7 + $0x7e8] sm:$0xff]
        %v3665 = vld [vmem:[#allocation7 + $0x7f0] sm:$0xff]
        %v3666 = vld [vmem:[#allocation7 + $0x7f8] sm:$0xff]
        %v3671 = vunpack.c.l.b16 %v3407
        %v3672 = vunpack.c.h.b16 %v3407
        %v3673 = vunpack.c.l.b16 %v3408
        %v3674 = vunpack.c.h.b16 %v3408
        %v3675 = vunpack.c.l.b16 %v3409
        %v3676 = vunpack.c.h.b16 %v3409
        %v3677 = vunpack.c.l.b16 %v3410
        %v3678 = vunpack.c.h.b16 %v3410
        %v3679 = vpack.c.b16 %v3671, %v3671
        %v3680 = vpack.c.b16 %v3672, %v3672
        %v3681 = vpack.c.b16 %v3673, %v3673
        %v3682 = vpack.c.b16 %v3674, %v3674
        %v3683 = vpack.c.b16 %v3675, %v3675
        %v3684 = vpack.c.b16 %v3676, %v3676
        %v3685 = vpack.c.b16 %v3677, %v3677
        %v3686 = vpack.c.b16 %v3678, %v3678
        %v3951 = vunpack.c.l.b16 %v3411
        %v3952 = vunpack.c.h.b16 %v3411
        %v3953 = vunpack.c.l.b16 %v3412
        %v3954 = vunpack.c.h.b16 %v3412
        %v3955 = vunpack.c.l.b16 %v3413
        %v3956 = vunpack.c.h.b16 %v3413
        %v3957 = vunpack.c.l.b16 %v3414
        %v3958 = vunpack.c.h.b16 %v3414
        %v3959 = vunpack.c.l.b16 %v3415
        %v3960 = vunpack.c.h.b16 %v3415
        %v3961 = vunpack.c.l.b16 %v3416
        %v3962 = vunpack.c.h.b16 %v3416
        %v3963 = vunpack.c.l.b16 %v3417
        %v3964 = vunpack.c.h.b16 %v3417
        %v3965 = vunpack.c.l.b16 %v3418
        %v3966 = vunpack.c.h.b16 %v3418
        %v3967 = vunpack.c.l.b16 %v3419
        %v3968 = vunpack.c.h.b16 %v3419
        %v3969 = vunpack.c.l.b16 %v3420
        %v3970 = vunpack.c.h.b16 %v3420
        %v3971 = vunpack.c.l.b16 %v3421
        %v3972 = vunpack.c.h.b16 %v3421
        %v3973 = vunpack.c.l.b16 %v3422
        %v3974 = vunpack.c.h.b16 %v3422
        %v3975 = vunpack.c.l.b16 %v3423
        %v3976 = vunpack.c.h.b16 %v3423
        %v3977 = vunpack.c.l.b16 %v3424
        %v3978 = vunpack.c.h.b16 %v3424
        %v3979 = vunpack.c.l.b16 %v3425
        %v3980 = vunpack.c.h.b16 %v3425
        %v3981 = vunpack.c.l.b16 %v3426
        %v3982 = vunpack.c.h.b16 %v3426
        %v3983 = vunpack.c.l.b16 %v3427
        %v3984 = vunpack.c.h.b16 %v3427
        %v3985 = vunpack.c.l.b16 %v3428
        %v3986 = vunpack.c.h.b16 %v3428
        %v3987 = vunpack.c.l.b16 %v3429
        %v3988 = vunpack.c.h.b16 %v3429
        %v3989 = vunpack.c.l.b16 %v3430
        %v3990 = vunpack.c.h.b16 %v3430
        %v3991 = vunpack.c.l.b16 %v3431
        %v3992 = vunpack.c.h.b16 %v3431
        %v3993 = vunpack.c.l.b16 %v3432
        %v3994 = vunpack.c.h.b16 %v3432
        %v3995 = vunpack.c.l.b16 %v3433
        %v3996 = vunpack.c.h.b16 %v3433
        %v3997 = vunpack.c.l.b16 %v3434
        %v3998 = vunpack.c.h.b16 %v3434
        %v3999 = vunpack.c.l.b16 %v3435
        %v4000 = vunpack.c.h.b16 %v3435
        %v4001 = vunpack.c.l.b16 %v3436
        %v4002 = vunpack.c.h.b16 %v3436
        %v4003 = vunpack.c.l.b16 %v3437
        %v4004 = vunpack.c.h.b16 %v3437
        %v4005 = vunpack.c.l.b16 %v3438
        %v4006 = vunpack.c.h.b16 %v3438
        %v4007 = vunpack.c.l.b16 %v3439
        %v4008 = vunpack.c.h.b16 %v3439
        %v4009 = vunpack.c.l.b16 %v3440
        %v4010 = vunpack.c.h.b16 %v3440
        %v4011 = vunpack.c.l.b16 %v3441
        %v4012 = vunpack.c.h.b16 %v3441
        %v4013 = vunpack.c.l.b16 %v3442
        %v4014 = vunpack.c.h.b16 %v3442
        %v4015 = vunpack.c.l.b16 %v3443
        %v4016 = vunpack.c.h.b16 %v3443
        %v4017 = vunpack.c.l.b16 %v3444
        %v4018 = vunpack.c.h.b16 %v3444
        %v4019 = vunpack.c.l.b16 %v3445
        %v4020 = vunpack.c.h.b16 %v3445
        %v4021 = vunpack.c.l.b16 %v3446
        %v4022 = vunpack.c.h.b16 %v3446
        %v4023 = vunpack.c.l.b16 %v3447
        %v4024 = vunpack.c.h.b16 %v3447
        %v4025 = vunpack.c.l.b16 %v3448
        %v4026 = vunpack.c.h.b16 %v3448
        %v4027 = vunpack.c.l.b16 %v3449
        %v4028 = vunpack.c.h.b16 %v3449
        %v4029 = vunpack.c.l.b16 %v3450
        %v4030 = vunpack.c.h.b16 %v3450
        %v4031 = vunpack.c.l.b16 %v3451
        %v4032 = vunpack.c.h.b16 %v3451
        %v4033 = vunpack.c.l.b16 %v3452
        %v4034 = vunpack.c.h.b16 %v3452
        %v4035 = vunpack.c.l.b16 %v3453
        %v4036 = vunpack.c.h.b16 %v3453
        %v4037 = vunpack.c.l.b16 %v3454
        %v4038 = vunpack.c.h.b16 %v3454
        %v4039 = vunpack.c.l.b16 %v3455
        %v4040 = vunpack.c.h.b16 %v3455
        %v4041 = vunpack.c.l.b16 %v3456
        %v4042 = vunpack.c.h.b16 %v3456
        %v4043 = vunpack.c.l.b16 %v3457
        %v4044 = vunpack.c.h.b16 %v3457
        %v4045 = vunpack.c.l.b16 %v3458
        %v4046 = vunpack.c.h.b16 %v3458
        %v4047 = vunpack.c.l.b16 %v3459
        %v4048 = vunpack.c.h.b16 %v3459
        %v4049 = vunpack.c.l.b16 %v3460
        %v4050 = vunpack.c.h.b16 %v3460
        %v4051 = vunpack.c.l.b16 %v3461
        %v4052 = vunpack.c.h.b16 %v3461
        %v4053 = vunpack.c.l.b16 %v3462
        %v4054 = vunpack.c.h.b16 %v3462
        %v4055 = vunpack.c.l.b16 %v3463
        %v4056 = vunpack.c.h.b16 %v3463
        %v4057 = vunpack.c.l.b16 %v3464
        %v4058 = vunpack.c.h.b16 %v3464
        %v4059 = vunpack.c.l.b16 %v3465
        %v4060 = vunpack.c.h.b16 %v3465
        %v4061 = vunpack.c.l.b16 %v3466
        %v4062 = vunpack.c.h.b16 %v3466
        %v4063 = vunpack.c.l.b16 %v3467
        %v4064 = vunpack.c.h.b16 %v3467
        %v4065 = vunpack.c.l.b16 %v3468
        %v4066 = vunpack.c.h.b16 %v3468
        %v4067 = vunpack.c.l.b16 %v3469
        %v4068 = vunpack.c.h.b16 %v3469
        %v4069 = vunpack.c.l.b16 %v3470
        %v4070 = vunpack.c.h.b16 %v3470
        %v4071 = vunpack.c.l.b16 %v3471
        %v4072 = vunpack.c.h.b16 %v3471
        %v4073 = vunpack.c.l.b16 %v3472
        %v4074 = vunpack.c.h.b16 %v3472
        %v4075 = vunpack.c.l.b16 %v3473
        %v4076 = vunpack.c.h.b16 %v3473
        %v4077 = vunpack.c.l.b16 %v3474
        %v4078 = vunpack.c.h.b16 %v3474
        %v4079 = vunpack.c.l.b16 %v3475
        %v4080 = vunpack.c.h.b16 %v3475
        %v4081 = vunpack.c.l.b16 %v3476
        %v4082 = vunpack.c.h.b16 %v3476
        %v4083 = vunpack.c.l.b16 %v3477
        %v4084 = vunpack.c.h.b16 %v3477
        %v4085 = vunpack.c.l.b16 %v3478
        %v4086 = vunpack.c.h.b16 %v3478
        %v4087 = vunpack.c.l.b16 %v3479
        %v4088 = vunpack.c.h.b16 %v3479
        %v4089 = vunpack.c.l.b16 %v3480
        %v4090 = vunpack.c.h.b16 %v3480
        %v4091 = vunpack.c.l.b16 %v3481
        %v4092 = vunpack.c.h.b16 %v3481
        %v4093 = vunpack.c.l.b16 %v3482
        %v4094 = vunpack.c.h.b16 %v3482
        %v4095 = vunpack.c.l.b16 %v3483
        %v4096 = vunpack.c.h.b16 %v3483
        %v4097 = vunpack.c.l.b16 %v3484
        %v4098 = vunpack.c.h.b16 %v3484
        %v4099 = vunpack.c.l.b16 %v3485
        %v4100 = vunpack.c.h.b16 %v3485
        %v4101 = vunpack.c.l.b16 %v3486
        %v4102 = vunpack.c.h.b16 %v3486
        %v4103 = vunpack.c.l.b16 %v3487
        %v4104 = vunpack.c.h.b16 %v3487
        %v4105 = vunpack.c.l.b16 %v3488
        %v4106 = vunpack.c.h.b16 %v3488
        %v4107 = vunpack.c.l.b16 %v3489
        %v4108 = vunpack.c.h.b16 %v3489
        %v4109 = vunpack.c.l.b16 %v3490
        %v4110 = vunpack.c.h.b16 %v3490
        %v4111 = vunpack.c.l.b16 %v3491
        %v4112 = vunpack.c.h.b16 %v3491
        %v4113 = vunpack.c.l.b16 %v3492
        %v4114 = vunpack.c.h.b16 %v3492
        %v4115 = vunpack.c.l.b16 %v3493
        %v4116 = vunpack.c.h.b16 %v3493
        %v4117 = vunpack.c.l.b16 %v3494
        %v4118 = vunpack.c.h.b16 %v3494
        %v4119 = vunpack.c.l.b16 %v3495
        %v4120 = vunpack.c.h.b16 %v3495
        %v4121 = vunpack.c.l.b16 %v3496
        %v4122 = vunpack.c.h.b16 %v3496
        %v4123 = vunpack.c.l.b16 %v3497
        %v4124 = vunpack.c.h.b16 %v3497
        %v4125 = vunpack.c.l.b16 %v3498
        %v4126 = vunpack.c.h.b16 %v3498
        %v4127 = vunpack.c.l.b16 %v3499
        %v4128 = vunpack.c.h.b16 %v3499
        %v4129 = vunpack.c.l.b16 %v3500
        %v4130 = vunpack.c.h.b16 %v3500
        %v4131 = vunpack.c.l.b16 %v3501
        %v4132 = vunpack.c.h.b16 %v3501
        %v4133 = vunpack.c.l.b16 %v3502
        %v4134 = vunpack.c.h.b16 %v3502
        %v4135 = vunpack.c.l.b16 %v3503
        %v4136 = vunpack.c.h.b16 %v3503
        %v4137 = vunpack.c.l.b16 %v3504
        %v4138 = vunpack.c.h.b16 %v3504
        %v4139 = vunpack.c.l.b16 %v3505
        %v4140 = vunpack.c.h.b16 %v3505
        %v4141 = vunpack.c.l.b16 %v3506
        %v4142 = vunpack.c.h.b16 %v3506
        %v4143 = vunpack.c.l.b16 %v3507
        %v4144 = vunpack.c.h.b16 %v3507
        %v4145 = vunpack.c.l.b16 %v3508
        %v4146 = vunpack.c.h.b16 %v3508
        %v4147 = vunpack.c.l.b16 %v3509
        %v4148 = vunpack.c.h.b16 %v3509
        %v4149 = vunpack.c.l.b16 %v3510
        %v4150 = vunpack.c.h.b16 %v3510
        %v4151 = vunpack.c.l.b16 %v3511
        %v4152 = vunpack.c.h.b16 %v3511
        %v4153 = vunpack.c.l.b16 %v3512
        %v4154 = vunpack.c.h.b16 %v3512
        %v4155 = vunpack.c.l.b16 %v3513
        %v4156 = vunpack.c.h.b16 %v3513
        %v4157 = vunpack.c.l.b16 %v3514
        %v4158 = vunpack.c.h.b16 %v3514
        %v4159 = vunpack.c.l.b16 %v3515
        %v4160 = vunpack.c.h.b16 %v3515
        %v4161 = vunpack.c.l.b16 %v3516
        %v4162 = vunpack.c.h.b16 %v3516
        %v4163 = vunpack.c.l.b16 %v3517
        %v4164 = vunpack.c.h.b16 %v3517
        %v4165 = vunpack.c.l.b16 %v3518
        %v4166 = vunpack.c.h.b16 %v3518
        %v4167 = vunpack.c.l.b16 %v3519
        %v4168 = vunpack.c.h.b16 %v3519
        %v4169 = vunpack.c.l.b16 %v3520
        %v4170 = vunpack.c.h.b16 %v3520
        %v4171 = vunpack.c.l.b16 %v3521
        %v4172 = vunpack.c.h.b16 %v3521
        %v4173 = vunpack.c.l.b16 %v3522
        %v4174 = vunpack.c.h.b16 %v3522
        %v4175 = vunpack.c.l.b16 %v3523
        %v4176 = vunpack.c.h.b16 %v3523
        %v4177 = vunpack.c.l.b16 %v3524
        %v4178 = vunpack.c.h.b16 %v3524
        %v4179 = vunpack.c.l.b16 %v3525
        %v4180 = vunpack.c.h.b16 %v3525
        %v4181 = vunpack.c.l.b16 %v3526
        %v4182 = vunpack.c.h.b16 %v3526
        %v4183 = vunpack.c.l.b16 %v3527
        %v4184 = vunpack.c.h.b16 %v3527
        %v4185 = vunpack.c.l.b16 %v3528
        %v4186 = vunpack.c.h.b16 %v3528
        %v4187 = vunpack.c.l.b16 %v3529
        %v4188 = vunpack.c.h.b16 %v3529
        %v4189 = vunpack.c.l.b16 %v3530
        %v4190 = vunpack.c.h.b16 %v3530
        %v4191 = vunpack.c.l.b16 %v3531
        %v4192 = vunpack.c.h.b16 %v3531
        %v4193 = vunpack.c.l.b16 %v3532
        %v4194 = vunpack.c.h.b16 %v3532
        %v4195 = vunpack.c.l.b16 %v3533
        %v4196 = vunpack.c.h.b16 %v3533
        %v4197 = vunpack.c.l.b16 %v3534
        %v4198 = vunpack.c.h.b16 %v3534
        %v4199 = vunpack.c.l.b16 %v3535
        %v4200 = vunpack.c.h.b16 %v3535
        %v4201 = vunpack.c.l.b16 %v3536
        %v4202 = vunpack.c.h.b16 %v3536
        %v4203 = vunpack.c.l.b16 %v3537
        %v4204 = vunpack.c.h.b16 %v3537
        %v4205 = vunpack.c.l.b16 %v3538
        %v4206 = vunpack.c.h.b16 %v3538
        %v4207 = vunpack.c.l.b16 %v3539
        %v4208 = vunpack.c.h.b16 %v3539
        %v4209 = vunpack.c.l.b16 %v3540
        %v4210 = vunpack.c.h.b16 %v3540
        %v4211 = vunpack.c.l.b16 %v3541
        %v4212 = vunpack.c.h.b16 %v3541
        %v4213 = vunpack.c.l.b16 %v3542
        %v4214 = vunpack.c.h.b16 %v3542
        %v4215 = vunpack.c.l.b16 %v3543
        %v4216 = vunpack.c.h.b16 %v3543
        %v4217 = vunpack.c.l.b16 %v3544
        %v4218 = vunpack.c.h.b16 %v3544
        %v4219 = vunpack.c.l.b16 %v3545
        %v4220 = vunpack.c.h.b16 %v3545
        %v4221 = vunpack.c.l.b16 %v3546
        %v4222 = vunpack.c.h.b16 %v3546
        %v4223 = vunpack.c.l.b16 %v3547
        %v4224 = vunpack.c.h.b16 %v3547
        %v4225 = vunpack.c.l.b16 %v3548
        %v4226 = vunpack.c.h.b16 %v3548
        %v4227 = vunpack.c.l.b16 %v3549
        %v4228 = vunpack.c.h.b16 %v3549
        %v4229 = vunpack.c.l.b16 %v3550
        %v4230 = vunpack.c.h.b16 %v3550
        %v4231 = vunpack.c.l.b16 %v3551
        %v4232 = vunpack.c.h.b16 %v3551
        %v4233 = vunpack.c.l.b16 %v3552
        %v4234 = vunpack.c.h.b16 %v3552
        %v4235 = vunpack.c.l.b16 %v3553
        %v4236 = vunpack.c.h.b16 %v3553
        %v4237 = vunpack.c.l.b16 %v3554
        %v4238 = vunpack.c.h.b16 %v3554
        %v4239 = vunpack.c.l.b16 %v3555
        %v4240 = vunpack.c.h.b16 %v3555
        %v4241 = vunpack.c.l.b16 %v3556
        %v4242 = vunpack.c.h.b16 %v3556
        %v4243 = vunpack.c.l.b16 %v3557
        %v4244 = vunpack.c.h.b16 %v3557
        %v4245 = vunpack.c.l.b16 %v3558
        %v4246 = vunpack.c.h.b16 %v3558
        %v4247 = vunpack.c.l.b16 %v3559
        %v4248 = vunpack.c.h.b16 %v3559
        %v4249 = vunpack.c.l.b16 %v3560
        %v4250 = vunpack.c.h.b16 %v3560
        %v4251 = vunpack.c.l.b16 %v3561
        %v4252 = vunpack.c.h.b16 %v3561
        %v4253 = vunpack.c.l.b16 %v3562
        %v4254 = vunpack.c.h.b16 %v3562
        %v4255 = vunpack.c.l.b16 %v3563
        %v4256 = vunpack.c.h.b16 %v3563
        %v4257 = vunpack.c.l.b16 %v3564
        %v4258 = vunpack.c.h.b16 %v3564
        %v4259 = vunpack.c.l.b16 %v3565
        %v4260 = vunpack.c.h.b16 %v3565
        %v4261 = vunpack.c.l.b16 %v3566
        %v4262 = vunpack.c.h.b16 %v3566
        %v4263 = vunpack.c.l.b16 %v3567
        %v4264 = vunpack.c.h.b16 %v3567
        %v4265 = vunpack.c.l.b16 %v3568
        %v4266 = vunpack.c.h.b16 %v3568
        %v4267 = vunpack.c.l.b16 %v3569
        %v4268 = vunpack.c.h.b16 %v3569
        %v4269 = vunpack.c.l.b16 %v3570
        %v4270 = vunpack.c.h.b16 %v3570
        %v4271 = vunpack.c.l.b16 %v3571
        %v4272 = vunpack.c.h.b16 %v3571
        %v4273 = vunpack.c.l.b16 %v3572
        %v4274 = vunpack.c.h.b16 %v3572
        %v4275 = vunpack.c.l.b16 %v3573
        %v4276 = vunpack.c.h.b16 %v3573
        %v4277 = vunpack.c.l.b16 %v3574
        %v4278 = vunpack.c.h.b16 %v3574
        %v4279 = vunpack.c.l.b16 %v3575
        %v4280 = vunpack.c.h.b16 %v3575
        %v4281 = vunpack.c.l.b16 %v3576
        %v4282 = vunpack.c.h.b16 %v3576
        %v4283 = vunpack.c.l.b16 %v3577
        %v4284 = vunpack.c.h.b16 %v3577
        %v4285 = vunpack.c.l.b16 %v3578
        %v4286 = vunpack.c.h.b16 %v3578
        %v4287 = vunpack.c.l.b16 %v3579
        %v4288 = vunpack.c.h.b16 %v3579
        %v4289 = vunpack.c.l.b16 %v3580
        %v4290 = vunpack.c.h.b16 %v3580
        %v4291 = vunpack.c.l.b16 %v3581
        %v4292 = vunpack.c.h.b16 %v3581
        %v4293 = vunpack.c.l.b16 %v3582
        %v4294 = vunpack.c.h.b16 %v3582
        %v4295 = vunpack.c.l.b16 %v3583
        %v4296 = vunpack.c.h.b16 %v3583
        %v4297 = vunpack.c.l.b16 %v3584
        %v4298 = vunpack.c.h.b16 %v3584
        %v4299 = vunpack.c.l.b16 %v3585
        %v4300 = vunpack.c.h.b16 %v3585
        %v4301 = vunpack.c.l.b16 %v3586
        %v4302 = vunpack.c.h.b16 %v3586
        %v4303 = vunpack.c.l.b16 %v3587
        %v4304 = vunpack.c.h.b16 %v3587
        %v4305 = vunpack.c.l.b16 %v3588
        %v4306 = vunpack.c.h.b16 %v3588
        %v4307 = vunpack.c.l.b16 %v3589
        %v4308 = vunpack.c.h.b16 %v3589
        %v4309 = vunpack.c.l.b16 %v3590
        %v4310 = vunpack.c.h.b16 %v3590
        %v4311 = vunpack.c.l.b16 %v3591
        %v4312 = vunpack.c.h.b16 %v3591
        %v4313 = vunpack.c.l.b16 %v3592
        %v4314 = vunpack.c.h.b16 %v3592
        %v4315 = vunpack.c.l.b16 %v3593
        %v4316 = vunpack.c.h.b16 %v3593
        %v4317 = vunpack.c.l.b16 %v3594
        %v4318 = vunpack.c.h.b16 %v3594
        %v4319 = vunpack.c.l.b16 %v3595
        %v4320 = vunpack.c.h.b16 %v3595
        %v4321 = vunpack.c.l.b16 %v3596
        %v4322 = vunpack.c.h.b16 %v3596
        %v4323 = vunpack.c.l.b16 %v3597
        %v4324 = vunpack.c.h.b16 %v3597
        %v4325 = vunpack.c.l.b16 %v3598
        %v4326 = vunpack.c.h.b16 %v3598
        %v4327 = vunpack.c.l.b16 %v3599
        %v4328 = vunpack.c.h.b16 %v3599
        %v4329 = vunpack.c.l.b16 %v3600
        %v4330 = vunpack.c.h.b16 %v3600
        %v4331 = vunpack.c.l.b16 %v3601
        %v4332 = vunpack.c.h.b16 %v3601
        %v4333 = vunpack.c.l.b16 %v3602
        %v4334 = vunpack.c.h.b16 %v3602
        %v4335 = vunpack.c.l.b16 %v3603
        %v4336 = vunpack.c.h.b16 %v3603
        %v4337 = vunpack.c.l.b16 %v3604
        %v4338 = vunpack.c.h.b16 %v3604
        %v4339 = vunpack.c.l.b16 %v3605
        %v4340 = vunpack.c.h.b16 %v3605
        %v4341 = vunpack.c.l.b16 %v3606
        %v4342 = vunpack.c.h.b16 %v3606
        %v4343 = vunpack.c.l.b16 %v3607
        %v4344 = vunpack.c.h.b16 %v3607
        %v4345 = vunpack.c.l.b16 %v3608
        %v4346 = vunpack.c.h.b16 %v3608
        %v4347 = vunpack.c.l.b16 %v3609
        %v4348 = vunpack.c.h.b16 %v3609
        %v4349 = vunpack.c.l.b16 %v3610
        %v4350 = vunpack.c.h.b16 %v3610
        %v4351 = vunpack.c.l.b16 %v3611
        %v4352 = vunpack.c.h.b16 %v3611
        %v4353 = vunpack.c.l.b16 %v3612
        %v4354 = vunpack.c.h.b16 %v3612
        %v4355 = vunpack.c.l.b16 %v3613
        %v4356 = vunpack.c.h.b16 %v3613
        %v4357 = vunpack.c.l.b16 %v3614
        %v4358 = vunpack.c.h.b16 %v3614
        %v4359 = vunpack.c.l.b16 %v3615
        %v4360 = vunpack.c.h.b16 %v3615
        %v4361 = vunpack.c.l.b16 %v3616
        %v4362 = vunpack.c.h.b16 %v3616
        %v4363 = vunpack.c.l.b16 %v3617
        %v4364 = vunpack.c.h.b16 %v3617
        %v4365 = vunpack.c.l.b16 %v3618
        %v4366 = vunpack.c.h.b16 %v3618
        %v4367 = vunpack.c.l.b16 %v3619
        %v4368 = vunpack.c.h.b16 %v3619
        %v4369 = vunpack.c.l.b16 %v3620
        %v4370 = vunpack.c.h.b16 %v3620
        %v4371 = vunpack.c.l.b16 %v3621
        %v4372 = vunpack.c.h.b16 %v3621
        %v4373 = vunpack.c.l.b16 %v3622
        %v4374 = vunpack.c.h.b16 %v3622
        %v4375 = vunpack.c.l.b16 %v3623
        %v4376 = vunpack.c.h.b16 %v3623
        %v4377 = vunpack.c.l.b16 %v3624
        %v4378 = vunpack.c.h.b16 %v3624
        %v4379 = vunpack.c.l.b16 %v3625
        %v4380 = vunpack.c.h.b16 %v3625
        %v4381 = vunpack.c.l.b16 %v3626
        %v4382 = vunpack.c.h.b16 %v3626
        %v4383 = vunpack.c.l.b16 %v3627
        %v4384 = vunpack.c.h.b16 %v3627
        %v4385 = vunpack.c.l.b16 %v3628
        %v4386 = vunpack.c.h.b16 %v3628
        %v4387 = vunpack.c.l.b16 %v3629
        %v4388 = vunpack.c.h.b16 %v3629
        %v4389 = vunpack.c.l.b16 %v3630
        %v4390 = vunpack.c.h.b16 %v3630
        %v4391 = vunpack.c.l.b16 %v3631
        %v4392 = vunpack.c.h.b16 %v3631
        %v4393 = vunpack.c.l.b16 %v3632
        %v4394 = vunpack.c.h.b16 %v3632
        %v4395 = vunpack.c.l.b16 %v3633
        %v4396 = vunpack.c.h.b16 %v3633
        %v4397 = vunpack.c.l.b16 %v3634
        %v4398 = vunpack.c.h.b16 %v3634
        %v4399 = vunpack.c.l.b16 %v3635
        %v4400 = vunpack.c.h.b16 %v3635
        %v4401 = vunpack.c.l.b16 %v3636
        %v4402 = vunpack.c.h.b16 %v3636
        %v4403 = vunpack.c.l.b16 %v3637
        %v4404 = vunpack.c.h.b16 %v3637
        %v4405 = vunpack.c.l.b16 %v3638
        %v4406 = vunpack.c.h.b16 %v3638
        %v4407 = vunpack.c.l.b16 %v3639
        %v4408 = vunpack.c.h.b16 %v3639
        %v4409 = vunpack.c.l.b16 %v3640
        %v4410 = vunpack.c.h.b16 %v3640
        %v4411 = vunpack.c.l.b16 %v3641
        %v4412 = vunpack.c.h.b16 %v3641
        %v4413 = vunpack.c.l.b16 %v3642
        %v4414 = vunpack.c.h.b16 %v3642
        %v4415 = vunpack.c.l.b16 %v3643
        %v4416 = vunpack.c.h.b16 %v3643
        %v4417 = vunpack.c.l.b16 %v3644
        %v4418 = vunpack.c.h.b16 %v3644
        %v4419 = vunpack.c.l.b16 %v3645
        %v4420 = vunpack.c.h.b16 %v3645
        %v4421 = vunpack.c.l.b16 %v3646
        %v4422 = vunpack.c.h.b16 %v3646
        %v4423 = vunpack.c.l.b16 %v3647
        %v4424 = vunpack.c.h.b16 %v3647
        %v4425 = vunpack.c.l.b16 %v3648
        %v4426 = vunpack.c.h.b16 %v3648
        %v4427 = vunpack.c.l.b16 %v3649
        %v4428 = vunpack.c.h.b16 %v3649
        %v4429 = vunpack.c.l.b16 %v3650
        %v4430 = vunpack.c.h.b16 %v3650
        %v4431 = vunpack.c.l.b16 %v3651
        %v4432 = vunpack.c.h.b16 %v3651
        %v4433 = vunpack.c.l.b16 %v3652
        %v4434 = vunpack.c.h.b16 %v3652
        %v4435 = vunpack.c.l.b16 %v3653
        %v4436 = vunpack.c.h.b16 %v3653
        %v4437 = vunpack.c.l.b16 %v3654
        %v4438 = vunpack.c.h.b16 %v3654
        %v4439 = vunpack.c.l.b16 %v3655
        %v4440 = vunpack.c.h.b16 %v3655
        %v4441 = vunpack.c.l.b16 %v3656
        %v4442 = vunpack.c.h.b16 %v3656
        %v4443 = vunpack.c.l.b16 %v3657
        %v4444 = vunpack.c.h.b16 %v3657
        %v4445 = vunpack.c.l.b16 %v3658
        %v4446 = vunpack.c.h.b16 %v3658
        %v4447 = vunpack.c.l.b16 %v3659
        %v4448 = vunpack.c.h.b16 %v3659
        %v4449 = vunpack.c.l.b16 %v3660
        %v4450 = vunpack.c.h.b16 %v3660
        %v4451 = vunpack.c.l.b16 %v3661
        %v4452 = vunpack.c.h.b16 %v3661
        %v4453 = vunpack.c.l.b16 %v3662
        %v4454 = vunpack.c.h.b16 %v3662
        %v4455 = vunpack.c.l.b16 %v3663
        %v4456 = vunpack.c.h.b16 %v3663
        %v4457 = vunpack.c.l.b16 %v3664
        %v4458 = vunpack.c.h.b16 %v3664
        %v4459 = vunpack.c.l.b16 %v3665
        %v4460 = vunpack.c.h.b16 %v3665
        %v4461 = vunpack.c.l.b16 %v3666
        %v4462 = vunpack.c.h.b16 %v3666
        %v4463 = vpack.c.b16 %v3955, %v3951
        %v4464 = vpack.c.b16 %v3956, %v3952
        %v4465 = vpack.c.b16 %v3957, %v3953
        %v4466 = vpack.c.b16 %v3958, %v3954
        %v4467 = vpack.c.b16 %v3963, %v3959
        %v4468 = vpack.c.b16 %v3964, %v3960
        %v4469 = vpack.c.b16 %v3965, %v3961
        %v4470 = vpack.c.b16 %v3966, %v3962
        %v4471 = vpack.c.b16 %v3971, %v3967
        %v4472 = vpack.c.b16 %v3972, %v3968
        %v4473 = vpack.c.b16 %v3973, %v3969
        %v4474 = vpack.c.b16 %v3974, %v3970
        %v4475 = vpack.c.b16 %v3979, %v3975
        %v4476 = vpack.c.b16 %v3980, %v3976
        %v4477 = vpack.c.b16 %v3981, %v3977
        %v4478 = vpack.c.b16 %v3982, %v3978
        %v4479 = vpack.c.b16 %v3987, %v3983
        %v4480 = vpack.c.b16 %v3988, %v3984
        %v4481 = vpack.c.b16 %v3989, %v3985
        %v4482 = vpack.c.b16 %v3990, %v3986
        %v4483 = vpack.c.b16 %v3995, %v3991
        %v4484 = vpack.c.b16 %v3996, %v3992
        %v4485 = vpack.c.b16 %v3997, %v3993
        %v4486 = vpack.c.b16 %v3998, %v3994
        %v4487 = vpack.c.b16 %v4003, %v3999
        %v4488 = vpack.c.b16 %v4004, %v4000
        %v4489 = vpack.c.b16 %v4005, %v4001
        %v4490 = vpack.c.b16 %v4006, %v4002
        %v4491 = vpack.c.b16 %v4011, %v4007
        %v4492 = vpack.c.b16 %v4012, %v4008
        %v4493 = vpack.c.b16 %v4013, %v4009
        %v4494 = vpack.c.b16 %v4014, %v4010
        %v4495 = vpack.c.b16 %v4019, %v4015
        %v4496 = vpack.c.b16 %v4020, %v4016
        %v4497 = vpack.c.b16 %v4021, %v4017
        %v4498 = vpack.c.b16 %v4022, %v4018
        %v4499 = vpack.c.b16 %v4027, %v4023
        %v4500 = vpack.c.b16 %v4028, %v4024
        %v4501 = vpack.c.b16 %v4029, %v4025
        %v4502 = vpack.c.b16 %v4030, %v4026
        %v4503 = vpack.c.b16 %v4035, %v4031
        %v4504 = vpack.c.b16 %v4036, %v4032
        %v4505 = vpack.c.b16 %v4037, %v4033
        %v4506 = vpack.c.b16 %v4038, %v4034
        %v4507 = vpack.c.b16 %v4043, %v4039
        %v4508 = vpack.c.b16 %v4044, %v4040
        %v4509 = vpack.c.b16 %v4045, %v4041
        %v4510 = vpack.c.b16 %v4046, %v4042
        %v4511 = vpack.c.b16 %v4051, %v4047
        %v4512 = vpack.c.b16 %v4052, %v4048
        %v4513 = vpack.c.b16 %v4053, %v4049
        %v4514 = vpack.c.b16 %v4054, %v4050
        %v4515 = vpack.c.b16 %v4059, %v4055
        %v4516 = vpack.c.b16 %v4060, %v4056
        %v4517 = vpack.c.b16 %v4061, %v4057
        %v4518 = vpack.c.b16 %v4062, %v4058
        %v4519 = vpack.c.b16 %v4067, %v4063
        %v4520 = vpack.c.b16 %v4068, %v4064
        %v4521 = vpack.c.b16 %v4069, %v4065
        %v4522 = vpack.c.b16 %v4070, %v4066
        %v4523 = vpack.c.b16 %v4075, %v4071
        %v4524 = vpack.c.b16 %v4076, %v4072
        %v4525 = vpack.c.b16 %v4077, %v4073
        %v4526 = vpack.c.b16 %v4078, %v4074
        %v4527 = vpack.c.b16 %v4083, %v4079
        %v4528 = vpack.c.b16 %v4084, %v4080
        %v4529 = vpack.c.b16 %v4085, %v4081
        %v4530 = vpack.c.b16 %v4086, %v4082
        %v4531 = vpack.c.b16 %v4091, %v4087
        %v4532 = vpack.c.b16 %v4092, %v4088
        %v4533 = vpack.c.b16 %v4093, %v4089
        %v4534 = vpack.c.b16 %v4094, %v4090
        %v4535 = vpack.c.b16 %v4099, %v4095
        %v4536 = vpack.c.b16 %v4100, %v4096
        %v4537 = vpack.c.b16 %v4101, %v4097
        %v4538 = vpack.c.b16 %v4102, %v4098
        %v4539 = vpack.c.b16 %v4107, %v4103
        %v4540 = vpack.c.b16 %v4108, %v4104
        %v4541 = vpack.c.b16 %v4109, %v4105
        %v4542 = vpack.c.b16 %v4110, %v4106
        %v4543 = vpack.c.b16 %v4115, %v4111
        %v4544 = vpack.c.b16 %v4116, %v4112
        %v4545 = vpack.c.b16 %v4117, %v4113
        %v4546 = vpack.c.b16 %v4118, %v4114
        %v4547 = vpack.c.b16 %v4123, %v4119
        %v4548 = vpack.c.b16 %v4124, %v4120
        %v4549 = vpack.c.b16 %v4125, %v4121
        %v4550 = vpack.c.b16 %v4126, %v4122
        %v4551 = vpack.c.b16 %v4131, %v4127
        %v4552 = vpack.c.b16 %v4132, %v4128
        %v4553 = vpack.c.b16 %v4133, %v4129
        %v4554 = vpack.c.b16 %v4134, %v4130
        %v4555 = vpack.c.b16 %v4139, %v4135
        %v4556 = vpack.c.b16 %v4140, %v4136
        %v4557 = vpack.c.b16 %v4141, %v4137
        %v4558 = vpack.c.b16 %v4142, %v4138
        %v4559 = vpack.c.b16 %v4147, %v4143
        %v4560 = vpack.c.b16 %v4148, %v4144
        %v4561 = vpack.c.b16 %v4149, %v4145
        %v4562 = vpack.c.b16 %v4150, %v4146
        %v4563 = vpack.c.b16 %v4155, %v4151
        %v4564 = vpack.c.b16 %v4156, %v4152
        %v4565 = vpack.c.b16 %v4157, %v4153
        %v4566 = vpack.c.b16 %v4158, %v4154
        %v4567 = vpack.c.b16 %v4163, %v4159
        %v4568 = vpack.c.b16 %v4164, %v4160
        %v4569 = vpack.c.b16 %v4165, %v4161
        %v4570 = vpack.c.b16 %v4166, %v4162
        %v4571 = vpack.c.b16 %v4171, %v4167
        %v4572 = vpack.c.b16 %v4172, %v4168
        %v4573 = vpack.c.b16 %v4173, %v4169
        %v4574 = vpack.c.b16 %v4174, %v4170
        %v4575 = vpack.c.b16 %v4179, %v4175
        %v4576 = vpack.c.b16 %v4180, %v4176
        %v4577 = vpack.c.b16 %v4181, %v4177
        %v4578 = vpack.c.b16 %v4182, %v4178
        %v4579 = vpack.c.b16 %v4187, %v4183
        %v4580 = vpack.c.b16 %v4188, %v4184
        %v4581 = vpack.c.b16 %v4189, %v4185
        %v4582 = vpack.c.b16 %v4190, %v4186
        %v4583 = vpack.c.b16 %v4195, %v4191
        %v4584 = vpack.c.b16 %v4196, %v4192
        %v4585 = vpack.c.b16 %v4197, %v4193
        %v4586 = vpack.c.b16 %v4198, %v4194
        %v4587 = vpack.c.b16 %v4203, %v4199
        %v4588 = vpack.c.b16 %v4204, %v4200
        %v4589 = vpack.c.b16 %v4205, %v4201
        %v4590 = vpack.c.b16 %v4206, %v4202
        %v4591 = vpack.c.b16 %v4211, %v4207
        %v4592 = vpack.c.b16 %v4212, %v4208
        %v4593 = vpack.c.b16 %v4213, %v4209
        %v4594 = vpack.c.b16 %v4214, %v4210
        %v4595 = vpack.c.b16 %v4219, %v4215
        %v4596 = vpack.c.b16 %v4220, %v4216
        %v4597 = vpack.c.b16 %v4221, %v4217
        %v4598 = vpack.c.b16 %v4222, %v4218
        %v4599 = vpack.c.b16 %v4227, %v4223
        %v4600 = vpack.c.b16 %v4228, %v4224
        %v4601 = vpack.c.b16 %v4229, %v4225
        %v4602 = vpack.c.b16 %v4230, %v4226
        %v4603 = vpack.c.b16 %v4235, %v4231
        %v4604 = vpack.c.b16 %v4236, %v4232
        %v4605 = vpack.c.b16 %v4237, %v4233
        %v4606 = vpack.c.b16 %v4238, %v4234
        %v4607 = vpack.c.b16 %v4243, %v4239
        %v4608 = vpack.c.b16 %v4244, %v4240
        %v4609 = vpack.c.b16 %v4245, %v4241
        %v4610 = vpack.c.b16 %v4246, %v4242
        %v4611 = vpack.c.b16 %v4251, %v4247
        %v4612 = vpack.c.b16 %v4252, %v4248
        %v4613 = vpack.c.b16 %v4253, %v4249
        %v4614 = vpack.c.b16 %v4254, %v4250
        %v4615 = vpack.c.b16 %v4259, %v4255
        %v4616 = vpack.c.b16 %v4260, %v4256
        %v4617 = vpack.c.b16 %v4261, %v4257
        %v4618 = vpack.c.b16 %v4262, %v4258
        %v4619 = vpack.c.b16 %v4267, %v4263
        %v4620 = vpack.c.b16 %v4268, %v4264
        %v4621 = vpack.c.b16 %v4269, %v4265
        %v4622 = vpack.c.b16 %v4270, %v4266
        %v4623 = vpack.c.b16 %v4275, %v4271
        %v4624 = vpack.c.b16 %v4276, %v4272
        %v4625 = vpack.c.b16 %v4277, %v4273
        %v4626 = vpack.c.b16 %v4278, %v4274
        %v4627 = vpack.c.b16 %v4283, %v4279
        %v4628 = vpack.c.b16 %v4284, %v4280
        %v4629 = vpack.c.b16 %v4285, %v4281
        %v4630 = vpack.c.b16 %v4286, %v4282
        %v4631 = vpack.c.b16 %v4291, %v4287
        %v4632 = vpack.c.b16 %v4292, %v4288
        %v4633 = vpack.c.b16 %v4293, %v4289
        %v4634 = vpack.c.b16 %v4294, %v4290
        %v4635 = vpack.c.b16 %v4299, %v4295
        %v4636 = vpack.c.b16 %v4300, %v4296
        %v4637 = vpack.c.b16 %v4301, %v4297
        %v4638 = vpack.c.b16 %v4302, %v4298
        %v4639 = vpack.c.b16 %v4307, %v4303
        %v4640 = vpack.c.b16 %v4308, %v4304
        %v4641 = vpack.c.b16 %v4309, %v4305
        %v4642 = vpack.c.b16 %v4310, %v4306
        %v4643 = vpack.c.b16 %v4315, %v4311
        %v4644 = vpack.c.b16 %v4316, %v4312
        %v4645 = vpack.c.b16 %v4317, %v4313
        %v4646 = vpack.c.b16 %v4318, %v4314
        %v4647 = vpack.c.b16 %v4323, %v4319
        %v4648 = vpack.c.b16 %v4324, %v4320
        %v4649 = vpack.c.b16 %v4325, %v4321
        %v4650 = vpack.c.b16 %v4326, %v4322
        %v4651 = vpack.c.b16 %v4331, %v4327
        %v4652 = vpack.c.b16 %v4332, %v4328
        %v4653 = vpack.c.b16 %v4333, %v4329
        %v4654 = vpack.c.b16 %v4334, %v4330
        %v4655 = vpack.c.b16 %v4339, %v4335
        %v4656 = vpack.c.b16 %v4340, %v4336
        %v4657 = vpack.c.b16 %v4341, %v4337
        %v4658 = vpack.c.b16 %v4342, %v4338
        %v4659 = vpack.c.b16 %v4347, %v4343
        %v4660 = vpack.c.b16 %v4348, %v4344
        %v4661 = vpack.c.b16 %v4349, %v4345
        %v4662 = vpack.c.b16 %v4350, %v4346
        %v4663 = vpack.c.b16 %v4355, %v4351
        %v4664 = vpack.c.b16 %v4356, %v4352
        %v4665 = vpack.c.b16 %v4357, %v4353
        %v4666 = vpack.c.b16 %v4358, %v4354
        %v4667 = vpack.c.b16 %v4363, %v4359
        %v4668 = vpack.c.b16 %v4364, %v4360
        %v4669 = vpack.c.b16 %v4365, %v4361
        %v4670 = vpack.c.b16 %v4366, %v4362
        %v4671 = vpack.c.b16 %v4371, %v4367
        %v4672 = vpack.c.b16 %v4372, %v4368
        %v4673 = vpack.c.b16 %v4373, %v4369
        %v4674 = vpack.c.b16 %v4374, %v4370
        %v4675 = vpack.c.b16 %v4379, %v4375
        %v4676 = vpack.c.b16 %v4380, %v4376
        %v4677 = vpack.c.b16 %v4381, %v4377
        %v4678 = vpack.c.b16 %v4382, %v4378
        %v4679 = vpack.c.b16 %v4387, %v4383
        %v4680 = vpack.c.b16 %v4388, %v4384
        %v4681 = vpack.c.b16 %v4389, %v4385
        %v4682 = vpack.c.b16 %v4390, %v4386
        %v4683 = vpack.c.b16 %v4395, %v4391
        %v4684 = vpack.c.b16 %v4396, %v4392
        %v4685 = vpack.c.b16 %v4397, %v4393
        %v4686 = vpack.c.b16 %v4398, %v4394
        %v4687 = vpack.c.b16 %v4403, %v4399
        %v4688 = vpack.c.b16 %v4404, %v4400
        %v4689 = vpack.c.b16 %v4405, %v4401
        %v4690 = vpack.c.b16 %v4406, %v4402
        %v4691 = vpack.c.b16 %v4411, %v4407
        %v4692 = vpack.c.b16 %v4412, %v4408
        %v4693 = vpack.c.b16 %v4413, %v4409
        %v4694 = vpack.c.b16 %v4414, %v4410
        %v4695 = vpack.c.b16 %v4419, %v4415
        %v4696 = vpack.c.b16 %v4420, %v4416
        %v4697 = vpack.c.b16 %v4421, %v4417
        %v4698 = vpack.c.b16 %v4422, %v4418
        %v4699 = vpack.c.b16 %v4427, %v4423
        %v4700 = vpack.c.b16 %v4428, %v4424
        %v4701 = vpack.c.b16 %v4429, %v4425
        %v4702 = vpack.c.b16 %v4430, %v4426
        %v4703 = vpack.c.b16 %v4435, %v4431
        %v4704 = vpack.c.b16 %v4436, %v4432
        %v4705 = vpack.c.b16 %v4437, %v4433
        %v4706 = vpack.c.b16 %v4438, %v4434
        %v4707 = vpack.c.b16 %v4443, %v4439
        %v4708 = vpack.c.b16 %v4444, %v4440
        %v4709 = vpack.c.b16 %v4445, %v4441
        %v4710 = vpack.c.b16 %v4446, %v4442
        %v4711 = vpack.c.b16 %v4451, %v4447
        %v4712 = vpack.c.b16 %v4452, %v4448
        %v4713 = vpack.c.b16 %v4453, %v4449
        %v4714 = vpack.c.b16 %v4454, %v4450
        %v4715 = vpack.c.b16 %v4459, %v4455
        %v4716 = vpack.c.b16 %v4460, %v4456
        %v4717 = vpack.c.b16 %v4461, %v4457
        %v4718 = vpack.c.b16 %v4462, %v4458
        %4975 = vmatprep.subr.bf16.mxu0 %v4464
        %4976 = vmatpush1.bf16.msra.mxu0 %v4463
        %4977 = vmatprep.subr.bf16.mxu0 %v4468
        %4978 = vmatpush1.bf16.msra.mxu0 %v4467
        %4979 = vmatprep.subr.bf16.mxu0 %v4472
        %4980 = vmatpush1.bf16.msra.mxu0 %v4471
        %4981 = vmatprep.subr.bf16.mxu0 %v4476
        %4982 = vmatpush1.bf16.msra.mxu0 %v4475
        %4983 = vmatprep.subr.bf16.mxu0 %v4480
        %4984 = vmatpush1.bf16.msra.mxu0 %v4479
        %4985 = vmatprep.subr.bf16.mxu0 %v4484
        %4986 = vmatpush1.bf16.msra.mxu0 %v4483
        %4987 = vmatprep.subr.bf16.mxu0 %v4488
        %4988 = vmatpush1.bf16.msra.mxu0 %v4487
        %4989 = vmatprep.subr.bf16.mxu0 %v4492
        %4990 = vmatpush1.bf16.msra.mxu0 %v4491
        %4991 = vmatprep.subr.bf16.mxu0 %v4496
        %4992 = vmatpush1.bf16.msra.mxu0 %v4495
        %4993 = vmatprep.subr.bf16.mxu0 %v4500
        %4994 = vmatpush1.bf16.msra.mxu0 %v4499
        %4995 = vmatprep.subr.bf16.mxu0 %v4504
        %4996 = vmatpush1.bf16.msra.mxu0 %v4503
        %4997 = vmatprep.subr.bf16.mxu0 %v4508
        %4998 = vmatpush1.bf16.msra.mxu0 %v4507
        %4999 = vmatprep.subr.bf16.mxu0 %v4512
        %5000 = vmatpush1.bf16.msra.mxu0 %v4511
        %5001 = vmatprep.subr.bf16.mxu0 %v4516
        %5002 = vmatpush1.bf16.msra.mxu0 %v4515
        %5003 = vmatprep.subr.bf16.mxu0 %v4520
        %5004 = vmatpush1.bf16.msra.mxu0 %v4519
        %5005 = vmatprep.subr.bf16.mxu0 %v4524
        %5006 = vmatpush1.bf16.msra.mxu0 %v4523
        %5007 = vmatprep.mubr.bf16.mxu0 %v3680
        %5008 = vmatmul.mubr.bf16.gmra.mrb[0].mxu0 %v3679
        %v5009 = vpop.f32.mrb[0].mxu0
        %v5010 = vadd.f32 0.0, %v5009
        %v5011 = vpop.f32.mrb[0].mxu0
        %v5012 = vadd.f32 0.0, %v5011
        %v5013 = vpop.f32.mrb[0].mxu0
        %v5014 = vpop.f32.mrb[0].mxu0
        %5015 = vdwg.mxu0
        %5016 = vmatprep.subr.bf16.mxu0 %v4528
        %5017 = vmatpush1.bf16.msra.mxu0 %v4527
        %5018 = vmatprep.subr.bf16.mxu0 %v4532
        %5019 = vmatpush1.bf16.msra.mxu0 %v4531
        %5020 = vmatprep.subr.bf16.mxu0 %v4536
        %5021 = vmatpush1.bf16.msra.mxu0 %v4535
        %5022 = vmatprep.subr.bf16.mxu0 %v4540
        %5023 = vmatpush1.bf16.msra.mxu0 %v4539
        %5024 = vmatprep.subr.bf16.mxu0 %v4544
        %5025 = vmatpush1.bf16.msra.mxu0 %v4543
        %5026 = vmatprep.subr.bf16.mxu0 %v4548
        %5027 = vmatpush1.bf16.msra.mxu0 %v4547
        %5028 = vmatprep.subr.bf16.mxu0 %v4552
        %5029 = vmatpush1.bf16.msra.mxu0 %v4551
        %5030 = vmatprep.subr.bf16.mxu0 %v4556
        %5031 = vmatpush1.bf16.msra.mxu0 %v4555
        %5032 = vmatprep.subr.bf16.mxu0 %v4560
        %5033 = vmatpush1.bf16.msra.mxu0 %v4559
        %5034 = vmatprep.subr.bf16.mxu0 %v4564
        %5035 = vmatpush1.bf16.msra.mxu0 %v4563
        %5036 = vmatprep.subr.bf16.mxu0 %v4568
        %5037 = vmatpush1.bf16.msra.mxu0 %v4567
        %5038 = vmatprep.subr.bf16.mxu0 %v4572
        %5039 = vmatpush1.bf16.msra.mxu0 %v4571
        %5040 = vmatprep.subr.bf16.mxu0 %v4576
        %5041 = vmatpush1.bf16.msra.mxu0 %v4575
        %5042 = vmatprep.subr.bf16.mxu0 %v4580
        %5043 = vmatpush1.bf16.msra.mxu0 %v4579
        %5044 = vmatprep.subr.bf16.mxu0 %v4584
        %5045 = vmatpush1.bf16.msra.mxu0 %v4583
        %5046 = vmatprep.subr.bf16.mxu0 %v4588
        %5047 = vmatpush1.bf16.msra.mxu0 %v4587
        %5048 = vmatprep.mubr.bf16.mxu0 %v3682
        %5049 = vmatmul.mubr.bf16.gmra.mrb[0].mxu0 %v3681
        %v5050 = vpop.f32.mrb[0].mxu0
        %v5051 = vadd.f32 %v5010, %v5050
        %v5052 = vpop.f32.mrb[0].mxu0
        %v5053 = vadd.f32 %v5012, %v5052
        %v5054 = vpop.f32.mrb[0].mxu0
        %v5055 = vpop.f32.mrb[0].mxu0
        %5056 = vdwg.mxu0
        %5057 = vmatprep.subr.bf16.mxu0 %v4592
        %5058 = vmatpush1.bf16.msra.mxu0 %v4591
        %5059 = vmatprep.subr.bf16.mxu0 %v4596
        %5060 = vmatpush1.bf16.msra.mxu0 %v4595
        %5061 = vmatprep.subr.bf16.mxu0 %v4600
        %5062 = vmatpush1.bf16.msra.mxu0 %v4599
        %5063 = vmatprep.subr.bf16.mxu0 %v4604
        %5064 = vmatpush1.bf16.msra.mxu0 %v4603
        %5065 = vmatprep.subr.bf16.mxu0 %v4608
        %5066 = vmatpush1.bf16.msra.mxu0 %v4607
        %5067 = vmatprep.subr.bf16.mxu0 %v4612
        %5068 = vmatpush1.bf16.msra.mxu0 %v4611
        %5069 = vmatprep.subr.bf16.mxu0 %v4616
        %5070 = vmatpush1.bf16.msra.mxu0 %v4615
        %5071 = vmatprep.subr.bf16.mxu0 %v4620
        %5072 = vmatpush1.bf16.msra.mxu0 %v4619
        %5073 = vmatprep.subr.bf16.mxu0 %v4624
        %5074 = vmatpush1.bf16.msra.mxu0 %v4623
        %5075 = vmatprep.subr.bf16.mxu0 %v4628
        %5076 = vmatpush1.bf16.msra.mxu0 %v4627
        %5077 = vmatprep.subr.bf16.mxu0 %v4632
        %5078 = vmatpush1.bf16.msra.mxu0 %v4631
        %5079 = vmatprep.subr.bf16.mxu0 %v4636
        %5080 = vmatpush1.bf16.msra.mxu0 %v4635
        %5081 = vmatprep.subr.bf16.mxu0 %v4640
        %5082 = vmatpush1.bf16.msra.mxu0 %v4639
        %5083 = vmatprep.subr.bf16.mxu0 %v4644
        %5084 = vmatpush1.bf16.msra.mxu0 %v4643
        %5085 = vmatprep.subr.bf16.mxu0 %v4648
        %5086 = vmatpush1.bf16.msra.mxu0 %v4647
        %5087 = vmatprep.subr.bf16.mxu0 %v4652
        %5088 = vmatpush1.bf16.msra.mxu0 %v4651
        %5089 = vmatprep.mubr.bf16.mxu0 %v3684
        %5090 = vmatmul.mubr.bf16.gmra.mrb[0].mxu0 %v3683
        %v5091 = vpop.f32.mrb[0].mxu0
        %v5092 = vadd.f32 %v5051, %v5091
        %v5093 = vpop.f32.mrb[0].mxu0
        %v5094 = vadd.f32 %v5053, %v5093
        %v5095 = vpop.f32.mrb[0].mxu0
        %v5096 = vpop.f32.mrb[0].mxu0
        %5097 = vdwg.mxu0
        %5098 = vmatprep.subr.bf16.mxu0 %v4656
        %5099 = vmatpush1.bf16.msra.mxu0 %v4655
        %5100 = vmatprep.subr.bf16.mxu0 %v4660
        %5101 = vmatpush1.bf16.msra.mxu0 %v4659
        %5102 = vmatprep.subr.bf16.mxu0 %v4664
        %5103 = vmatpush1.bf16.msra.mxu0 %v4663
        %5104 = vmatprep.subr.bf16.mxu0 %v4668
        %5105 = vmatpush1.bf16.msra.mxu0 %v4667
        %5106 = vmatprep.subr.bf16.mxu0 %v4672
        %5107 = vmatpush1.bf16.msra.mxu0 %v4671
        %5108 = vmatprep.subr.bf16.mxu0 %v4676
        %5109 = vmatpush1.bf16.msra.mxu0 %v4675
        %5110 = vmatprep.subr.bf16.mxu0 %v4680
        %5111 = vmatpush1.bf16.msra.mxu0 %v4679
        %5112 = vmatprep.subr.bf16.mxu0 %v4684
        %5113 = vmatpush1.bf16.msra.mxu0 %v4683
        %5114 = vmatprep.subr.bf16.mxu0 %v4688
        %5115 = vmatpush1.bf16.msra.mxu0 %v4687
        %5116 = vmatprep.subr.bf16.mxu0 %v4692
        %5117 = vmatpush1.bf16.msra.mxu0 %v4691
        %5118 = vmatprep.subr.bf16.mxu0 %v4696
        %5119 = vmatpush1.bf16.msra.mxu0 %v4695
        %5120 = vmatprep.subr.bf16.mxu0 %v4700
        %5121 = vmatpush1.bf16.msra.mxu0 %v4699
        %5122 = vmatprep.subr.bf16.mxu0 %v4704
        %5123 = vmatpush1.bf16.msra.mxu0 %v4703
        %5124 = vmatprep.subr.bf16.mxu0 %v4708
        %5125 = vmatpush1.bf16.msra.mxu0 %v4707
        %5126 = vmatprep.subr.bf16.mxu0 %v4712
        %5127 = vmatpush1.bf16.msra.mxu0 %v4711
        %5128 = vmatprep.subr.bf16.mxu0 %v4716
        %5129 = vmatpush1.bf16.msra.mxu0 %v4715
        %5130 = vmatprep.mubr.bf16.mxu0 %v3686
        %5131 = vmatmul.mubr.bf16.gmra.mrb[0].mxu0 %v3685
        %v5132 = vpop.f32.mrb[0].mxu0
        %v5133 = vadd.f32 %v5092, %v5132
        %v5134 = vpop.f32.mrb[0].mxu0
        %v5135 = vadd.f32 %v5094, %v5134
        %v5136 = vpop.f32.mrb[0].mxu0
        %v5137 = vpop.f32.mrb[0].mxu0
        %5138 = vdwg.mxu0
        %5139 = vmatprep.subr.bf16.mxu0 %v4466
        %5140 = vmatpush1.bf16.msra.mxu0 %v4465
        %5141 = vmatprep.subr.bf16.mxu0 %v4470
        %5142 = vmatpush1.bf16.msra.mxu0 %v4469
        %5143 = vmatprep.subr.bf16.mxu0 %v4474
        %5144 = vmatpush1.bf16.msra.mxu0 %v4473
        %5145 = vmatprep.subr.bf16.mxu0 %v4478
        %5146 = vmatpush1.bf16.msra.mxu0 %v4477
        %5147 = vmatprep.subr.bf16.mxu0 %v4482
        %5148 = vmatpush1.bf16.msra.mxu0 %v4481
        %5149 = vmatprep.subr.bf16.mxu0 %v4486
        %5150 = vmatpush1.bf16.msra.mxu0 %v4485
        %5151 = vmatprep.subr.bf16.mxu0 %v4490
        %5152 = vmatpush1.bf16.msra.mxu0 %v4489
        %5153 = vmatprep.subr.bf16.mxu0 %v4494
        %5154 = vmatpush1.bf16.msra.mxu0 %v4493
        %5155 = vmatprep.subr.bf16.mxu0 %v4498
        %5156 = vmatpush1.bf16.msra.mxu0 %v4497
        %5157 = vmatprep.subr.bf16.mxu0 %v4502
        %5158 = vmatpush1.bf16.msra.mxu0 %v4501
        %5159 = vmatprep.subr.bf16.mxu0 %v4506
        %5160 = vmatpush1.bf16.msra.mxu0 %v4505
        %5161 = vmatprep.subr.bf16.mxu0 %v4510
        %5162 = vmatpush1.bf16.msra.mxu0 %v4509
        %5163 = vmatprep.subr.bf16.mxu0 %v4514
        %5164 = vmatpush1.bf16.msra.mxu0 %v4513
        %5165 = vmatprep.subr.bf16.mxu0 %v4518
        %5166 = vmatpush1.bf16.msra.mxu0 %v4517
        %5167 = vmatprep.subr.bf16.mxu0 %v4522
        %5168 = vmatpush1.bf16.msra.mxu0 %v4521
        %5169 = vmatprep.subr.bf16.mxu0 %v4526
        %5170 = vmatpush1.bf16.msra.mxu0 %v4525
        %5171 = vmatprep.mubr.bf16.mxu0 %v3680
        %5172 = vmatmul.mubr.bf16.gmra.mrb[0].mxu0 %v3679
        %v5173 = vpop.f32.mrb[0].mxu0
        %v5174 = vadd.f32 0.0, %v5173
        %v5175 = vpop.f32.mrb[0].mxu0
        %v5176 = vadd.f32 0.0, %v5175
        %v5177 = vpop.f32.mrb[0].mxu0
        %v5178 = vpop.f32.mrb[0].mxu0
        %5179 = vdwg.mxu0
        %5180 = vmatprep.subr.bf16.mxu0 %v4530
        %5181 = vmatpush1.bf16.msra.mxu0 %v4529
        %5182 = vmatprep.subr.bf16.mxu0 %v4534
        %5183 = vmatpush1.bf16.msra.mxu0 %v4533
        %5184 = vmatprep.subr.bf16.mxu0 %v4538
        %5185 = vmatpush1.bf16.msra.mxu0 %v4537
        %5186 = vmatprep.subr.bf16.mxu0 %v4542
        %5187 = vmatpush1.bf16.msra.mxu0 %v4541
        %5188 = vmatprep.subr.bf16.mxu0 %v4546
        %5189 = vmatpush1.bf16.msra.mxu0 %v4545
        %5190 = vmatprep.subr.bf16.mxu0 %v4550
        %5191 = vmatpush1.bf16.msra.mxu0 %v4549
        %5192 = vmatprep.subr.bf16.mxu0 %v4554
        %5193 = vmatpush1.bf16.msra.mxu0 %v4553
        %5194 = vmatprep.subr.bf16.mxu0 %v4558
        %5195 = vmatpush1.bf16.msra.mxu0 %v4557
        %5196 = vmatprep.subr.bf16.mxu0 %v4562
        %5197 = vmatpush1.bf16.msra.mxu0 %v4561
        %5198 = vmatprep.subr.bf16.mxu0 %v4566
        %5199 = vmatpush1.bf16.msra.mxu0 %v4565
        %5200 = vmatprep.subr.bf16.mxu0 %v4570
        %5201 = vmatpush1.bf16.msra.mxu0 %v4569
        %5202 = vmatprep.subr.bf16.mxu0 %v4574
        %5203 = vmatpush1.bf16.msra.mxu0 %v4573
        %5204 = vmatprep.subr.bf16.mxu0 %v4578
        %5205 = vmatpush1.bf16.msra.mxu0 %v4577
        %5206 = vmatprep.subr.bf16.mxu0 %v4582
        %5207 = vmatpush1.bf16.msra.mxu0 %v4581
        %5208 = vmatprep.subr.bf16.mxu0 %v4586
        %5209 = vmatpush1.bf16.msra.mxu0 %v4585
        %5210 = vmatprep.subr.bf16.mxu0 %v4590
        %5211 = vmatpush1.bf16.msra.mxu0 %v4589
        %5212 = vmatprep.mubr.bf16.mxu0 %v3682
        %5213 = vmatmul.mubr.bf16.gmra.mrb[0].mxu0 %v3681
        %v5214 = vpop.f32.mrb[0].mxu0
        %v5215 = vadd.f32 %v5174, %v5214
        %v5216 = vpop.f32.mrb[0].mxu0
        %v5217 = vadd.f32 %v5176, %v5216
        %v5218 = vpop.f32.mrb[0].mxu0
        %v5219 = vpop.f32.mrb[0].mxu0
        %5220 = vdwg.mxu0
        %5221 = vmatprep.subr.bf16.mxu0 %v4594
        %5222 = vmatpush1.bf16.msra.mxu0 %v4593
        %5223 = vmatprep.subr.bf16.mxu0 %v4598
        %5224 = vmatpush1.bf16.msra.mxu0 %v4597
        %5225 = vmatprep.subr.bf16.mxu0 %v4602
        %5226 = vmatpush1.bf16.msra.mxu0 %v4601
        %5227 = vmatprep.subr.bf16.mxu0 %v4606
        %5228 = vmatpush1.bf16.msra.mxu0 %v4605
        %5229 = vmatprep.subr.bf16.mxu0 %v4610
        %5230 = vmatpush1.bf16.msra.mxu0 %v4609
        %5231 = vmatprep.subr.bf16.mxu0 %v4614
        %5232 = vmatpush1.bf16.msra.mxu0 %v4613
        %5233 = vmatprep.subr.bf16.mxu0 %v4618
        %5234 = vmatpush1.bf16.msra.mxu0 %v4617
        %5235 = vmatprep.subr.bf16.mxu0 %v4622
        %5236 = vmatpush1.bf16.msra.mxu0 %v4621
        %5237 = vmatprep.subr.bf16.mxu0 %v4626
        %5238 = vmatpush1.bf16.msra.mxu0 %v4625
        %5239 = vmatprep.subr.bf16.mxu0 %v4630
        %5240 = vmatpush1.bf16.msra.mxu0 %v4629
        %5241 = vmatprep.subr.bf16.mxu0 %v4634
        %5242 = vmatpush1.bf16.msra.mxu0 %v4633
        %5243 = vmatprep.subr.bf16.mxu0 %v4638
        %5244 = vmatpush1.bf16.msra.mxu0 %v4637
        %5245 = vmatprep.subr.bf16.mxu0 %v4642
        %5246 = vmatpush1.bf16.msra.mxu0 %v4641
        %5247 = vmatprep.subr.bf16.mxu0 %v4646
        %5248 = vmatpush1.bf16.msra.mxu0 %v4645
        %5249 = vmatprep.subr.bf16.mxu0 %v4650
        %5250 = vmatpush1.bf16.msra.mxu0 %v4649
        %5251 = vmatprep.subr.bf16.mxu0 %v4654
        %5252 = vmatpush1.bf16.msra.mxu0 %v4653
        %5253 = vmatprep.mubr.bf16.mxu0 %v3684
        %5254 = vmatmul.mubr.bf16.gmra.mrb[0].mxu0 %v3683
        %v5255 = vpop.f32.mrb[0].mxu0
        %v5256 = vadd.f32 %v5215, %v5255
        %v5257 = vpop.f32.mrb[0].mxu0
        %v5258 = vadd.f32 %v5217, %v5257
        %v5259 = vpop.f32.mrb[0].mxu0
        %v5260 = vpop.f32.mrb[0].mxu0
        %5261 = vdwg.mxu0
        %5262 = vmatprep.subr.bf16.mxu0 %v4658
        %5263 = vmatpush1.bf16.msra.mxu0 %v4657
        %5264 = vmatprep.subr.bf16.mxu0 %v4662
        %5265 = vmatpush1.bf16.msra.mxu0 %v4661
        %5266 = vmatprep.subr.bf16.mxu0 %v4666
        %5267 = vmatpush1.bf16.msra.mxu0 %v4665
        %5268 = vmatprep.subr.bf16.mxu0 %v4670
        %5269 = vmatpush1.bf16.msra.mxu0 %v4669
        %5270 = vmatprep.subr.bf16.mxu0 %v4674
        %5271 = vmatpush1.bf16.msra.mxu0 %v4673
        %5272 = vmatprep.subr.bf16.mxu0 %v4678
        %5273 = vmatpush1.bf16.msra.mxu0 %v4677
        %5274 = vmatprep.subr.bf16.mxu0 %v4682
        %5275 = vmatpush1.bf16.msra.mxu0 %v4681
        %5276 = vmatprep.subr.bf16.mxu0 %v4686
        %5277 = vmatpush1.bf16.msra.mxu0 %v4685
        %5278 = vmatprep.subr.bf16.mxu0 %v4690
        %5279 = vmatpush1.bf16.msra.mxu0 %v4689
        %5280 = vmatprep.subr.bf16.mxu0 %v4694
        %5281 = vmatpush1.bf16.msra.mxu0 %v4693
        %5282 = vmatprep.subr.bf16.mxu0 %v4698
        %5283 = vmatpush1.bf16.msra.mxu0 %v4697
        %5284 = vmatprep.subr.bf16.mxu0 %v4702
        %5285 = vmatpush1.bf16.msra.mxu0 %v4701
        %5286 = vmatprep.subr.bf16.mxu0 %v4706
        %5287 = vmatpush1.bf16.msra.mxu0 %v4705
        %5288 = vmatprep.subr.bf16.mxu0 %v4710
        %5289 = vmatpush1.bf16.msra.mxu0 %v4709
        %5290 = vmatprep.subr.bf16.mxu0 %v4714
        %5291 = vmatpush1.bf16.msra.mxu0 %v4713
        %5292 = vmatprep.subr.bf16.mxu0 %v4718
        %5293 = vmatpush1.bf16.msra.mxu0 %v4717
        %5294 = vmatprep.mubr.bf16.mxu0 %v3686
        %5295 = vmatmul.mubr.bf16.gmra.mrb[0].mxu0 %v3685
        %v5296 = vpop.f32.mrb[0].mxu0
        %v5297 = vadd.f32 %v5256, %v5296
        %v5298 = vpop.f32.mrb[0].mxu0
        %v5299 = vadd.f32 %v5258, %v5298
        %v5300 = vpop.f32.mrb[0].mxu0
        %v5301 = vpop.f32.mrb[0].mxu0
        %5302 = vdwg.mxu0
        %v5303 = vld [vmem:[%s6] sm:$0x1]
        %v5304 = vadd.f32 %v5303, %v5133
        %v5307 = vunpack.c.l.s4 1966171168
        %v5308 = vunpack.c.0.s8 %v5307
        %v5309 = vlaneseq
        %v5310 = vshrl.u32 %v5309, 7
        %v5311 = vsub.s32 %v5308, %v5310
        %v5312 = vrot.slane %v5133, %v5311
        %v5313 = vcombine.high %v5312, %v5312
        %v5315 = vunpack.c.l.s4 1966171168
        %v5316 = vunpack.c.0.s8 %v5315
        %v5317 = vlaneseq
        %v5318 = vshrl.u32 %v5317, 7
        %v5319 = vsub.s32 %v5316, %v5318
        %v5320 = vrot.slane %v5313, %v5319
        %5321 = vrot.lane.b32.xlu0 %v5320, 64
        %v5322 = vpop.permute.xlu0 %5321
        %v5324 = vadd.f32 %v5304, %v5322
        %v5327 = vunpack.c.l.s4 1966171168
        %v5328 = vunpack.c.0.s8 %v5327
        %v5329 = vlaneseq
        %v5330 = vshrl.u32 %v5329, 7
        %v5331 = vsub.s32 %v5328, %v5330
        %v5332 = vrot.slane %v5135, %v5331
        %v5334 = vunpack.c.l.s4 1966171168
        %v5335 = vunpack.c.0.s8 %v5334
        %v5336 = vlaneseq
        %v5337 = vshrl.u32 %v5336, 7
        %v5338 = vsub.s32 %v5335, %v5337
        %v5339 = vrot.slane %v5332, %v5338
        %v5340 = vcombine.high %v5339, %v5339
        %v5342 = vadd.f32 %v5324, %v5340
        %v5343 = vcombine.high %v5332, %v5332
        %v5345 = vunpack.c.l.s4 1966171168
        %v5346 = vunpack.c.0.s8 %v5345
        %v5347 = vlaneseq
        %v5348 = vshrl.u32 %v5347, 7
        %v5349 = vsub.s32 %v5346, %v5348
        %v5350 = vrot.slane %v5343, %v5349
        %v5351 = vcombine.high %v5350, %v5350
        %5352 = vrot.lane.b32.xlu0 %v5351, 64
        %v5353 = vpop.permute.xlu0 %5352
        %v5355 = vadd.f32 %v5342, %v5353
        %v5357 = vcombine.high %v5297, %v5297
        %v5359 = vunpack.c.l.s4 1966171168
        %v5360 = vunpack.c.0.s8 %v5359
        %v5361 = vlaneseq
        %v5362 = vshrl.u32 %v5361, 7
        %v5363 = vsub.s32 %v5360, %v5362
        %v5364 = vrot.slane %v5357, %v5363
        %v5366 = vunpack.c.l.s4 1966171168
        %v5367 = vunpack.c.0.s8 %v5366
        %v5368 = vlaneseq
        %v5369 = vshrl.u32 %v5368, 7
        %v5370 = vsub.s32 %v5367, %v5369
        %v5371 = vrot.slane %v5364, %v5370
        %v5373 = vadd.f32 %v5355, %v5371
        %v5374 = vcombine.high %v5364, %v5364
        %v5376 = vunpack.c.l.s4 1966171168
        %v5377 = vunpack.c.0.s8 %v5376
        %v5378 = vlaneseq
        %v5379 = vshrl.u32 %v5378, 7
        %v5380 = vsub.s32 %v5377, %v5379
        %v5381 = vrot.slane %v5374, %v5380
        %5382 = vrot.lane.b32.xlu0 %v5381, 64
        %v5383 = vpop.permute.xlu0 %5382
        %v5385 = vadd.f32 %v5373, %v5383
        %v5387 = vcombine.high %v5299, %v5299
        %v5389 = vunpack.c.l.s4 1966171168
        %v5390 = vunpack.c.0.s8 %v5389
        %v5391 = vlaneseq
        %v5392 = vshrl.u32 %v5391, 7
        %v5393 = vsub.s32 %v5390, %v5392
        %v5394 = vrot.slane %v5387, %v5393
        %v5396 = vunpack.c.l.s4 1966171168
        %v5397 = vunpack.c.0.s8 %v5396
        %v5398 = vlaneseq
        %v5399 = vshrl.u32 %v5398, 7
        %v5400 = vsub.s32 %v5397, %v5399
        %v5401 = vrot.slane %v5394, %v5400
        %v5402 = vcombine.high %v5401, %v5401
        %v5404 = vadd.f32 %v5385, %v5402
        %v5405 = vcombine.high %v5394, %v5394
        %v5407 = vunpack.c.l.s4 1966171168
        %v5408 = vunpack.c.0.s8 %v5407
        %v5409 = vlaneseq
        %v5410 = vshrl.u32 %v5409, 7
        %v5411 = vsub.s32 %v5408, %v5410
        %v5412 = vrot.slane %v5405, %v5411
        %v5413 = vcombine.high %v5412, %v5412
        %5414 = vrot.lane.b32.xlu0 %v5413, 64
        %v5415 = vpop.permute.xlu0 %5414
        %v5417 = vadd.f32 %v5404, %v5415
        %v5418 = vld [vmem:[%s7] sm:$0xff]
        %v5419 = vld [vmem:[%s7 + $0x8] sm:$0xff]
        %v5420 = vld [vmem:[%s7 + $0x10] sm:$0xff]
        %v5421 = vld [vmem:[%s7 + $0x18] sm:$0xff]
        %v5422 = vld [vmem:[%s7 + $0x20] sm:$0xff]
        %v5423 = vld [vmem:[%s7 + $0x28] sm:$0xff]
        %v5424 = vld [vmem:[%s7 + $0x30] sm:$0xff]
        %v5425 = vld [vmem:[%s7 + $0x38] sm:$0xff]
        %v5426 = vld [vmem:[%s8] sm:$0x1]
        %v5428 = vsel %vm429, %v5417, 0
        %5430 = vmatprep.subr.mxu0 0.0
        %5431 = vmatpush1.msra.mxu0 %v5418
        %5432 = vmatprep.subr.mxu0 0.0
        %5433 = vmatpush1.msra.mxu0 %v5419
        %5434 = vmatprep.subr.mxu0 0.0
        %5435 = vmatpush1.msra.mxu0 %v5420
        %5436 = vmatprep.subr.mxu0 0.0
        %5437 = vmatpush1.msra.mxu0 %v5421
        %5438 = vmatprep.subr.mxu0 0.0
        %5439 = vmatpush1.msra.mxu0 %v5422
        %5440 = vmatprep.subr.mxu0 0.0
        %5441 = vmatpush1.msra.mxu0 %v5423
        %5442 = vmatprep.subr.mxu0 0.0
        %5443 = vmatpush1.msra.mxu0 %v5424
        %5444 = vmatprep.subr.mxu0 0.0
        %5445 = vmatpush1.msra.mxu0 %v5425
        %5446 = vmatprep.subr.mxu0 0.0
        %5447 = vmatpush1.msra.mxu0 0.0
        %5448 = vmatprep.subr.mxu0 0.0
        %5449 = vmatpush1.msra.mxu0 0.0
        %5450 = vmatprep.subr.mxu0 0.0
        %5451 = vmatpush1.msra.mxu0 0.0
        %5452 = vmatprep.subr.mxu0 0.0
        %5453 = vmatpush1.msra.mxu0 0.0
        %5454 = vmatprep.subr.mxu0 0.0
        %5455 = vmatpush1.msra.mxu0 0.0
        %5456 = vmatprep.subr.mxu0 0.0
        %5457 = vmatpush1.msra.mxu0 0.0
        %5458 = vmatprep.subr.mxu0 0.0
        %5459 = vmatpush1.msra.mxu0 0.0
        %5460 = vmatprep.subr.mxu0 0.0
        %5461 = vmatpush1.msra.mxu0 0.0
        %5462 = vmatprep.subr.mxu0 0.0
        %5463 = vmatpush1.msra.mxu0 0.0
        %5464 = vmatprep.subr.mxu0 0.0
        %5465 = vmatpush1.msra.mxu0 0.0
        %5466 = vmatprep.subr.mxu0 0.0
        %5467 = vmatpush1.msra.mxu0 0.0
        %5468 = vmatprep.subr.mxu0 0.0
        %5469 = vmatpush1.msra.mxu0 0.0
        %5470 = vmatprep.subr.mxu0 0.0
        %5471 = vmatpush1.msra.mxu0 0.0
        %5472 = vmatprep.subr.mxu0 0.0
        %5473 = vmatpush1.msra.mxu0 0.0
        %5474 = vmatprep.subr.mxu0 0.0
        %5475 = vmatpush1.msra.mxu0 0.0
        %5476 = vmatprep.subr.mxu0 0.0
        %5477 = vmatpush1.msra.mxu0 0.0
        %5478 = vmatprep.subr.mxu0 0.0
        %5479 = vmatpush1.msra.mxu0 0.0
        %5480 = vmatprep.subr.mxu0 0.0
        %5481 = vmatpush1.msra.mxu0 0.0
        %5482 = vmatprep.subr.mxu0 0.0
        %5483 = vmatpush1.msra.mxu0 0.0
        %5484 = vmatprep.subr.mxu0 0.0
        %5485 = vmatpush1.msra.mxu0 0.0
        %5486 = vmatprep.subr.mxu0 0.0
        %5487 = vmatpush1.msra.mxu0 0.0
        %5488 = vmatprep.subr.mxu0 0.0
        %5489 = vmatpush1.msra.mxu0 0.0
        %5490 = vmatprep.subr.mxu0 0.0
        %5491 = vmatpush1.msra.mxu0 0.0
        %5492 = vmatprep.subr.mxu0 0.0
        %5493 = vmatpush1.msra.mxu0 0.0
        %5494 = vmatprep.mubr.f32.mxu0 0.0
        %5495 = vmatmul.mubr.f32.gmra.mrb[0].mxu0 %v5428
        %v5496 = vpop.f32.mrb[0].mxu0
        %v5497 = vadd.f32 %v5426, %v5496
        %v5498 = vpop.f32.mrb[0].mxu0
        %5499 = vdwg.mxu0
        %v5500 = vld [vmem:[%s9] sm:$0xff]
        %v5501 = vld [vmem:[%s9 + $0x8] sm:$0xff]
        %v5502 = vld [vmem:[%s9 + $0x10] sm:$0xff]
        %v5503 = vld [vmem:[%s9 + $0x18] sm:$0xff]
        %v5504 = vld [vmem:[%s9 + $0x20] sm:$0xff]
        %v5505 = vld [vmem:[%s9 + $0x28] sm:$0xff]
        %v5506 = vld [vmem:[%s9 + $0x30] sm:$0xff]
        %v5507 = vld [vmem:[%s9 + $0x38] sm:$0xff]
        %v5508 = vld [vmem:[%s10] sm:$0x1]
        %v5510 = vsel %vm429, %v5497, 0
        %5512 = vmatprep.subr.mxu0 0.0
        %5513 = vmatpush1.msra.mxu0 %v5500
        %5514 = vmatprep.subr.mxu0 0.0
        %5515 = vmatpush1.msra.mxu0 %v5501
        %5516 = vmatprep.subr.mxu0 0.0
        %5517 = vmatpush1.msra.mxu0 %v5502
        %5518 = vmatprep.subr.mxu0 0.0
        %5519 = vmatpush1.msra.mxu0 %v5503
        %5520 = vmatprep.subr.mxu0 0.0
        %5521 = vmatpush1.msra.mxu0 %v5504
        %5522 = vmatprep.subr.mxu0 0.0
        %5523 = vmatpush1.msra.mxu0 %v5505
        %5524 = vmatprep.subr.mxu0 0.0
        %5525 = vmatpush1.msra.mxu0 %v5506
        %5526 = vmatprep.subr.mxu0 0.0
        %5527 = vmatpush1.msra.mxu0 %v5507
        %5528 = vmatprep.subr.mxu0 0.0
        %5529 = vmatpush1.msra.mxu0 0.0
        %5530 = vmatprep.subr.mxu0 0.0
        %5531 = vmatpush1.msra.mxu0 0.0
        %5532 = vmatprep.subr.mxu0 0.0
        %5533 = vmatpush1.msra.mxu0 0.0
        %5534 = vmatprep.subr.mxu0 0.0
        %5535 = vmatpush1.msra.mxu0 0.0
        %5536 = vmatprep.subr.mxu0 0.0
        %5537 = vmatpush1.msra.mxu0 0.0
        %5538 = vmatprep.subr.mxu0 0.0
        %5539 = vmatpush1.msra.mxu0 0.0
        %5540 = vmatprep.subr.mxu0 0.0
        %5541 = vmatpush1.msra.mxu0 0.0
        %5542 = vmatprep.subr.mxu0 0.0
        %5543 = vmatpush1.msra.mxu0 0.0
        %5544 = vmatprep.subr.mxu0 0.0
        %5545 = vmatpush1.msra.mxu0 0.0
        %5546 = vmatprep.subr.mxu0 0.0
        %5547 = vmatpush1.msra.mxu0 0.0
        %5548 = vmatprep.subr.mxu0 0.0
        %5549 = vmatpush1.msra.mxu0 0.0
        %5550 = vmatprep.subr.mxu0 0.0
        %5551 = vmatpush1.msra.mxu0 0.0
        %5552 = vmatprep.subr.mxu0 0.0
        %5553 = vmatpush1.msra.mxu0 0.0
        %5554 = vmatprep.subr.mxu0 0.0
        %5555 = vmatpush1.msra.mxu0 0.0
        %5556 = vmatprep.subr.mxu0 0.0
        %5557 = vmatpush1.msra.mxu0 0.0
        %5558 = vmatprep.subr.mxu0 0.0
        %5559 = vmatpush1.msra.mxu0 0.0
        %5560 = vmatprep.subr.mxu0 0.0
        %5561 = vmatpush1.msra.mxu0 0.0
        %5562 = vmatprep.subr.mxu0 0.0
        %5563 = vmatpush1.msra.mxu0 0.0
        %5564 = vmatprep.subr.mxu0 0.0
        %5565 = vmatpush1.msra.mxu0 0.0
        %5566 = vmatprep.subr.mxu0 0.0
        %5567 = vmatpush1.msra.mxu0 0.0
        %5568 = vmatprep.subr.mxu0 0.0
        %5569 = vmatpush1.msra.mxu0 0.0
        %5570 = vmatprep.subr.mxu0 0.0
        %5571 = vmatpush1.msra.mxu0 0.0
        %5572 = vmatprep.subr.mxu0 0.0
        %5573 = vmatpush1.msra.mxu0 0.0
        %5574 = vmatprep.subr.mxu0 0.0
        %5575 = vmatpush1.msra.mxu0 0.0
        %5576 = vmatprep.mubr.f32.mxu0 0.0
        %5577 = vmatmul.mubr.f32.gmra.mrb[0].mxu0 %v5510
        %v5578 = vpop.f32.mrb[0].mxu0
        %v5579 = vadd.f32 %v5508, %v5578
        %v5580 = vpop.f32.mrb[0].mxu0
        %5581 = vdwg.mxu0
        %5582 = vst [vmem:[%s397] sm:$0x1] %v5579
        %p5583 = scmp.lt.s32.totalorder %s23, 1
        %s5584 = scalar_select %p5583, %s23, 1
        %s5585 = scalar_lea.vmem %s11, %s5584
        // Predicated region
        $region69: #{cnn_forward.1} parent=63 // pred_check
          %p5586 = pneg %p277
        $region70: #{cnn_forward.1} parent=63 // pred_check_branch
          %5588 = sbr.rel (%p5586) target = $region72
        $region71: #{cnn_forward.1} parent=63 // pred_region
          _
        $region72: #{cnn_forward.1} parent=63 // pred_fallthru
          _
      $region64: #{cnn_forward.1} parent=5 // pred_fallthru
        _
      %p5589 = scmp.le.s32.totalorder 2, %s18
      // Predicated region
      $region73: #{cnn_forward.1} parent=5 // pred_check
        %p5590 = pneg %p5589
      $region74: #{cnn_forward.1} parent=5 // pred_check_branch
        %5592 = sbr.rel (%p5590) target = $region76
      $region75: #{cnn_forward.1} parent=5 // pred_region
        %s5593 = ssub.s32 %s18, 2
        // Predicated region
        $region77: #{cnn_forward.1} parent=75 // pred_check
          %p5594 = pneg %p283
        $region78: #{cnn_forward.1} parent=75 // pred_check_branch
          %5596 = sbr.rel (%p5594) target = $region80
        $region79: #{cnn_forward.1} parent=75 // pred_region
          %p5597 = scmp.lt.s32.totalorder %s24, 1
          %s5598 = scalar_select %p5597, %s24, 1
          %s5599 = scalar_lea.vmem %s11, %s5598
        $region80: #{cnn_forward.1} parent=75 // pred_fallthru
          _
      $region76: #{cnn_forward.1} parent=5 // pred_fallthru
        _
    $region6: #{cnn_forward.1} parent=1 // loop_footer
      %s22 = sadd.s32 1, %s18
    $region7: #{cnn_forward.1} parent=1 // loop_footer_branch
      %17 = sbr.rel target = $region3
    $region8: #{cnn_forward.1} parent=1 // loop_exit
      _
    %5600 = vsyncpa [#allocation8], 1
    %s5601 = scalar_lea.sflag [#allocation8], 1
    %5602 = vsyncpa %s5601, 1

</llo_original>
